<compile_context>
chip_gen: v7x
topology: tpu7x:2x2x1
jax: 0.10.0
libtpu: 0.0.40
codegen_flags: <defaults>
</compile_context>

<pallas_src>
import jax
import jax.numpy as jnp
from jax.experimental import pallas as pl
from jax.experimental.pallas import tpu as pltpu

_NUM_CLASSES = 10   # real class count (output lane-padded to 128 inside the kernel)
_OUT_PAD = 128      # lane-dense output width


def _round_up(x, m):
    return ((x + m - 1) // m) * m


def _head_kernel(x_ref, w_ref, o_ref):
    # x_ref: (tn, 8192)  f32 or bf16 -- flattened (C*H*W) activations, lane-dense
    # w_ref: (8192, 128) bf16        -- pool-folded, lane-padded weight (VMEM-resident)
    # o_ref: (tn, 128)   f32         -- softmax probs in cols [0, 10), zeros elsewhere
    x = x_ref[...].astype(jnp.bfloat16)   # no-op if input is already bf16
    w = w_ref[...].astype(jnp.bfloat16)   # no-op for the prepared bf16 weight
    logits = jnp.dot(x, w, preferred_element_type=jnp.float32)

    # Mask the padded class columns so they vanish under softmax.
    col = jax.lax.broadcasted_iota(jnp.int32, logits.shape, dimension=1)
    logits = jnp.where(col < _NUM_CLASSES, logits, jnp.float32(-1e30))

    # Numerically stable softmax over the class axis (f32 throughout).
    m = jnp.max(logits, axis=-1, keepdims=True)
    e = jnp.exp(logits - m)
    denom = jnp.sum(e, axis=-1, keepdims=True)
    o_ref[...] = (e * pl.reciprocal(denom, approx=True)).astype(o_ref.dtype)


def prepare_fc_weight(fc_weight, h=8, w=8, dtype=jnp.bfloat16):
    """One-time weight prep (hoist out of the forward path).

    fc_weight: (10, 128) PyTorch nn.Linear layout.
    Returns (8192, 128) pool-folded, lane-padded weight:
        W_big[c*HW + hw, o] = fc_weight[o, c] / HW
    """
    hw = h * w
    w_big = jnp.repeat(fc_weight.T.astype(jnp.float32) / float(hw), hw, axis=0)
    w_big = jnp.pad(w_big, ((0, 0), (0, _OUT_PAD - fc_weight.shape[0])))
    return w_big.astype(dtype)


def cam_resnet18_cifar_head(x_nchw, w_big, *, tile_n=512):
    """x_nchw: (N, 128, 8, 8) f32 or bf16; w_big: prepared (8192, 128) weight."""
    n, c, h, w = x_nchw.shape
    assert (c, h, w) == (128, 8, 8), "head expects (N, 128, 8, 8)"
    k = c * h * w  # 8192
    assert w_big.shape == (k, _OUT_PAD)

    # Lane-dense flatten (row-major: index = c*64 + hw) — free, no copy.
    x_flat = x_nchw.reshape(n, k)

    # Tile rows: multiple of 8; halve for 4-byte inputs so bytes/tile stay equal
    # and double-buffered VMEM (+ in-kernel bf16 temp) stays well under 32 MiB.
    itemsize = jnp.dtype(x_flat.dtype).itemsize
    base = tile_n if itemsize <= 2 else max(8, tile_n // 2)
    tn = max(8, (int(base) // 8) * 8)            # clamp to a multiple of 8
    tn = min(tn, _round_up(n, 8))                # small batches use a small tile
    # TODO(synk): on v7x, if small-N latency matters, halve tn when
    # cdiv(n, tn) == 1 so both TensorCores get a grid step.

    n_out = _round_up(n, 8)                      # sublane-aligned output rows
    n_blocks = pl.cdiv(n_out, tn)                # last block may be partial: no pad copy

    out = pl.pallas_call(
        _head_kernel,
        out_shape=jax.ShapeDtypeStruct((n_out, _OUT_PAD), jnp.float32),
        grid=(n_blocks,),
        in_specs=[
            pl.BlockSpec((tn, k), lambda i: (i, 0)),         # batch-tiled activations
            pl.BlockSpec((k, _OUT_PAD), lambda i: (0, 0)),   # weight: constant -> VMEM-resident
        ],
        out_specs=pl.BlockSpec((tn, _OUT_PAD), lambda i: (i, 0)),
        compiler_params=pltpu.CompilerParams(
            dimension_semantics=("parallel",),               # megacore on v7x; no-op elsewhere
            vmem_limit_bytes=48 * 1024 * 1024,               # headroom under v7x 64 MiB physical
        ),
    )(x_flat, w_big)

    return out[:n, :_NUM_CLASSES]


if __name__ == "__main__":
    key = jax.random.PRNGKey(0)
    kx, kw = jax.random.split(key)

    # Batch=2; channels=128 / spatial 8x8 are required by the module
    # (.view(-1, 128) and AvgPool2d(8)).
    N = 2
    x = jax.random.normal(kx, (N, 128, 8, 8), dtype=jnp.float32)

    # Deterministic "PyTorch-like" init for nn.Linear(128, 10, bias=False).
    bound = 1.0 / jnp.sqrt(128.0)
    fc_w = jax.random.uniform(kw, (10, 128), dtype=jnp.float32,
                              minval=-bound, maxval=bound)

    # Weight preprocessing done once, outside the per-call path.
    w_big = prepare_fc_weight(fc_w)

    head = jax.jit(cam_resnet18_cifar_head)
    out = head(x, w_big)
    out = jax.block_until_ready(out)

    # Sanity check against a pure-JAX f32 reference of the PyTorch forward.
    # Tolerance loosened for bf16 matmul operands + approx reciprocal (~1e-3).
    pooled_ref = jnp.mean(x.reshape(N, 128, 64), axis=-1)
    logits_ref = pooled_ref @ fc_w.T
    ref = jax.nn.softmax(logits_ref, axis=1)
    assert out.shape == (N, 10)
    assert jnp.allclose(out, ref, atol=5e-3, rtol=5e-3), "mismatch vs reference"

    print("KERNEL_OK")
</pallas_src>

<mosaic_0001>
module attributes {stable_mosaic.version = 11 : i64} {
  func.func @_head_kernel(%arg0: i32, %arg1: memref<8x8192xf32, #tpu.memory_space<vmem>>, %arg2: memref<8192x128xbf16, #tpu.memory_space<vmem>>, %arg3: memref<8x128xf32, #tpu.memory_space<vmem>>) attributes {dimension_semantics = [#tpu.dimension_semantics<parallel>], iteration_bounds = array<i64: 1>, scalar_prefetch = 0 : i64, scratch_operands = 0 : i64, tpu.core_type = #tpu.core_type<tc>, window_params = [{transform_indices = @transform_0, window_bounds = array<i64: 8, 8192>}, {pipeline_mode = #tpu.pipeline_mode<synchronous>, transform_indices = @transform_1, window_bounds = array<i64: 8192, 128>}, {transform_indices = @transform_2, window_bounds = array<i64: 8, 128>}]} {
    %c0 = arith.constant 0 : index
    %c0_0 = arith.constant 0 : index
    %0 = vector.load %arg1[%c0, %c0_0] : memref<8x8192xf32, #tpu.memory_space<vmem>>, vector<8x8192xf32>
    %1 = arith.truncf %0 : vector<8x8192xf32> to vector<8x8192xbf16>
    %c0_1 = arith.constant 0 : index
    %c0_2 = arith.constant 0 : index
    %2 = vector.load %arg2[%c0_1, %c0_2] : memref<8192x128xbf16, #tpu.memory_space<vmem>>, vector<8192x128xbf16>
    %cst = arith.constant dense<0.000000e+00> : vector<8x128xf32>
    %3 = tpu.matmul %1, %2, %cst {dimension_numbers = #tpu.dot_dimension_numbers<[1], [0], [0], [1], [0, 0, 1, 1], [], []>} : vector<8x8192xbf16>, vector<8192x128xbf16>, vector<8x128xf32> -> vector<8x128xf32>
    %4 = tpu.iota {dimensions = array<i32: 1>} : vector<8x128xi32>
    %c10_i32 = arith.constant 10 : i32
    %5 = vector.broadcast %c10_i32 : i32 to vector<8x128xi32>
    %6 = arith.cmpi slt, %4, %5 : vector<8x128xi32>
    %cst_3 = arith.constant -1.000000e+30 : f32
    %7 = vector.broadcast %cst_3 : f32 to vector<8x128xf32>
    %8 = arith.select %6, %3, %7 : vector<8x128xi1>, vector<8x128xf32>
    %cst_4 = arith.constant dense<0xFF800000> : vector<8xf32>
    %9 = vector.multi_reduction <maximumf>, %8, %cst_4 [1] : vector<8x128xf32> to vector<8xf32>
    %10 = vector.shape_cast %9 : vector<8xf32> to vector<8x1xf32>
    %11 = vector.broadcast %10 : vector<8x1xf32> to vector<8x128xf32>
    %12 = arith.subf %8, %11 : vector<8x128xf32>
    %13 = math.exp %12 : vector<8x128xf32>
    %cst_5 = arith.constant dense<0.000000e+00> : vector<8xf32>
    %14 = vector.multi_reduction <add>, %13, %cst_5 [1] : vector<8x128xf32> to vector<8xf32>
    %15 = vector.shape_cast %14 : vector<8xf32> to vector<8x1xf32>
    %16 = tpu.reciprocal %15 {approx = true} : vector<8x1xf32> -> vector<8x1xf32>
    %17 = vector.broadcast %16 : vector<8x1xf32> to vector<8x128xf32>
    %18 = arith.mulf %13, %17 : vector<8x128xf32>
    %c0_6 = arith.constant 0 : index
    %c0_7 = arith.constant 0 : index
    %19 = vector.load %arg3[%c0_6, %c0_7] : memref<8x128xf32, #tpu.memory_space<vmem>>, vector<8x128xf32>
    tpu.vector_store %arg3[%c0_6, %c0_7], %18 {strides = array<i32>} : memref<8x128xf32, #tpu.memory_space<vmem>>, vector<8x128xf32>,
    return
  }
  func.func @transform_0(%arg0: i32) -> (i32, i32) {
    %c0_i32 = arith.constant 0 : i32
    %c0_i32_0 = arith.constant 0 : i32
    return %arg0, %c0_i32 : i32, i32
  }
  func.func @transform_1(%arg0: i32) -> (i32, i32) {
    %c0_i32 = arith.constant 0 : i32
    %c0_i32_0 = arith.constant 0 : i32
    %c0_i32_1 = arith.constant 0 : i32
    return %c0_i32, %c0_i32_0 : i32, i32
  }
  func.func @transform_2(%arg0: i32) -> (i32, i32) {
    %c0_i32 = arith.constant 0 : i32
    %c0_i32_0 = arith.constant 0 : i32
    return %arg0, %c0_i32 : i32, i32
  }
}

</mosaic_0001>

<llo_original>
// kernel: cam_resnet18_cifar_head.1
$region0: #{cam_resnet18_cifar_head.1}
  #allocation0 [shape = 'u32[]', space=smem, size = 0x4, offset = 0x4, fixed_abs, tag = 'smem constant byte address 0x4 - core index']
  #allocation1 [shape = 'u32[144,128]{1,0:T(1,128)}', space=vmem, size = 0x12000, scoped, tag = 'internal scratch']
  %s0 = inlined_call_operand.vmem [shape: f32[2,8192], index: 0, kind: input, shape index: {}]
  %s1 = inlined_call_operand.vmem [shape: bf16[8192,128], index: 1, kind: input, shape index: {}]
  %s2 = inlined_call_operand.vmem [shape: f32[8,128], index: 2, kind: output, shape index: {}]
  %s3 = sld [smem:[#allocation0]]
  $region18: #{cam_resnet18_cifar_head.1} parent=0
    _
  %s5 = ssub.s32 1, %s3
  %s6 = scalar_select 0, %s5, %s3
  // Predicated region
  $region2: #{cam_resnet18_cifar_head.1} parent=0 // pred_check
    _
  $region3: #{cam_resnet18_cifar_head.1} parent=0 // pred_check_branch
    %8 = sbr.rel (0) target = $region5
  $region4: #{cam_resnet18_cifar_head.1} parent=0 // pred_region
    _
  $region5: #{cam_resnet18_cifar_head.1} parent=0 // pred_fallthru
    _
  // Predicated region
  $region6: #{cam_resnet18_cifar_head.1} parent=0 // pred_check
    _
  $region7: #{cam_resnet18_cifar_head.1} parent=0 // pred_check_branch
    %10 = sbr.rel (0) target = $region9
  $region8: #{cam_resnet18_cifar_head.1} parent=0 // pred_region
    _
  $region9: #{cam_resnet18_cifar_head.1} parent=0 // pred_fallthru
    _
  %v12 = vld [vmem:[%s0] sm:$0xff]
  %v13 = vld [vmem:[%s0 + $0x8] sm:$0xff]
  %v14 = vld [vmem:[%s0 + $0x10] sm:$0xff]
  %v15 = vld [vmem:[%s0 + $0x18] sm:$0xff]
  %v16 = vld [vmem:[%s0 + $0x20] sm:$0xff]
  %v17 = vld [vmem:[%s0 + $0x28] sm:$0xff]
  %v18 = vld [vmem:[%s0 + $0x30] sm:$0xff]
  %v19 = vld [vmem:[%s0 + $0x38] sm:$0xff]
  %v20 = vld [vmem:[%s0 + $0x40] sm:$0xff]
  %v21 = vld [vmem:[%s0 + $0x48] sm:$0xff]
  %v22 = vld [vmem:[%s0 + $0x50] sm:$0xff]
  %v23 = vld [vmem:[%s0 + $0x58] sm:$0xff]
  %v24 = vld [vmem:[%s0 + $0x60] sm:$0xff]
  %v25 = vld [vmem:[%s0 + $0x68] sm:$0xff]
  %v26 = vld [vmem:[%s0 + $0x70] sm:$0xff]
  %v27 = vld [vmem:[%s0 + $0x78] sm:$0xff]
  %v28 = vld [vmem:[%s0 + $0x80] sm:$0xff]
  %v29 = vld [vmem:[%s0 + $0x88] sm:$0xff]
  %v30 = vld [vmem:[%s0 + $0x90] sm:$0xff]
  %v31 = vld [vmem:[%s0 + $0x98] sm:$0xff]
  %v32 = vld [vmem:[%s0 + $0xa0] sm:$0xff]
  %v33 = vld [vmem:[%s0 + $0xa8] sm:$0xff]
  %v34 = vld [vmem:[%s0 + $0xb0] sm:$0xff]
  %v35 = vld [vmem:[%s0 + $0xb8] sm:$0xff]
  %v36 = vld [vmem:[%s0 + $0xc0] sm:$0xff]
  %v37 = vld [vmem:[%s0 + $0xc8] sm:$0xff]
  %v38 = vld [vmem:[%s0 + $0xd0] sm:$0xff]
  %v39 = vld [vmem:[%s0 + $0xd8] sm:$0xff]
  %v40 = vld [vmem:[%s0 + $0xe0] sm:$0xff]
  %v41 = vld [vmem:[%s0 + $0xe8] sm:$0xff]
  %v42 = vld [vmem:[%s0 + $0xf0] sm:$0xff]
  %v43 = vld [vmem:[%s0 + $0xf8] sm:$0xff]
  %v44 = vld [vmem:[%s0 + $0x100] sm:$0xff]
  %v45 = vld [vmem:[%s0 + $0x108] sm:$0xff]
  %v46 = vld [vmem:[%s0 + $0x110] sm:$0xff]
  %v47 = vld [vmem:[%s0 + $0x118] sm:$0xff]
  %v48 = vld [vmem:[%s0 + $0x120] sm:$0xff]
  %v49 = vld [vmem:[%s0 + $0x128] sm:$0xff]
  %v50 = vld [vmem:[%s0 + $0x130] sm:$0xff]
  %v51 = vld [vmem:[%s0 + $0x138] sm:$0xff]
  %v52 = vld [vmem:[%s0 + $0x140] sm:$0xff]
  %v53 = vld [vmem:[%s0 + $0x148] sm:$0xff]
  %v54 = vld [vmem:[%s0 + $0x150] sm:$0xff]
  %v55 = vld [vmem:[%s0 + $0x158] sm:$0xff]
  %v56 = vld [vmem:[%s0 + $0x160] sm:$0xff]
  %v57 = vld [vmem:[%s0 + $0x168] sm:$0xff]
  %v58 = vld [vmem:[%s0 + $0x170] sm:$0xff]
  %v59 = vld [vmem:[%s0 + $0x178] sm:$0xff]
  %v60 = vld [vmem:[%s0 + $0x180] sm:$0xff]
  %v61 = vld [vmem:[%s0 + $0x188] sm:$0xff]
  %v62 = vld [vmem:[%s0 + $0x190] sm:$0xff]
  %v63 = vld [vmem:[%s0 + $0x198] sm:$0xff]
  %v64 = vld [vmem:[%s0 + $0x1a0] sm:$0xff]
  %v65 = vld [vmem:[%s0 + $0x1a8] sm:$0xff]
  %v66 = vld [vmem:[%s0 + $0x1b0] sm:$0xff]
  %v67 = vld [vmem:[%s0 + $0x1b8] sm:$0xff]
  %v68 = vld [vmem:[%s0 + $0x1c0] sm:$0xff]
  %v69 = vld [vmem:[%s0 + $0x1c8] sm:$0xff]
  %v70 = vld [vmem:[%s0 + $0x1d0] sm:$0xff]
  %v71 = vld [vmem:[%s0 + $0x1d8] sm:$0xff]
  %v72 = vld [vmem:[%s0 + $0x1e0] sm:$0xff]
  %v73 = vld [vmem:[%s0 + $0x1e8] sm:$0xff]
  %v74 = vld [vmem:[%s0 + $0x1f0] sm:$0xff]
  %v75 = vld [vmem:[%s0 + $0x1f8] sm:$0xff]
  %v140 = vcombine.low %v12, %v28
  %v141 = vcombine.high %v12, %v28
  %v142 = vcombine.low %v44, %v60
  %v143 = vcombine.high %v44, %v60
  %v145 = vunpack.c.l.s4 1983009808
  %v146 = vunpack.c.0.s8 %v145
  %v147 = vlaneseq
  %v148 = vshrl.u32 %v147, 7
  %v149 = vsub.s32 %v146, %v148
  %v150 = vrot.slane %v140, %v149
  %v152 = vunpack.c.l.s4 1983009808
  %v153 = vunpack.c.0.s8 %v152
  %v154 = vlaneseq
  %v155 = vshrl.u32 %v154, 7
  %v156 = vsub.s32 %v153, %v155
  %v157 = vrot.slane %v141, %v156
  %v159 = vunpack.c.l.s4 1983009808
  %v160 = vunpack.c.0.s8 %v159
  %v161 = vlaneseq
  %v162 = vshrl.u32 %v161, 7
  %v163 = vsub.s32 %v160, %v162
  %v164 = vrot.slane %v142, %v163
  %v166 = vunpack.c.l.s4 1983009808
  %v167 = vunpack.c.0.s8 %v166
  %v168 = vlaneseq
  %v169 = vshrl.u32 %v168, 7
  %v170 = vsub.s32 %v167, %v169
  %v171 = vrot.slane %v143, %v170
  %v172 = vcombine.low %v150, %v164
  %v173 = vcombine.high %v150, %v164
  %v174 = vcombine.low %v157, %v171
  %v175 = vcombine.high %v157, %v171
  %v176 = vcombine.low %v13, %v29
  %v177 = vcombine.high %v13, %v29
  %v178 = vcombine.low %v45, %v61
  %v179 = vcombine.high %v45, %v61
  %v181 = vunpack.c.l.s4 1983009808
  %v182 = vunpack.c.0.s8 %v181
  %v183 = vlaneseq
  %v184 = vshrl.u32 %v183, 7
  %v185 = vsub.s32 %v182, %v184
  %v186 = vrot.slane %v176, %v185
  %v188 = vunpack.c.l.s4 1983009808
  %v189 = vunpack.c.0.s8 %v188
  %v190 = vlaneseq
  %v191 = vshrl.u32 %v190, 7
  %v192 = vsub.s32 %v189, %v191
  %v193 = vrot.slane %v177, %v192
  %v195 = vunpack.c.l.s4 1983009808
  %v196 = vunpack.c.0.s8 %v195
  %v197 = vlaneseq
  %v198 = vshrl.u32 %v197, 7
  %v199 = vsub.s32 %v196, %v198
  %v200 = vrot.slane %v178, %v199
  %v202 = vunpack.c.l.s4 1983009808
  %v203 = vunpack.c.0.s8 %v202
  %v204 = vlaneseq
  %v205 = vshrl.u32 %v204, 7
  %v206 = vsub.s32 %v203, %v205
  %v207 = vrot.slane %v179, %v206
  %v208 = vcombine.low %v186, %v200
  %v209 = vcombine.high %v186, %v200
  %v210 = vcombine.low %v193, %v207
  %v211 = vcombine.high %v193, %v207
  %v212 = vcombine.low %v14, %v30
  %v213 = vcombine.high %v14, %v30
  %v214 = vcombine.low %v46, %v62
  %v215 = vcombine.high %v46, %v62
  %v217 = vunpack.c.l.s4 1983009808
  %v218 = vunpack.c.0.s8 %v217
  %v219 = vlaneseq
  %v220 = vshrl.u32 %v219, 7
  %v221 = vsub.s32 %v218, %v220
  %v222 = vrot.slane %v212, %v221
  %v224 = vunpack.c.l.s4 1983009808
  %v225 = vunpack.c.0.s8 %v224
  %v226 = vlaneseq
  %v227 = vshrl.u32 %v226, 7
  %v228 = vsub.s32 %v225, %v227
  %v229 = vrot.slane %v213, %v228
  %v231 = vunpack.c.l.s4 1983009808
  %v232 = vunpack.c.0.s8 %v231
  %v233 = vlaneseq
  %v234 = vshrl.u32 %v233, 7
  %v235 = vsub.s32 %v232, %v234
  %v236 = vrot.slane %v214, %v235
  %v238 = vunpack.c.l.s4 1983009808
  %v239 = vunpack.c.0.s8 %v238
  %v240 = vlaneseq
  %v241 = vshrl.u32 %v240, 7
  %v242 = vsub.s32 %v239, %v241
  %v243 = vrot.slane %v215, %v242
  %v244 = vcombine.low %v222, %v236
  %v245 = vcombine.high %v222, %v236
  %v246 = vcombine.low %v229, %v243
  %v247 = vcombine.high %v229, %v243
  %v248 = vcombine.low %v15, %v31
  %v249 = vcombine.high %v15, %v31
  %v250 = vcombine.low %v47, %v63
  %v251 = vcombine.high %v47, %v63
  %v253 = vunpack.c.l.s4 1983009808
  %v254 = vunpack.c.0.s8 %v253
  %v255 = vlaneseq
  %v256 = vshrl.u32 %v255, 7
  %v257 = vsub.s32 %v254, %v256
  %v258 = vrot.slane %v248, %v257
  %v260 = vunpack.c.l.s4 1983009808
  %v261 = vunpack.c.0.s8 %v260
  %v262 = vlaneseq
  %v263 = vshrl.u32 %v262, 7
  %v264 = vsub.s32 %v261, %v263
  %v265 = vrot.slane %v249, %v264
  %v267 = vunpack.c.l.s4 1983009808
  %v268 = vunpack.c.0.s8 %v267
  %v269 = vlaneseq
  %v270 = vshrl.u32 %v269, 7
  %v271 = vsub.s32 %v268, %v270
  %v272 = vrot.slane %v250, %v271
  %v274 = vunpack.c.l.s4 1983009808
  %v275 = vunpack.c.0.s8 %v274
  %v276 = vlaneseq
  %v277 = vshrl.u32 %v276, 7
  %v278 = vsub.s32 %v275, %v277
  %v279 = vrot.slane %v251, %v278
  %v280 = vcombine.low %v258, %v272
  %v281 = vcombine.high %v258, %v272
  %v282 = vcombine.low %v265, %v279
  %v283 = vcombine.high %v265, %v279
  %v284 = vcombine.low %v16, %v32
  %v285 = vcombine.high %v16, %v32
  %v286 = vcombine.low %v48, %v64
  %v287 = vcombine.high %v48, %v64
  %v289 = vunpack.c.l.s4 1983009808
  %v290 = vunpack.c.0.s8 %v289
  %v291 = vlaneseq
  %v292 = vshrl.u32 %v291, 7
  %v293 = vsub.s32 %v290, %v292
  %v294 = vrot.slane %v284, %v293
  %v296 = vunpack.c.l.s4 1983009808
  %v297 = vunpack.c.0.s8 %v296
  %v298 = vlaneseq
  %v299 = vshrl.u32 %v298, 7
  %v300 = vsub.s32 %v297, %v299
  %v301 = vrot.slane %v285, %v300
  %v303 = vunpack.c.l.s4 1983009808
  %v304 = vunpack.c.0.s8 %v303
  %v305 = vlaneseq
  %v306 = vshrl.u32 %v305, 7
  %v307 = vsub.s32 %v304, %v306
  %v308 = vrot.slane %v286, %v307
  %v310 = vunpack.c.l.s4 1983009808
  %v311 = vunpack.c.0.s8 %v310
  %v312 = vlaneseq
  %v313 = vshrl.u32 %v312, 7
  %v314 = vsub.s32 %v311, %v313
  %v315 = vrot.slane %v287, %v314
  %v316 = vcombine.low %v294, %v308
  %v317 = vcombine.high %v294, %v308
  %v318 = vcombine.low %v301, %v315
  %v319 = vcombine.high %v301, %v315
  %v320 = vcombine.low %v17, %v33
  %v321 = vcombine.high %v17, %v33
  %v322 = vcombine.low %v49, %v65
  %v323 = vcombine.high %v49, %v65
  %v325 = vunpack.c.l.s4 1983009808
  %v326 = vunpack.c.0.s8 %v325
  %v327 = vlaneseq
  %v328 = vshrl.u32 %v327, 7
  %v329 = vsub.s32 %v326, %v328
  %v330 = vrot.slane %v320, %v329
  %v332 = vunpack.c.l.s4 1983009808
  %v333 = vunpack.c.0.s8 %v332
  %v334 = vlaneseq
  %v335 = vshrl.u32 %v334, 7
  %v336 = vsub.s32 %v333, %v335
  %v337 = vrot.slane %v321, %v336
  %v339 = vunpack.c.l.s4 1983009808
  %v340 = vunpack.c.0.s8 %v339
  %v341 = vlaneseq
  %v342 = vshrl.u32 %v341, 7
  %v343 = vsub.s32 %v340, %v342
  %v344 = vrot.slane %v322, %v343
  %v346 = vunpack.c.l.s4 1983009808
  %v347 = vunpack.c.0.s8 %v346
  %v348 = vlaneseq
  %v349 = vshrl.u32 %v348, 7
  %v350 = vsub.s32 %v347, %v349
  %v351 = vrot.slane %v323, %v350
  %v352 = vcombine.low %v330, %v344
  %v353 = vcombine.high %v330, %v344
  %v354 = vcombine.low %v337, %v351
  %v355 = vcombine.high %v337, %v351
  %v356 = vcombine.low %v18, %v34
  %v357 = vcombine.high %v18, %v34
  %v358 = vcombine.low %v50, %v66
  %v359 = vcombine.high %v50, %v66
  %v361 = vunpack.c.l.s4 1983009808
  %v362 = vunpack.c.0.s8 %v361
  %v363 = vlaneseq
  %v364 = vshrl.u32 %v363, 7
  %v365 = vsub.s32 %v362, %v364
  %v366 = vrot.slane %v356, %v365
  %v368 = vunpack.c.l.s4 1983009808
  %v369 = vunpack.c.0.s8 %v368
  %v370 = vlaneseq
  %v371 = vshrl.u32 %v370, 7
  %v372 = vsub.s32 %v369, %v371
  %v373 = vrot.slane %v357, %v372
  %v375 = vunpack.c.l.s4 1983009808
  %v376 = vunpack.c.0.s8 %v375
  %v377 = vlaneseq
  %v378 = vshrl.u32 %v377, 7
  %v379 = vsub.s32 %v376, %v378
  %v380 = vrot.slane %v358, %v379
  %v382 = vunpack.c.l.s4 1983009808
  %v383 = vunpack.c.0.s8 %v382
  %v384 = vlaneseq
  %v385 = vshrl.u32 %v384, 7
  %v386 = vsub.s32 %v383, %v385
  %v387 = vrot.slane %v359, %v386
  %v388 = vcombine.low %v366, %v380
  %v389 = vcombine.high %v366, %v380
  %v390 = vcombine.low %v373, %v387
  %v391 = vcombine.high %v373, %v387
  %v392 = vcombine.low %v19, %v35
  %v393 = vcombine.high %v19, %v35
  %v394 = vcombine.low %v51, %v67
  %v395 = vcombine.high %v51, %v67
  %v397 = vunpack.c.l.s4 1983009808
  %v398 = vunpack.c.0.s8 %v397
  %v399 = vlaneseq
  %v400 = vshrl.u32 %v399, 7
  %v401 = vsub.s32 %v398, %v400
  %v402 = vrot.slane %v392, %v401
  %v404 = vunpack.c.l.s4 1983009808
  %v405 = vunpack.c.0.s8 %v404
  %v406 = vlaneseq
  %v407 = vshrl.u32 %v406, 7
  %v408 = vsub.s32 %v405, %v407
  %v409 = vrot.slane %v393, %v408
  %v411 = vunpack.c.l.s4 1983009808
  %v412 = vunpack.c.0.s8 %v411
  %v413 = vlaneseq
  %v414 = vshrl.u32 %v413, 7
  %v415 = vsub.s32 %v412, %v414
  %v416 = vrot.slane %v394, %v415
  %v418 = vunpack.c.l.s4 1983009808
  %v419 = vunpack.c.0.s8 %v418
  %v420 = vlaneseq
  %v421 = vshrl.u32 %v420, 7
  %v422 = vsub.s32 %v419, %v421
  %v423 = vrot.slane %v395, %v422
  %v424 = vcombine.low %v402, %v416
  %v425 = vcombine.high %v402, %v416
  %v426 = vcombine.low %v409, %v423
  %v427 = vcombine.high %v409, %v423
  %v428 = vcombine.low %v20, %v36
  %v429 = vcombine.high %v20, %v36
  %v430 = vcombine.low %v52, %v68
  %v431 = vcombine.high %v52, %v68
  %v433 = vunpack.c.l.s4 1983009808
  %v434 = vunpack.c.0.s8 %v433
  %v435 = vlaneseq
  %v436 = vshrl.u32 %v435, 7
  %v437 = vsub.s32 %v434, %v436
  %v438 = vrot.slane %v428, %v437
  %v440 = vunpack.c.l.s4 1983009808
  %v441 = vunpack.c.0.s8 %v440
  %v442 = vlaneseq
  %v443 = vshrl.u32 %v442, 7
  %v444 = vsub.s32 %v441, %v443
  %v445 = vrot.slane %v429, %v444
  %v447 = vunpack.c.l.s4 1983009808
  %v448 = vunpack.c.0.s8 %v447
  %v449 = vlaneseq
  %v450 = vshrl.u32 %v449, 7
  %v451 = vsub.s32 %v448, %v450
  %v452 = vrot.slane %v430, %v451
  %v454 = vunpack.c.l.s4 1983009808
  %v455 = vunpack.c.0.s8 %v454
  %v456 = vlaneseq
  %v457 = vshrl.u32 %v456, 7
  %v458 = vsub.s32 %v455, %v457
  %v459 = vrot.slane %v431, %v458
  %v460 = vcombine.low %v438, %v452
  %v461 = vcombine.high %v438, %v452
  %v462 = vcombine.low %v445, %v459
  %v463 = vcombine.high %v445, %v459
  %v464 = vcombine.low %v21, %v37
  %v465 = vcombine.high %v21, %v37
  %v466 = vcombine.low %v53, %v69
  %v467 = vcombine.high %v53, %v69
  %v469 = vunpack.c.l.s4 1983009808
  %v470 = vunpack.c.0.s8 %v469
  %v471 = vlaneseq
  %v472 = vshrl.u32 %v471, 7
  %v473 = vsub.s32 %v470, %v472
  %v474 = vrot.slane %v464, %v473
  %v476 = vunpack.c.l.s4 1983009808
  %v477 = vunpack.c.0.s8 %v476
  %v478 = vlaneseq
  %v479 = vshrl.u32 %v478, 7
  %v480 = vsub.s32 %v477, %v479
  %v481 = vrot.slane %v465, %v480
  %v483 = vunpack.c.l.s4 1983009808
  %v484 = vunpack.c.0.s8 %v483
  %v485 = vlaneseq
  %v486 = vshrl.u32 %v485, 7
  %v487 = vsub.s32 %v484, %v486
  %v488 = vrot.slane %v466, %v487
  %v490 = vunpack.c.l.s4 1983009808
  %v491 = vunpack.c.0.s8 %v490
  %v492 = vlaneseq
  %v493 = vshrl.u32 %v492, 7
  %v494 = vsub.s32 %v491, %v493
  %v495 = vrot.slane %v467, %v494
  %v496 = vcombine.low %v474, %v488
  %v497 = vcombine.high %v474, %v488
  %v498 = vcombine.low %v481, %v495
  %v499 = vcombine.high %v481, %v495
  %v500 = vcombine.low %v22, %v38
  %v501 = vcombine.high %v22, %v38
  %v502 = vcombine.low %v54, %v70
  %v503 = vcombine.high %v54, %v70
  %v505 = vunpack.c.l.s4 1983009808
  %v506 = vunpack.c.0.s8 %v505
  %v507 = vlaneseq
  %v508 = vshrl.u32 %v507, 7
  %v509 = vsub.s32 %v506, %v508
  %v510 = vrot.slane %v500, %v509
  %v512 = vunpack.c.l.s4 1983009808
  %v513 = vunpack.c.0.s8 %v512
  %v514 = vlaneseq
  %v515 = vshrl.u32 %v514, 7
  %v516 = vsub.s32 %v513, %v515
  %v517 = vrot.slane %v501, %v516
  %v519 = vunpack.c.l.s4 1983009808
  %v520 = vunpack.c.0.s8 %v519
  %v521 = vlaneseq
  %v522 = vshrl.u32 %v521, 7
  %v523 = vsub.s32 %v520, %v522
  %v524 = vrot.slane %v502, %v523
  %v526 = vunpack.c.l.s4 1983009808
  %v527 = vunpack.c.0.s8 %v526
  %v528 = vlaneseq
  %v529 = vshrl.u32 %v528, 7
  %v530 = vsub.s32 %v527, %v529
  %v531 = vrot.slane %v503, %v530
  %v532 = vcombine.low %v510, %v524
  %v533 = vcombine.high %v510, %v524
  %v534 = vcombine.low %v517, %v531
  %v535 = vcombine.high %v517, %v531
  %v536 = vcombine.low %v23, %v39
  %v537 = vcombine.high %v23, %v39
  %v538 = vcombine.low %v55, %v71
  %v539 = vcombine.high %v55, %v71
  %v541 = vunpack.c.l.s4 1983009808
  %v542 = vunpack.c.0.s8 %v541
  %v543 = vlaneseq
  %v544 = vshrl.u32 %v543, 7
  %v545 = vsub.s32 %v542, %v544
  %v546 = vrot.slane %v536, %v545
  %v548 = vunpack.c.l.s4 1983009808
  %v549 = vunpack.c.0.s8 %v548
  %v550 = vlaneseq
  %v551 = vshrl.u32 %v550, 7
  %v552 = vsub.s32 %v549, %v551
  %v553 = vrot.slane %v537, %v552
  %v555 = vunpack.c.l.s4 1983009808
  %v556 = vunpack.c.0.s8 %v555
  %v557 = vlaneseq
  %v558 = vshrl.u32 %v557, 7
  %v559 = vsub.s32 %v556, %v558
  %v560 = vrot.slane %v538, %v559
  %v562 = vunpack.c.l.s4 1983009808
  %v563 = vunpack.c.0.s8 %v562
  %v564 = vlaneseq
  %v565 = vshrl.u32 %v564, 7
  %v566 = vsub.s32 %v563, %v565
  %v567 = vrot.slane %v539, %v566
  %v568 = vcombine.low %v546, %v560
  %v569 = vcombine.high %v546, %v560
  %v570 = vcombine.low %v553, %v567
  %v571 = vcombine.high %v553, %v567
  %v572 = vcombine.low %v24, %v40
  %v573 = vcombine.high %v24, %v40
  %v574 = vcombine.low %v56, %v72
  %v575 = vcombine.high %v56, %v72
  %v577 = vunpack.c.l.s4 1983009808
  %v578 = vunpack.c.0.s8 %v577
  %v579 = vlaneseq
  %v580 = vshrl.u32 %v579, 7
  %v581 = vsub.s32 %v578, %v580
  %v582 = vrot.slane %v572, %v581
  %v584 = vunpack.c.l.s4 1983009808
  %v585 = vunpack.c.0.s8 %v584
  %v586 = vlaneseq
  %v587 = vshrl.u32 %v586, 7
  %v588 = vsub.s32 %v585, %v587
  %v589 = vrot.slane %v573, %v588
  %v591 = vunpack.c.l.s4 1983009808
  %v592 = vunpack.c.0.s8 %v591
  %v593 = vlaneseq
  %v594 = vshrl.u32 %v593, 7
  %v595 = vsub.s32 %v592, %v594
  %v596 = vrot.slane %v574, %v595
  %v598 = vunpack.c.l.s4 1983009808
  %v599 = vunpack.c.0.s8 %v598
  %v600 = vlaneseq
  %v601 = vshrl.u32 %v600, 7
  %v602 = vsub.s32 %v599, %v601
  %v603 = vrot.slane %v575, %v602
  %v604 = vcombine.low %v582, %v596
  %v605 = vcombine.high %v582, %v596
  %v606 = vcombine.low %v589, %v603
  %v607 = vcombine.high %v589, %v603
  %v608 = vcombine.low %v25, %v41
  %v609 = vcombine.high %v25, %v41
  %v610 = vcombine.low %v57, %v73
  %v611 = vcombine.high %v57, %v73
  %v613 = vunpack.c.l.s4 1983009808
  %v614 = vunpack.c.0.s8 %v613
  %v615 = vlaneseq
  %v616 = vshrl.u32 %v615, 7
  %v617 = vsub.s32 %v614, %v616
  %v618 = vrot.slane %v608, %v617
  %v620 = vunpack.c.l.s4 1983009808
  %v621 = vunpack.c.0.s8 %v620
  %v622 = vlaneseq
  %v623 = vshrl.u32 %v622, 7
  %v624 = vsub.s32 %v621, %v623
  %v625 = vrot.slane %v609, %v624
  %v627 = vunpack.c.l.s4 1983009808
  %v628 = vunpack.c.0.s8 %v627
  %v629 = vlaneseq
  %v630 = vshrl.u32 %v629, 7
  %v631 = vsub.s32 %v628, %v630
  %v632 = vrot.slane %v610, %v631
  %v634 = vunpack.c.l.s4 1983009808
  %v635 = vunpack.c.0.s8 %v634
  %v636 = vlaneseq
  %v637 = vshrl.u32 %v636, 7
  %v638 = vsub.s32 %v635, %v637
  %v639 = vrot.slane %v611, %v638
  %v640 = vcombine.low %v618, %v632
  %v641 = vcombine.high %v618, %v632
  %v642 = vcombine.low %v625, %v639
  %v643 = vcombine.high %v625, %v639
  %v644 = vcombine.low %v26, %v42
  %v645 = vcombine.high %v26, %v42
  %v646 = vcombine.low %v58, %v74
  %v647 = vcombine.high %v58, %v74
  %v649 = vunpack.c.l.s4 1983009808
  %v650 = vunpack.c.0.s8 %v649
  %v651 = vlaneseq
  %v652 = vshrl.u32 %v651, 7
  %v653 = vsub.s32 %v650, %v652
  %v654 = vrot.slane %v644, %v653
  %v656 = vunpack.c.l.s4 1983009808
  %v657 = vunpack.c.0.s8 %v656
  %v658 = vlaneseq
  %v659 = vshrl.u32 %v658, 7
  %v660 = vsub.s32 %v657, %v659
  %v661 = vrot.slane %v645, %v660
  %v663 = vunpack.c.l.s4 1983009808
  %v664 = vunpack.c.0.s8 %v663
  %v665 = vlaneseq
  %v666 = vshrl.u32 %v665, 7
  %v667 = vsub.s32 %v664, %v666
  %v668 = vrot.slane %v646, %v667
  %v670 = vunpack.c.l.s4 1983009808
  %v671 = vunpack.c.0.s8 %v670
  %v672 = vlaneseq
  %v673 = vshrl.u32 %v672, 7
  %v674 = vsub.s32 %v671, %v673
  %v675 = vrot.slane %v647, %v674
  %v676 = vcombine.low %v654, %v668
  %v677 = vcombine.high %v654, %v668
  %v678 = vcombine.low %v661, %v675
  %v679 = vcombine.high %v661, %v675
  %v680 = vcombine.low %v27, %v43
  %v681 = vcombine.high %v27, %v43
  %v682 = vcombine.low %v59, %v75
  %v683 = vcombine.high %v59, %v75
  %v685 = vunpack.c.l.s4 1983009808
  %v686 = vunpack.c.0.s8 %v685
  %v687 = vlaneseq
  %v688 = vshrl.u32 %v687, 7
  %v689 = vsub.s32 %v686, %v688
  %v690 = vrot.slane %v680, %v689
  %v692 = vunpack.c.l.s4 1983009808
  %v693 = vunpack.c.0.s8 %v692
  %v694 = vlaneseq
  %v695 = vshrl.u32 %v694, 7
  %v696 = vsub.s32 %v693, %v695
  %v697 = vrot.slane %v681, %v696
  %v699 = vunpack.c.l.s4 1983009808
  %v700 = vunpack.c.0.s8 %v699
  %v701 = vlaneseq
  %v702 = vshrl.u32 %v701, 7
  %v703 = vsub.s32 %v700, %v702
  %v704 = vrot.slane %v682, %v703
  %v706 = vunpack.c.l.s4 1983009808
  %v707 = vunpack.c.0.s8 %v706
  %v708 = vlaneseq
  %v709 = vshrl.u32 %v708, 7
  %v710 = vsub.s32 %v707, %v709
  %v711 = vrot.slane %v683, %v710
  %v712 = vcombine.low %v690, %v704
  %v713 = vcombine.high %v690, %v704
  %v714 = vcombine.low %v697, %v711
  %v715 = vcombine.high %v697, %v711
  %v780 = vpack.c.bf16 %v172, %v172
  %v781 = vpack.c.bf16 %v173, %v173
  %v782 = vpack.c.bf16 %v174, %v174
  %v783 = vpack.c.bf16 %v175, %v175
  %v784 = vpack.c.bf16 %v208, %v208
  %v785 = vpack.c.bf16 %v209, %v209
  %v786 = vpack.c.bf16 %v210, %v210
  %v787 = vpack.c.bf16 %v211, %v211
  %v788 = vpack.c.bf16 %v244, %v244
  %v789 = vpack.c.bf16 %v245, %v245
  %v790 = vpack.c.bf16 %v246, %v246
  %v791 = vpack.c.bf16 %v247, %v247
  %v792 = vpack.c.bf16 %v280, %v280
  %v793 = vpack.c.bf16 %v281, %v281
  %v794 = vpack.c.bf16 %v282, %v282
  %v795 = vpack.c.bf16 %v283, %v283
  %v796 = vpack.c.bf16 %v316, %v316
  %v797 = vpack.c.bf16 %v317, %v317
  %v798 = vpack.c.bf16 %v318, %v318
  %v799 = vpack.c.bf16 %v319, %v319
  %v800 = vpack.c.bf16 %v352, %v352
  %v801 = vpack.c.bf16 %v353, %v353
  %v802 = vpack.c.bf16 %v354, %v354
  %v803 = vpack.c.bf16 %v355, %v355
  %v804 = vpack.c.bf16 %v388, %v388
  %v805 = vpack.c.bf16 %v389, %v389
  %v806 = vpack.c.bf16 %v390, %v390
  %v807 = vpack.c.bf16 %v391, %v391
  %v808 = vpack.c.bf16 %v424, %v424
  %v809 = vpack.c.bf16 %v425, %v425
  %v810 = vpack.c.bf16 %v426, %v426
  %v811 = vpack.c.bf16 %v427, %v427
  %v812 = vpack.c.bf16 %v460, %v460
  %v813 = vpack.c.bf16 %v461, %v461
  %v814 = vpack.c.bf16 %v462, %v462
  %v815 = vpack.c.bf16 %v463, %v463
  %v816 = vpack.c.bf16 %v496, %v496
  %v817 = vpack.c.bf16 %v497, %v497
  %v818 = vpack.c.bf16 %v498, %v498
  %v819 = vpack.c.bf16 %v499, %v499
  %v820 = vpack.c.bf16 %v532, %v532
  %v821 = vpack.c.bf16 %v533, %v533
  %v822 = vpack.c.bf16 %v534, %v534
  %v823 = vpack.c.bf16 %v535, %v535
  %v824 = vpack.c.bf16 %v568, %v568
  %v825 = vpack.c.bf16 %v569, %v569
  %v826 = vpack.c.bf16 %v570, %v570
  %v827 = vpack.c.bf16 %v571, %v571
  %v828 = vpack.c.bf16 %v604, %v604
  %v829 = vpack.c.bf16 %v605, %v605
  %v830 = vpack.c.bf16 %v606, %v606
  %v831 = vpack.c.bf16 %v607, %v607
  %v832 = vpack.c.bf16 %v640, %v640
  %v833 = vpack.c.bf16 %v641, %v641
  %v834 = vpack.c.bf16 %v642, %v642
  %v835 = vpack.c.bf16 %v643, %v643
  %v836 = vpack.c.bf16 %v676, %v676
  %v837 = vpack.c.bf16 %v677, %v677
  %v838 = vpack.c.bf16 %v678, %v678
  %v839 = vpack.c.bf16 %v679, %v679
  %v840 = vpack.c.bf16 %v712, %v712
  %v841 = vpack.c.bf16 %v713, %v713
  %v842 = vpack.c.bf16 %v714, %v714
  %v843 = vpack.c.bf16 %v715, %v715
  %v844 = vld [vmem:[%s1] sm:$0xf]
  %v845 = vld [vmem:[%s1 + $0x4] sm:$0xf]
  %v846 = vld [vmem:[%s1 + $0x8] sm:$0xf]
  %v847 = vld [vmem:[%s1 + $0xc] sm:$0xf]
  %v848 = vld [vmem:[%s1 + $0x10] sm:$0xf]
  %v849 = vld [vmem:[%s1 + $0x14] sm:$0xf]
  %v850 = vld [vmem:[%s1 + $0x18] sm:$0xf]
  %v851 = vld [vmem:[%s1 + $0x1c] sm:$0xf]
  %v852 = vld [vmem:[%s1 + $0x20] sm:$0xf]
  %v853 = vld [vmem:[%s1 + $0x24] sm:$0xf]
  %v854 = vld [vmem:[%s1 + $0x28] sm:$0xf]
  %v855 = vld [vmem:[%s1 + $0x2c] sm:$0xf]
  %v856 = vld [vmem:[%s1 + $0x30] sm:$0xf]
  %v857 = vld [vmem:[%s1 + $0x34] sm:$0xf]
  %v858 = vld [vmem:[%s1 + $0x38] sm:$0xf]
  %v859 = vld [vmem:[%s1 + $0x3c] sm:$0xf]
  %v860 = vld [vmem:[%s1 + $0x40] sm:$0xf]
  %v861 = vld [vmem:[%s1 + $0x44] sm:$0xf]
  %v862 = vld [vmem:[%s1 + $0x48] sm:$0xf]
  %v863 = vld [vmem:[%s1 + $0x4c] sm:$0xf]
  %v864 = vld [vmem:[%s1 + $0x50] sm:$0xf]
  %v865 = vld [vmem:[%s1 + $0x54] sm:$0xf]
  %v866 = vld [vmem:[%s1 + $0x58] sm:$0xf]
  %v867 = vld [vmem:[%s1 + $0x5c] sm:$0xf]
  %v868 = vld [vmem:[%s1 + $0x60] sm:$0xf]
  %v869 = vld [vmem:[%s1 + $0x64] sm:$0xf]
  %v870 = vld [vmem:[%s1 + $0x68] sm:$0xf]
  %v871 = vld [vmem:[%s1 + $0x6c] sm:$0xf]
  %v872 = vld [vmem:[%s1 + $0x70] sm:$0xf]
  %v873 = vld [vmem:[%s1 + $0x74] sm:$0xf]
  %v874 = vld [vmem:[%s1 + $0x78] sm:$0xf]
  %v875 = vld [vmem:[%s1 + $0x7c] sm:$0xf]
  %v876 = vld [vmem:[%s1 + $0x80] sm:$0xf]
  %v877 = vld [vmem:[%s1 + $0x84] sm:$0xf]
  %v878 = vld [vmem:[%s1 + $0x88] sm:$0xf]
  %v879 = vld [vmem:[%s1 + $0x8c] sm:$0xf]
  %v880 = vld [vmem:[%s1 + $0x90] sm:$0xf]
  %v881 = vld [vmem:[%s1 + $0x94] sm:$0xf]
  %v882 = vld [vmem:[%s1 + $0x98] sm:$0xf]
  %v883 = vld [vmem:[%s1 + $0x9c] sm:$0xf]
  %v884 = vld [vmem:[%s1 + $0xa0] sm:$0xf]
  %v885 = vld [vmem:[%s1 + $0xa4] sm:$0xf]
  %v886 = vld [vmem:[%s1 + $0xa8] sm:$0xf]
  %v887 = vld [vmem:[%s1 + $0xac] sm:$0xf]
  %v888 = vld [vmem:[%s1 + $0xb0] sm:$0xf]
  %v889 = vld [vmem:[%s1 + $0xb4] sm:$0xf]
  %v890 = vld [vmem:[%s1 + $0xb8] sm:$0xf]
  %v891 = vld [vmem:[%s1 + $0xbc] sm:$0xf]
  %v892 = vld [vmem:[%s1 + $0xc0] sm:$0xf]
  %v893 = vld [vmem:[%s1 + $0xc4] sm:$0xf]
  %v894 = vld [vmem:[%s1 + $0xc8] sm:$0xf]
  %v895 = vld [vmem:[%s1 + $0xcc] sm:$0xf]
  %v896 = vld [vmem:[%s1 + $0xd0] sm:$0xf]
  %v897 = vld [vmem:[%s1 + $0xd4] sm:$0xf]
  %v898 = vld [vmem:[%s1 + $0xd8] sm:$0xf]
  %v899 = vld [vmem:[%s1 + $0xdc] sm:$0xf]
  %v900 = vld [vmem:[%s1 + $0xe0] sm:$0xf]
  %v901 = vld [vmem:[%s1 + $0xe4] sm:$0xf]
  %v902 = vld [vmem:[%s1 + $0xe8] sm:$0xf]
  %v903 = vld [vmem:[%s1 + $0xec] sm:$0xf]
  %v904 = vld [vmem:[%s1 + $0xf0] sm:$0xf]
  %v905 = vld [vmem:[%s1 + $0xf4] sm:$0xf]
  %v906 = vld [vmem:[%s1 + $0xf8] sm:$0xf]
  %v907 = vld [vmem:[%s1 + $0xfc] sm:$0xf]
  %v908 = vld [vmem:[%s1 + $0x100] sm:$0xf]
  %v909 = vld [vmem:[%s1 + $0x104] sm:$0xf]
  %v910 = vld [vmem:[%s1 + $0x108] sm:$0xf]
  %v911 = vld [vmem:[%s1 + $0x10c] sm:$0xf]
  %v912 = vld [vmem:[%s1 + $0x110] sm:$0xf]
  %v913 = vld [vmem:[%s1 + $0x114] sm:$0xf]
  %v914 = vld [vmem:[%s1 + $0x118] sm:$0xf]
  %v915 = vld [vmem:[%s1 + $0x11c] sm:$0xf]
  %v916 = vld [vmem:[%s1 + $0x120] sm:$0xf]
  %v917 = vld [vmem:[%s1 + $0x124] sm:$0xf]
  %v918 = vld [vmem:[%s1 + $0x128] sm:$0xf]
  %v919 = vld [vmem:[%s1 + $0x12c] sm:$0xf]
  %v920 = vld [vmem:[%s1 + $0x130] sm:$0xf]
  %v921 = vld [vmem:[%s1 + $0x134] sm:$0xf]
  %v922 = vld [vmem:[%s1 + $0x138] sm:$0xf]
  %v923 = vld [vmem:[%s1 + $0x13c] sm:$0xf]
  %v924 = vld [vmem:[%s1 + $0x140] sm:$0xf]
  %v925 = vld [vmem:[%s1 + $0x144] sm:$0xf]
  %v926 = vld [vmem:[%s1 + $0x148] sm:$0xf]
  %v927 = vld [vmem:[%s1 + $0x14c] sm:$0xf]
  %v928 = vld [vmem:[%s1 + $0x150] sm:$0xf]
  %v929 = vld [vmem:[%s1 + $0x154] sm:$0xf]
  %v930 = vld [vmem:[%s1 + $0x158] sm:$0xf]
  %v931 = vld [vmem:[%s1 + $0x15c] sm:$0xf]
  %v932 = vld [vmem:[%s1 + $0x160] sm:$0xf]
  %v933 = vld [vmem:[%s1 + $0x164] sm:$0xf]
  %v934 = vld [vmem:[%s1 + $0x168] sm:$0xf]
  %v935 = vld [vmem:[%s1 + $0x16c] sm:$0xf]
  %v936 = vld [vmem:[%s1 + $0x170] sm:$0xf]
  %v937 = vld [vmem:[%s1 + $0x174] sm:$0xf]
  %v938 = vld [vmem:[%s1 + $0x178] sm:$0xf]
  %v939 = vld [vmem:[%s1 + $0x17c] sm:$0xf]
  %v940 = vld [vmem:[%s1 + $0x180] sm:$0xf]
  %v941 = vld [vmem:[%s1 + $0x184] sm:$0xf]
  %v942 = vld [vmem:[%s1 + $0x188] sm:$0xf]
  %v943 = vld [vmem:[%s1 + $0x18c] sm:$0xf]
  %v944 = vld [vmem:[%s1 + $0x190] sm:$0xf]
  %v945 = vld [vmem:[%s1 + $0x194] sm:$0xf]
  %v946 = vld [vmem:[%s1 + $0x198] sm:$0xf]
  %v947 = vld [vmem:[%s1 + $0x19c] sm:$0xf]
  %v948 = vld [vmem:[%s1 + $0x1a0] sm:$0xf]
  %v949 = vld [vmem:[%s1 + $0x1a4] sm:$0xf]
  %v950 = vld [vmem:[%s1 + $0x1a8] sm:$0xf]
  %v951 = vld [vmem:[%s1 + $0x1ac] sm:$0xf]
  %v952 = vld [vmem:[%s1 + $0x1b0] sm:$0xf]
  %v953 = vld [vmem:[%s1 + $0x1b4] sm:$0xf]
  %v954 = vld [vmem:[%s1 + $0x1b8] sm:$0xf]
  %v955 = vld [vmem:[%s1 + $0x1bc] sm:$0xf]
  %v956 = vld [vmem:[%s1 + $0x1c0] sm:$0xf]
  %v957 = vld [vmem:[%s1 + $0x1c4] sm:$0xf]
  %v958 = vld [vmem:[%s1 + $0x1c8] sm:$0xf]
  %v959 = vld [vmem:[%s1 + $0x1cc] sm:$0xf]
  %v960 = vld [vmem:[%s1 + $0x1d0] sm:$0xf]
  %v961 = vld [vmem:[%s1 + $0x1d4] sm:$0xf]
  %v962 = vld [vmem:[%s1 + $0x1d8] sm:$0xf]
  %v963 = vld [vmem:[%s1 + $0x1dc] sm:$0xf]
  %v964 = vld [vmem:[%s1 + $0x1e0] sm:$0xf]
  %v965 = vld [vmem:[%s1 + $0x1e4] sm:$0xf]
  %v966 = vld [vmem:[%s1 + $0x1e8] sm:$0xf]
  %v967 = vld [vmem:[%s1 + $0x1ec] sm:$0xf]
  %v968 = vld [vmem:[%s1 + $0x1f0] sm:$0xf]
  %v969 = vld [vmem:[%s1 + $0x1f4] sm:$0xf]
  %v970 = vld [vmem:[%s1 + $0x1f8] sm:$0xf]
  %v971 = vld [vmem:[%s1 + $0x1fc] sm:$0xf]
  %v972 = vld [vmem:[%s1 + $0x200] sm:$0xf]
  %v973 = vld [vmem:[%s1 + $0x204] sm:$0xf]
  %v974 = vld [vmem:[%s1 + $0x208] sm:$0xf]
  %v975 = vld [vmem:[%s1 + $0x20c] sm:$0xf]
  %v976 = vld [vmem:[%s1 + $0x210] sm:$0xf]
  %v977 = vld [vmem:[%s1 + $0x214] sm:$0xf]
  %v978 = vld [vmem:[%s1 + $0x218] sm:$0xf]
  %v979 = vld [vmem:[%s1 + $0x21c] sm:$0xf]
  %v980 = vld [vmem:[%s1 + $0x220] sm:$0xf]
  %v981 = vld [vmem:[%s1 + $0x224] sm:$0xf]
  %v982 = vld [vmem:[%s1 + $0x228] sm:$0xf]
  %v983 = vld [vmem:[%s1 + $0x22c] sm:$0xf]
  %v984 = vld [vmem:[%s1 + $0x230] sm:$0xf]
  %v985 = vld [vmem:[%s1 + $0x234] sm:$0xf]
  %v986 = vld [vmem:[%s1 + $0x238] sm:$0xf]
  %v987 = vld [vmem:[%s1 + $0x23c] sm:$0xf]
  %v988 = vld [vmem:[%s1 + $0x240] sm:$0xf]
  %v989 = vld [vmem:[%s1 + $0x244] sm:$0xf]
  %v990 = vld [vmem:[%s1 + $0x248] sm:$0xf]
  %v991 = vld [vmem:[%s1 + $0x24c] sm:$0xf]
  %v992 = vld [vmem:[%s1 + $0x250] sm:$0xf]
  %v993 = vld [vmem:[%s1 + $0x254] sm:$0xf]
  %v994 = vld [vmem:[%s1 + $0x258] sm:$0xf]
  %v995 = vld [vmem:[%s1 + $0x25c] sm:$0xf]
  %v996 = vld [vmem:[%s1 + $0x260] sm:$0xf]
  %v997 = vld [vmem:[%s1 + $0x264] sm:$0xf]
  %v998 = vld [vmem:[%s1 + $0x268] sm:$0xf]
  %v999 = vld [vmem:[%s1 + $0x26c] sm:$0xf]
  %v1000 = vld [vmem:[%s1 + $0x270] sm:$0xf]
  %v1001 = vld [vmem:[%s1 + $0x274] sm:$0xf]
  %v1002 = vld [vmem:[%s1 + $0x278] sm:$0xf]
  %v1003 = vld [vmem:[%s1 + $0x27c] sm:$0xf]
  %v1004 = vld [vmem:[%s1 + $0x280] sm:$0xf]
  %v1005 = vld [vmem:[%s1 + $0x284] sm:$0xf]
  %v1006 = vld [vmem:[%s1 + $0x288] sm:$0xf]
  %v1007 = vld [vmem:[%s1 + $0x28c] sm:$0xf]
  %v1008 = vld [vmem:[%s1 + $0x290] sm:$0xf]
  %v1009 = vld [vmem:[%s1 + $0x294] sm:$0xf]
  %v1010 = vld [vmem:[%s1 + $0x298] sm:$0xf]
  %v1011 = vld [vmem:[%s1 + $0x29c] sm:$0xf]
  %v1012 = vld [vmem:[%s1 + $0x2a0] sm:$0xf]
  %v1013 = vld [vmem:[%s1 + $0x2a4] sm:$0xf]
  %v1014 = vld [vmem:[%s1 + $0x2a8] sm:$0xf]
  %v1015 = vld [vmem:[%s1 + $0x2ac] sm:$0xf]
  %v1016 = vld [vmem:[%s1 + $0x2b0] sm:$0xf]
  %v1017 = vld [vmem:[%s1 + $0x2b4] sm:$0xf]
  %v1018 = vld [vmem:[%s1 + $0x2b8] sm:$0xf]
  %v1019 = vld [vmem:[%s1 + $0x2bc] sm:$0xf]
  %v1020 = vld [vmem:[%s1 + $0x2c0] sm:$0xf]
  %v1021 = vld [vmem:[%s1 + $0x2c4] sm:$0xf]
  %v1022 = vld [vmem:[%s1 + $0x2c8] sm:$0xf]
  %v1023 = vld [vmem:[%s1 + $0x2cc] sm:$0xf]
  %v1024 = vld [vmem:[%s1 + $0x2d0] sm:$0xf]
  %v1025 = vld [vmem:[%s1 + $0x2d4] sm:$0xf]
  %v1026 = vld [vmem:[%s1 + $0x2d8] sm:$0xf]
  %v1027 = vld [vmem:[%s1 + $0x2dc] sm:$0xf]
  %v1028 = vld [vmem:[%s1 + $0x2e0] sm:$0xf]
  %v1029 = vld [vmem:[%s1 + $0x2e4] sm:$0xf]
  %v1030 = vld [vmem:[%s1 + $0x2e8] sm:$0xf]
  %v1031 = vld [vmem:[%s1 + $0x2ec] sm:$0xf]
  %v1032 = vld [vmem:[%s1 + $0x2f0] sm:$0xf]
  %v1033 = vld [vmem:[%s1 + $0x2f4] sm:$0xf]
  %v1034 = vld [vmem:[%s1 + $0x2f8] sm:$0xf]
  %v1035 = vld [vmem:[%s1 + $0x2fc] sm:$0xf]
  %v1036 = vld [vmem:[%s1 + $0x300] sm:$0xf]
  %v1037 = vld [vmem:[%s1 + $0x304] sm:$0xf]
  %v1038 = vld [vmem:[%s1 + $0x308] sm:$0xf]
  %v1039 = vld [vmem:[%s1 + $0x30c] sm:$0xf]
  %v1040 = vld [vmem:[%s1 + $0x310] sm:$0xf]
  %v1041 = vld [vmem:[%s1 + $0x314] sm:$0xf]
  %v1042 = vld [vmem:[%s1 + $0x318] sm:$0xf]
  %v1043 = vld [vmem:[%s1 + $0x31c] sm:$0xf]
  %v1044 = vld [vmem:[%s1 + $0x320] sm:$0xf]
  %v1045 = vld [vmem:[%s1 + $0x324] sm:$0xf]
  %v1046 = vld [vmem:[%s1 + $0x328] sm:$0xf]
  %v1047 = vld [vmem:[%s1 + $0x32c] sm:$0xf]
  %v1048 = vld [vmem:[%s1 + $0x330] sm:$0xf]
  %v1049 = vld [vmem:[%s1 + $0x334] sm:$0xf]
  %v1050 = vld [vmem:[%s1 + $0x338] sm:$0xf]
  %v1051 = vld [vmem:[%s1 + $0x33c] sm:$0xf]
  %v1052 = vld [vmem:[%s1 + $0x340] sm:$0xf]
  %v1053 = vld [vmem:[%s1 + $0x344] sm:$0xf]
  %v1054 = vld [vmem:[%s1 + $0x348] sm:$0xf]
  %v1055 = vld [vmem:[%s1 + $0x34c] sm:$0xf]
  %v1056 = vld [vmem:[%s1 + $0x350] sm:$0xf]
  %v1057 = vld [vmem:[%s1 + $0x354] sm:$0xf]
  %v1058 = vld [vmem:[%s1 + $0x358] sm:$0xf]
  %v1059 = vld [vmem:[%s1 + $0x35c] sm:$0xf]
  %v1060 = vld [vmem:[%s1 + $0x360] sm:$0xf]
  %v1061 = vld [vmem:[%s1 + $0x364] sm:$0xf]
  %v1062 = vld [vmem:[%s1 + $0x368] sm:$0xf]
  %v1063 = vld [vmem:[%s1 + $0x36c] sm:$0xf]
  %v1064 = vld [vmem:[%s1 + $0x370] sm:$0xf]
  %v1065 = vld [vmem:[%s1 + $0x374] sm:$0xf]
  %v1066 = vld [vmem:[%s1 + $0x378] sm:$0xf]
  %v1067 = vld [vmem:[%s1 + $0x37c] sm:$0xf]
  %v1068 = vld [vmem:[%s1 + $0x380] sm:$0xf]
  %v1069 = vld [vmem:[%s1 + $0x384] sm:$0xf]
  %v1070 = vld [vmem:[%s1 + $0x388] sm:$0xf]
  %v1071 = vld [vmem:[%s1 + $0x38c] sm:$0xf]
  %v1072 = vld [vmem:[%s1 + $0x390] sm:$0xf]
  %v1073 = vld [vmem:[%s1 + $0x394] sm:$0xf]
  %v1074 = vld [vmem:[%s1 + $0x398] sm:$0xf]
  %v1075 = vld [vmem:[%s1 + $0x39c] sm:$0xf]
  %v1076 = vld [vmem:[%s1 + $0x3a0] sm:$0xf]
  %v1077 = vld [vmem:[%s1 + $0x3a4] sm:$0xf]
  %v1078 = vld [vmem:[%s1 + $0x3a8] sm:$0xf]
  %v1079 = vld [vmem:[%s1 + $0x3ac] sm:$0xf]
  %v1080 = vld [vmem:[%s1 + $0x3b0] sm:$0xf]
  %v1081 = vld [vmem:[%s1 + $0x3b4] sm:$0xf]
  %v1082 = vld [vmem:[%s1 + $0x3b8] sm:$0xf]
  %v1083 = vld [vmem:[%s1 + $0x3bc] sm:$0xf]
  %v1084 = vld [vmem:[%s1 + $0x3c0] sm:$0xf]
  %v1085 = vld [vmem:[%s1 + $0x3c4] sm:$0xf]
  %v1086 = vld [vmem:[%s1 + $0x3c8] sm:$0xf]
  %v1087 = vld [vmem:[%s1 + $0x3cc] sm:$0xf]
  %v1088 = vld [vmem:[%s1 + $0x3d0] sm:$0xf]
  %v1089 = vld [vmem:[%s1 + $0x3d4] sm:$0xf]
  %v1090 = vld [vmem:[%s1 + $0x3d8] sm:$0xf]
  %v1091 = vld [vmem:[%s1 + $0x3dc] sm:$0xf]
  %v1092 = vld [vmem:[%s1 + $0x3e0] sm:$0xf]
  %v1093 = vld [vmem:[%s1 + $0x3e4] sm:$0xf]
  %v1094 = vld [vmem:[%s1 + $0x3e8] sm:$0xf]
  %v1095 = vld [vmem:[%s1 + $0x3ec] sm:$0xf]
  %v1096 = vld [vmem:[%s1 + $0x3f0] sm:$0xf]
  %v1097 = vld [vmem:[%s1 + $0x3f4] sm:$0xf]
  %v1098 = vld [vmem:[%s1 + $0x3f8] sm:$0xf]
  %v1099 = vld [vmem:[%s1 + $0x3fc] sm:$0xf]
  %v1100 = vld [vmem:[%s1 + $0x400] sm:$0xf]
  %v1101 = vld [vmem:[%s1 + $0x404] sm:$0xf]
  %v1102 = vld [vmem:[%s1 + $0x408] sm:$0xf]
  %v1103 = vld [vmem:[%s1 + $0x40c] sm:$0xf]
  %v1104 = vld [vmem:[%s1 + $0x410] sm:$0xf]
  %v1105 = vld [vmem:[%s1 + $0x414] sm:$0xf]
  %v1106 = vld [vmem:[%s1 + $0x418] sm:$0xf]
  %v1107 = vld [vmem:[%s1 + $0x41c] sm:$0xf]
  %v1108 = vld [vmem:[%s1 + $0x420] sm:$0xf]
  %v1109 = vld [vmem:[%s1 + $0x424] sm:$0xf]
  %v1110 = vld [vmem:[%s1 + $0x428] sm:$0xf]
  %v1111 = vld [vmem:[%s1 + $0x42c] sm:$0xf]
  %v1112 = vld [vmem:[%s1 + $0x430] sm:$0xf]
  %v1113 = vld [vmem:[%s1 + $0x434] sm:$0xf]
  %v1114 = vld [vmem:[%s1 + $0x438] sm:$0xf]
  %v1115 = vld [vmem:[%s1 + $0x43c] sm:$0xf]
  %v1116 = vld [vmem:[%s1 + $0x440] sm:$0xf]
  %v1117 = vld [vmem:[%s1 + $0x444] sm:$0xf]
  %v1118 = vld [vmem:[%s1 + $0x448] sm:$0xf]
  %v1119 = vld [vmem:[%s1 + $0x44c] sm:$0xf]
  %v1120 = vld [vmem:[%s1 + $0x450] sm:$0xf]
  %v1121 = vld [vmem:[%s1 + $0x454] sm:$0xf]
  %v1122 = vld [vmem:[%s1 + $0x458] sm:$0xf]
  %v1123 = vld [vmem:[%s1 + $0x45c] sm:$0xf]
  %v1124 = vld [vmem:[%s1 + $0x460] sm:$0xf]
  %v1125 = vld [vmem:[%s1 + $0x464] sm:$0xf]
  %v1126 = vld [vmem:[%s1 + $0x468] sm:$0xf]
  %v1127 = vld [vmem:[%s1 + $0x46c] sm:$0xf]
  %v1128 = vld [vmem:[%s1 + $0x470] sm:$0xf]
  %v1129 = vld [vmem:[%s1 + $0x474] sm:$0xf]
  %v1130 = vld [vmem:[%s1 + $0x478] sm:$0xf]
  %v1131 = vld [vmem:[%s1 + $0x47c] sm:$0xf]
  %v1132 = vld [vmem:[%s1 + $0x480] sm:$0xf]
  %v1133 = vld [vmem:[%s1 + $0x484] sm:$0xf]
  %v1134 = vld [vmem:[%s1 + $0x488] sm:$0xf]
  %v1135 = vld [vmem:[%s1 + $0x48c] sm:$0xf]
  %v1136 = vld [vmem:[%s1 + $0x490] sm:$0xf]
  %v1137 = vld [vmem:[%s1 + $0x494] sm:$0xf]
  %v1138 = vld [vmem:[%s1 + $0x498] sm:$0xf]
  %v1139 = vld [vmem:[%s1 + $0x49c] sm:$0xf]
  %v1140 = vld [vmem:[%s1 + $0x4a0] sm:$0xf]
  %v1141 = vld [vmem:[%s1 + $0x4a4] sm:$0xf]
  %v1142 = vld [vmem:[%s1 + $0x4a8] sm:$0xf]
  %v1143 = vld [vmem:[%s1 + $0x4ac] sm:$0xf]
  %v1144 = vld [vmem:[%s1 + $0x4b0] sm:$0xf]
  %v1145 = vld [vmem:[%s1 + $0x4b4] sm:$0xf]
  %v1146 = vld [vmem:[%s1 + $0x4b8] sm:$0xf]
  %v1147 = vld [vmem:[%s1 + $0x4bc] sm:$0xf]
  %v1148 = vld [vmem:[%s1 + $0x4c0] sm:$0xf]
  %v1149 = vld [vmem:[%s1 + $0x4c4] sm:$0xf]
  %v1150 = vld [vmem:[%s1 + $0x4c8] sm:$0xf]
  %v1151 = vld [vmem:[%s1 + $0x4cc] sm:$0xf]
  %v1152 = vld [vmem:[%s1 + $0x4d0] sm:$0xf]
  %v1153 = vld [vmem:[%s1 + $0x4d4] sm:$0xf]
  %v1154 = vld [vmem:[%s1 + $0x4d8] sm:$0xf]
  %v1155 = vld [vmem:[%s1 + $0x4dc] sm:$0xf]
  %v1156 = vld [vmem:[%s1 + $0x4e0] sm:$0xf]
  %v1157 = vld [vmem:[%s1 + $0x4e4] sm:$0xf]
  %v1158 = vld [vmem:[%s1 + $0x4e8] sm:$0xf]
  %v1159 = vld [vmem:[%s1 + $0x4ec] sm:$0xf]
  %v1160 = vld [vmem:[%s1 + $0x4f0] sm:$0xf]
  %v1161 = vld [vmem:[%s1 + $0x4f4] sm:$0xf]
  %v1162 = vld [vmem:[%s1 + $0x4f8] sm:$0xf]
  %v1163 = vld [vmem:[%s1 + $0x4fc] sm:$0xf]
  %v1164 = vld [vmem:[%s1 + $0x500] sm:$0xf]
  %v1165 = vld [vmem:[%s1 + $0x504] sm:$0xf]
  %v1166 = vld [vmem:[%s1 + $0x508] sm:$0xf]
  %v1167 = vld [vmem:[%s1 + $0x50c] sm:$0xf]
  %v1168 = vld [vmem:[%s1 + $0x510] sm:$0xf]
  %v1169 = vld [vmem:[%s1 + $0x514] sm:$0xf]
  %v1170 = vld [vmem:[%s1 + $0x518] sm:$0xf]
  %v1171 = vld [vmem:[%s1 + $0x51c] sm:$0xf]
  %v1172 = vld [vmem:[%s1 + $0x520] sm:$0xf]
  %v1173 = vld [vmem:[%s1 + $0x524] sm:$0xf]
  %v1174 = vld [vmem:[%s1 + $0x528] sm:$0xf]
  %v1175 = vld [vmem:[%s1 + $0x52c] sm:$0xf]
  %v1176 = vld [vmem:[%s1 + $0x530] sm:$0xf]
  %v1177 = vld [vmem:[%s1 + $0x534] sm:$0xf]
  %v1178 = vld [vmem:[%s1 + $0x538] sm:$0xf]
  %v1179 = vld [vmem:[%s1 + $0x53c] sm:$0xf]
  %v1180 = vld [vmem:[%s1 + $0x540] sm:$0xf]
  %v1181 = vld [vmem:[%s1 + $0x544] sm:$0xf]
  %v1182 = vld [vmem:[%s1 + $0x548] sm:$0xf]
  %v1183 = vld [vmem:[%s1 + $0x54c] sm:$0xf]
  %v1184 = vld [vmem:[%s1 + $0x550] sm:$0xf]
  %v1185 = vld [vmem:[%s1 + $0x554] sm:$0xf]
  %v1186 = vld [vmem:[%s1 + $0x558] sm:$0xf]
  %v1187 = vld [vmem:[%s1 + $0x55c] sm:$0xf]
  %v1188 = vld [vmem:[%s1 + $0x560] sm:$0xf]
  %v1189 = vld [vmem:[%s1 + $0x564] sm:$0xf]
  %v1190 = vld [vmem:[%s1 + $0x568] sm:$0xf]
  %v1191 = vld [vmem:[%s1 + $0x56c] sm:$0xf]
  %v1192 = vld [vmem:[%s1 + $0x570] sm:$0xf]
  %v1193 = vld [vmem:[%s1 + $0x574] sm:$0xf]
  %v1194 = vld [vmem:[%s1 + $0x578] sm:$0xf]
  %v1195 = vld [vmem:[%s1 + $0x57c] sm:$0xf]
  %v1196 = vld [vmem:[%s1 + $0x580] sm:$0xf]
  %v1197 = vld [vmem:[%s1 + $0x584] sm:$0xf]
  %v1198 = vld [vmem:[%s1 + $0x588] sm:$0xf]
  %v1199 = vld [vmem:[%s1 + $0x58c] sm:$0xf]
  %v1200 = vld [vmem:[%s1 + $0x590] sm:$0xf]
  %v1201 = vld [vmem:[%s1 + $0x594] sm:$0xf]
  %v1202 = vld [vmem:[%s1 + $0x598] sm:$0xf]
  %v1203 = vld [vmem:[%s1 + $0x59c] sm:$0xf]
  %v1204 = vld [vmem:[%s1 + $0x5a0] sm:$0xf]
  %v1205 = vld [vmem:[%s1 + $0x5a4] sm:$0xf]
  %v1206 = vld [vmem:[%s1 + $0x5a8] sm:$0xf]
  %v1207 = vld [vmem:[%s1 + $0x5ac] sm:$0xf]
  %v1208 = vld [vmem:[%s1 + $0x5b0] sm:$0xf]
  %v1209 = vld [vmem:[%s1 + $0x5b4] sm:$0xf]
  %v1210 = vld [vmem:[%s1 + $0x5b8] sm:$0xf]
  %v1211 = vld [vmem:[%s1 + $0x5bc] sm:$0xf]
  %v1212 = vld [vmem:[%s1 + $0x5c0] sm:$0xf]
  %v1213 = vld [vmem:[%s1 + $0x5c4] sm:$0xf]
  %v1214 = vld [vmem:[%s1 + $0x5c8] sm:$0xf]
  %v1215 = vld [vmem:[%s1 + $0x5cc] sm:$0xf]
  %v1216 = vld [vmem:[%s1 + $0x5d0] sm:$0xf]
  %v1217 = vld [vmem:[%s1 + $0x5d4] sm:$0xf]
  %v1218 = vld [vmem:[%s1 + $0x5d8] sm:$0xf]
  %v1219 = vld [vmem:[%s1 + $0x5dc] sm:$0xf]
  %v1220 = vld [vmem:[%s1 + $0x5e0] sm:$0xf]
  %v1221 = vld [vmem:[%s1 + $0x5e4] sm:$0xf]
  %v1222 = vld [vmem:[%s1 + $0x5e8] sm:$0xf]
  %v1223 = vld [vmem:[%s1 + $0x5ec] sm:$0xf]
  %v1224 = vld [vmem:[%s1 + $0x5f0] sm:$0xf]
  %v1225 = vld [vmem:[%s1 + $0x5f4] sm:$0xf]
  %v1226 = vld [vmem:[%s1 + $0x5f8] sm:$0xf]
  %v1227 = vld [vmem:[%s1 + $0x5fc] sm:$0xf]
  %v1228 = vld [vmem:[%s1 + $0x600] sm:$0xf]
  %v1229 = vld [vmem:[%s1 + $0x604] sm:$0xf]
  %v1230 = vld [vmem:[%s1 + $0x608] sm:$0xf]
  %v1231 = vld [vmem:[%s1 + $0x60c] sm:$0xf]
  %v1232 = vld [vmem:[%s1 + $0x610] sm:$0xf]
  %v1233 = vld [vmem:[%s1 + $0x614] sm:$0xf]
  %v1234 = vld [vmem:[%s1 + $0x618] sm:$0xf]
  %v1235 = vld [vmem:[%s1 + $0x61c] sm:$0xf]
  %v1236 = vld [vmem:[%s1 + $0x620] sm:$0xf]
  %v1237 = vld [vmem:[%s1 + $0x624] sm:$0xf]
  %v1238 = vld [vmem:[%s1 + $0x628] sm:$0xf]
  %v1239 = vld [vmem:[%s1 + $0x62c] sm:$0xf]
  %v1240 = vld [vmem:[%s1 + $0x630] sm:$0xf]
  %v1241 = vld [vmem:[%s1 + $0x634] sm:$0xf]
  %v1242 = vld [vmem:[%s1 + $0x638] sm:$0xf]
  %v1243 = vld [vmem:[%s1 + $0x63c] sm:$0xf]
  %v1244 = vld [vmem:[%s1 + $0x640] sm:$0xf]
  %v1245 = vld [vmem:[%s1 + $0x644] sm:$0xf]
  %v1246 = vld [vmem:[%s1 + $0x648] sm:$0xf]
  %v1247 = vld [vmem:[%s1 + $0x64c] sm:$0xf]
  %v1248 = vld [vmem:[%s1 + $0x650] sm:$0xf]
  %v1249 = vld [vmem:[%s1 + $0x654] sm:$0xf]
  %v1250 = vld [vmem:[%s1 + $0x658] sm:$0xf]
  %v1251 = vld [vmem:[%s1 + $0x65c] sm:$0xf]
  %v1252 = vld [vmem:[%s1 + $0x660] sm:$0xf]
  %v1253 = vld [vmem:[%s1 + $0x664] sm:$0xf]
  %v1254 = vld [vmem:[%s1 + $0x668] sm:$0xf]
  %v1255 = vld [vmem:[%s1 + $0x66c] sm:$0xf]
  %v1256 = vld [vmem:[%s1 + $0x670] sm:$0xf]
  %v1257 = vld [vmem:[%s1 + $0x674] sm:$0xf]
  %v1258 = vld [vmem:[%s1 + $0x678] sm:$0xf]
  %v1259 = vld [vmem:[%s1 + $0x67c] sm:$0xf]
  %v1260 = vld [vmem:[%s1 + $0x680] sm:$0xf]
  %v1261 = vld [vmem:[%s1 + $0x684] sm:$0xf]
  %v1262 = vld [vmem:[%s1 + $0x688] sm:$0xf]
  %v1263 = vld [vmem:[%s1 + $0x68c] sm:$0xf]
  %v1264 = vld [vmem:[%s1 + $0x690] sm:$0xf]
  %v1265 = vld [vmem:[%s1 + $0x694] sm:$0xf]
  %v1266 = vld [vmem:[%s1 + $0x698] sm:$0xf]
  %v1267 = vld [vmem:[%s1 + $0x69c] sm:$0xf]
  %v1268 = vld [vmem:[%s1 + $0x6a0] sm:$0xf]
  %v1269 = vld [vmem:[%s1 + $0x6a4] sm:$0xf]
  %v1270 = vld [vmem:[%s1 + $0x6a8] sm:$0xf]
  %v1271 = vld [vmem:[%s1 + $0x6ac] sm:$0xf]
  %v1272 = vld [vmem:[%s1 + $0x6b0] sm:$0xf]
  %v1273 = vld [vmem:[%s1 + $0x6b4] sm:$0xf]
  %v1274 = vld [vmem:[%s1 + $0x6b8] sm:$0xf]
  %v1275 = vld [vmem:[%s1 + $0x6bc] sm:$0xf]
  %v1276 = vld [vmem:[%s1 + $0x6c0] sm:$0xf]
  %v1277 = vld [vmem:[%s1 + $0x6c4] sm:$0xf]
  %v1278 = vld [vmem:[%s1 + $0x6c8] sm:$0xf]
  %v1279 = vld [vmem:[%s1 + $0x6cc] sm:$0xf]
  %v1280 = vld [vmem:[%s1 + $0x6d0] sm:$0xf]
  %v1281 = vld [vmem:[%s1 + $0x6d4] sm:$0xf]
  %v1282 = vld [vmem:[%s1 + $0x6d8] sm:$0xf]
  %v1283 = vld [vmem:[%s1 + $0x6dc] sm:$0xf]
  %v1284 = vld [vmem:[%s1 + $0x6e0] sm:$0xf]
  %v1285 = vld [vmem:[%s1 + $0x6e4] sm:$0xf]
  %v1286 = vld [vmem:[%s1 + $0x6e8] sm:$0xf]
  %v1287 = vld [vmem:[%s1 + $0x6ec] sm:$0xf]
  %v1288 = vld [vmem:[%s1 + $0x6f0] sm:$0xf]
  %v1289 = vld [vmem:[%s1 + $0x6f4] sm:$0xf]
  %v1290 = vld [vmem:[%s1 + $0x6f8] sm:$0xf]
  %v1291 = vld [vmem:[%s1 + $0x6fc] sm:$0xf]
  %v1292 = vld [vmem:[%s1 + $0x700] sm:$0xf]
  %v1293 = vld [vmem:[%s1 + $0x704] sm:$0xf]
  %v1294 = vld [vmem:[%s1 + $0x708] sm:$0xf]
  %v1295 = vld [vmem:[%s1 + $0x70c] sm:$0xf]
  %v1296 = vld [vmem:[%s1 + $0x710] sm:$0xf]
  %v1297 = vld [vmem:[%s1 + $0x714] sm:$0xf]
  %v1298 = vld [vmem:[%s1 + $0x718] sm:$0xf]
  %v1299 = vld [vmem:[%s1 + $0x71c] sm:$0xf]
  %v1300 = vld [vmem:[%s1 + $0x720] sm:$0xf]
  %v1301 = vld [vmem:[%s1 + $0x724] sm:$0xf]
  %v1302 = vld [vmem:[%s1 + $0x728] sm:$0xf]
  %v1303 = vld [vmem:[%s1 + $0x72c] sm:$0xf]
  %v1304 = vld [vmem:[%s1 + $0x730] sm:$0xf]
  %v1305 = vld [vmem:[%s1 + $0x734] sm:$0xf]
  %v1306 = vld [vmem:[%s1 + $0x738] sm:$0xf]
  %v1307 = vld [vmem:[%s1 + $0x73c] sm:$0xf]
  %v1308 = vld [vmem:[%s1 + $0x740] sm:$0xf]
  %v1309 = vld [vmem:[%s1 + $0x744] sm:$0xf]
  %v1310 = vld [vmem:[%s1 + $0x748] sm:$0xf]
  %v1311 = vld [vmem:[%s1 + $0x74c] sm:$0xf]
  %v1312 = vld [vmem:[%s1 + $0x750] sm:$0xf]
  %v1313 = vld [vmem:[%s1 + $0x754] sm:$0xf]
  %v1314 = vld [vmem:[%s1 + $0x758] sm:$0xf]
  %v1315 = vld [vmem:[%s1 + $0x75c] sm:$0xf]
  %v1316 = vld [vmem:[%s1 + $0x760] sm:$0xf]
  %v1317 = vld [vmem:[%s1 + $0x764] sm:$0xf]
  %v1318 = vld [vmem:[%s1 + $0x768] sm:$0xf]
  %v1319 = vld [vmem:[%s1 + $0x76c] sm:$0xf]
  %v1320 = vld [vmem:[%s1 + $0x770] sm:$0xf]
  %v1321 = vld [vmem:[%s1 + $0x774] sm:$0xf]
  %v1322 = vld [vmem:[%s1 + $0x778] sm:$0xf]
  %v1323 = vld [vmem:[%s1 + $0x77c] sm:$0xf]
  %v1324 = vld [vmem:[%s1 + $0x780] sm:$0xf]
  %v1325 = vld [vmem:[%s1 + $0x784] sm:$0xf]
  %v1326 = vld [vmem:[%s1 + $0x788] sm:$0xf]
  %v1327 = vld [vmem:[%s1 + $0x78c] sm:$0xf]
  %v1328 = vld [vmem:[%s1 + $0x790] sm:$0xf]
  %v1329 = vld [vmem:[%s1 + $0x794] sm:$0xf]
  %v1330 = vld [vmem:[%s1 + $0x798] sm:$0xf]
  %v1331 = vld [vmem:[%s1 + $0x79c] sm:$0xf]
  %v1332 = vld [vmem:[%s1 + $0x7a0] sm:$0xf]
  %v1333 = vld [vmem:[%s1 + $0x7a4] sm:$0xf]
  %v1334 = vld [vmem:[%s1 + $0x7a8] sm:$0xf]
  %v1335 = vld [vmem:[%s1 + $0x7ac] sm:$0xf]
  %v1336 = vld [vmem:[%s1 + $0x7b0] sm:$0xf]
  %v1337 = vld [vmem:[%s1 + $0x7b4] sm:$0xf]
  %v1338 = vld [vmem:[%s1 + $0x7b8] sm:$0xf]
  %v1339 = vld [vmem:[%s1 + $0x7bc] sm:$0xf]
  %v1340 = vld [vmem:[%s1 + $0x7c0] sm:$0xf]
  %v1341 = vld [vmem:[%s1 + $0x7c4] sm:$0xf]
  %v1342 = vld [vmem:[%s1 + $0x7c8] sm:$0xf]
  %v1343 = vld [vmem:[%s1 + $0x7cc] sm:$0xf]
  %v1344 = vld [vmem:[%s1 + $0x7d0] sm:$0xf]
  %v1345 = vld [vmem:[%s1 + $0x7d4] sm:$0xf]
  %v1346 = vld [vmem:[%s1 + $0x7d8] sm:$0xf]
  %v1347 = vld [vmem:[%s1 + $0x7dc] sm:$0xf]
  %v1348 = vld [vmem:[%s1 + $0x7e0] sm:$0xf]
  %v1349 = vld [vmem:[%s1 + $0x7e4] sm:$0xf]
  %v1350 = vld [vmem:[%s1 + $0x7e8] sm:$0xf]
  %v1351 = vld [vmem:[%s1 + $0x7ec] sm:$0xf]
  %v1352 = vld [vmem:[%s1 + $0x7f0] sm:$0xf]
  %v1353 = vld [vmem:[%s1 + $0x7f4] sm:$0xf]
  %v1354 = vld [vmem:[%s1 + $0x7f8] sm:$0xf]
  %v1355 = vld [vmem:[%s1 + $0x7fc] sm:$0xf]
  %v1356 = vld [vmem:[%s1 + $0x800] sm:$0xf]
  %v1357 = vld [vmem:[%s1 + $0x804] sm:$0xf]
  %v1358 = vld [vmem:[%s1 + $0x808] sm:$0xf]
  %v1359 = vld [vmem:[%s1 + $0x80c] sm:$0xf]
  %v1360 = vld [vmem:[%s1 + $0x810] sm:$0xf]
  %v1361 = vld [vmem:[%s1 + $0x814] sm:$0xf]
  %v1362 = vld [vmem:[%s1 + $0x818] sm:$0xf]
  %v1363 = vld [vmem:[%s1 + $0x81c] sm:$0xf]
  %v1364 = vld [vmem:[%s1 + $0x820] sm:$0xf]
  %v1365 = vld [vmem:[%s1 + $0x824] sm:$0xf]
  %v1366 = vld [vmem:[%s1 + $0x828] sm:$0xf]
  %v1367 = vld [vmem:[%s1 + $0x82c] sm:$0xf]
  %v1368 = vld [vmem:[%s1 + $0x830] sm:$0xf]
  %v1369 = vld [vmem:[%s1 + $0x834] sm:$0xf]
  %v1370 = vld [vmem:[%s1 + $0x838] sm:$0xf]
  %v1371 = vld [vmem:[%s1 + $0x83c] sm:$0xf]
  %v1372 = vld [vmem:[%s1 + $0x840] sm:$0xf]
  %v1373 = vld [vmem:[%s1 + $0x844] sm:$0xf]
  %v1374 = vld [vmem:[%s1 + $0x848] sm:$0xf]
  %v1375 = vld [vmem:[%s1 + $0x84c] sm:$0xf]
  %v1376 = vld [vmem:[%s1 + $0x850] sm:$0xf]
  %v1377 = vld [vmem:[%s1 + $0x854] sm:$0xf]
  %v1378 = vld [vmem:[%s1 + $0x858] sm:$0xf]
  %v1379 = vld [vmem:[%s1 + $0x85c] sm:$0xf]
  %v1380 = vld [vmem:[%s1 + $0x860] sm:$0xf]
  %v1381 = vld [vmem:[%s1 + $0x864] sm:$0xf]
  %v1382 = vld [vmem:[%s1 + $0x868] sm:$0xf]
  %v1383 = vld [vmem:[%s1 + $0x86c] sm:$0xf]
  %v1384 = vld [vmem:[%s1 + $0x870] sm:$0xf]
  %v1385 = vld [vmem:[%s1 + $0x874] sm:$0xf]
  %v1386 = vld [vmem:[%s1 + $0x878] sm:$0xf]
  %v1387 = vld [vmem:[%s1 + $0x87c] sm:$0xf]
  %v1388 = vld [vmem:[%s1 + $0x880] sm:$0xf]
  %v1389 = vld [vmem:[%s1 + $0x884] sm:$0xf]
  %v1390 = vld [vmem:[%s1 + $0x888] sm:$0xf]
  %v1391 = vld [vmem:[%s1 + $0x88c] sm:$0xf]
  %v1392 = vld [vmem:[%s1 + $0x890] sm:$0xf]
  %v1393 = vld [vmem:[%s1 + $0x894] sm:$0xf]
  %v1394 = vld [vmem:[%s1 + $0x898] sm:$0xf]
  %v1395 = vld [vmem:[%s1 + $0x89c] sm:$0xf]
  %v1396 = vld [vmem:[%s1 + $0x8a0] sm:$0xf]
  %v1397 = vld [vmem:[%s1 + $0x8a4] sm:$0xf]
  %v1398 = vld [vmem:[%s1 + $0x8a8] sm:$0xf]
  %v1399 = vld [vmem:[%s1 + $0x8ac] sm:$0xf]
  %v1400 = vld [vmem:[%s1 + $0x8b0] sm:$0xf]
  %v1401 = vld [vmem:[%s1 + $0x8b4] sm:$0xf]
  %v1402 = vld [vmem:[%s1 + $0x8b8] sm:$0xf]
  %v1403 = vld [vmem:[%s1 + $0x8bc] sm:$0xf]
  %v1404 = vld [vmem:[%s1 + $0x8c0] sm:$0xf]
  %v1405 = vld [vmem:[%s1 + $0x8c4] sm:$0xf]
  %v1406 = vld [vmem:[%s1 + $0x8c8] sm:$0xf]
  %v1407 = vld [vmem:[%s1 + $0x8cc] sm:$0xf]
  %v1408 = vld [vmem:[%s1 + $0x8d0] sm:$0xf]
  %v1409 = vld [vmem:[%s1 + $0x8d4] sm:$0xf]
  %v1410 = vld [vmem:[%s1 + $0x8d8] sm:$0xf]
  %v1411 = vld [vmem:[%s1 + $0x8dc] sm:$0xf]
  %v1412 = vld [vmem:[%s1 + $0x8e0] sm:$0xf]
  %v1413 = vld [vmem:[%s1 + $0x8e4] sm:$0xf]
  %v1414 = vld [vmem:[%s1 + $0x8e8] sm:$0xf]
  %v1415 = vld [vmem:[%s1 + $0x8ec] sm:$0xf]
  %v1416 = vld [vmem:[%s1 + $0x8f0] sm:$0xf]
  %v1417 = vld [vmem:[%s1 + $0x8f4] sm:$0xf]
  %v1418 = vld [vmem:[%s1 + $0x8f8] sm:$0xf]
  %v1419 = vld [vmem:[%s1 + $0x8fc] sm:$0xf]
  %v1420 = vld [vmem:[%s1 + $0x900] sm:$0xf]
  %v1421 = vld [vmem:[%s1 + $0x904] sm:$0xf]
  %v1422 = vld [vmem:[%s1 + $0x908] sm:$0xf]
  %v1423 = vld [vmem:[%s1 + $0x90c] sm:$0xf]
  %v1424 = vld [vmem:[%s1 + $0x910] sm:$0xf]
  %v1425 = vld [vmem:[%s1 + $0x914] sm:$0xf]
  %v1426 = vld [vmem:[%s1 + $0x918] sm:$0xf]
  %v1427 = vld [vmem:[%s1 + $0x91c] sm:$0xf]
  %v1428 = vld [vmem:[%s1 + $0x920] sm:$0xf]
  %v1429 = vld [vmem:[%s1 + $0x924] sm:$0xf]
  %v1430 = vld [vmem:[%s1 + $0x928] sm:$0xf]
  %v1431 = vld [vmem:[%s1 + $0x92c] sm:$0xf]
  %v1432 = vld [vmem:[%s1 + $0x930] sm:$0xf]
  %v1433 = vld [vmem:[%s1 + $0x934] sm:$0xf]
  %v1434 = vld [vmem:[%s1 + $0x938] sm:$0xf]
  %v1435 = vld [vmem:[%s1 + $0x93c] sm:$0xf]
  %v1436 = vld [vmem:[%s1 + $0x940] sm:$0xf]
  %v1437 = vld [vmem:[%s1 + $0x944] sm:$0xf]
  %v1438 = vld [vmem:[%s1 + $0x948] sm:$0xf]
  %v1439 = vld [vmem:[%s1 + $0x94c] sm:$0xf]
  %v1440 = vld [vmem:[%s1 + $0x950] sm:$0xf]
  %v1441 = vld [vmem:[%s1 + $0x954] sm:$0xf]
  %v1442 = vld [vmem:[%s1 + $0x958] sm:$0xf]
  %v1443 = vld [vmem:[%s1 + $0x95c] sm:$0xf]
  %v1444 = vld [vmem:[%s1 + $0x960] sm:$0xf]
  %v1445 = vld [vmem:[%s1 + $0x964] sm:$0xf]
  %v1446 = vld [vmem:[%s1 + $0x968] sm:$0xf]
  %v1447 = vld [vmem:[%s1 + $0x96c] sm:$0xf]
  %v1448 = vld [vmem:[%s1 + $0x970] sm:$0xf]
  %v1449 = vld [vmem:[%s1 + $0x974] sm:$0xf]
  %v1450 = vld [vmem:[%s1 + $0x978] sm:$0xf]
  %v1451 = vld [vmem:[%s1 + $0x97c] sm:$0xf]
  %v1452 = vld [vmem:[%s1 + $0x980] sm:$0xf]
  %v1453 = vld [vmem:[%s1 + $0x984] sm:$0xf]
  %v1454 = vld [vmem:[%s1 + $0x988] sm:$0xf]
  %v1455 = vld [vmem:[%s1 + $0x98c] sm:$0xf]
  %v1456 = vld [vmem:[%s1 + $0x990] sm:$0xf]
  %v1457 = vld [vmem:[%s1 + $0x994] sm:$0xf]
  %v1458 = vld [vmem:[%s1 + $0x998] sm:$0xf]
  %v1459 = vld [vmem:[%s1 + $0x99c] sm:$0xf]
  %v1460 = vld [vmem:[%s1 + $0x9a0] sm:$0xf]
  %v1461 = vld [vmem:[%s1 + $0x9a4] sm:$0xf]
  %v1462 = vld [vmem:[%s1 + $0x9a8] sm:$0xf]
  %v1463 = vld [vmem:[%s1 + $0x9ac] sm:$0xf]
  %v1464 = vld [vmem:[%s1 + $0x9b0] sm:$0xf]
  %v1465 = vld [vmem:[%s1 + $0x9b4] sm:$0xf]
  %v1466 = vld [vmem:[%s1 + $0x9b8] sm:$0xf]
  %v1467 = vld [vmem:[%s1 + $0x9bc] sm:$0xf]
  %v1468 = vld [vmem:[%s1 + $0x9c0] sm:$0xf]
  %v1469 = vld [vmem:[%s1 + $0x9c4] sm:$0xf]
  %v1470 = vld [vmem:[%s1 + $0x9c8] sm:$0xf]
  %v1471 = vld [vmem:[%s1 + $0x9cc] sm:$0xf]
  %v1472 = vld [vmem:[%s1 + $0x9d0] sm:$0xf]
  %v1473 = vld [vmem:[%s1 + $0x9d4] sm:$0xf]
  %v1474 = vld [vmem:[%s1 + $0x9d8] sm:$0xf]
  %v1475 = vld [vmem:[%s1 + $0x9dc] sm:$0xf]
  %v1476 = vld [vmem:[%s1 + $0x9e0] sm:$0xf]
  %v1477 = vld [vmem:[%s1 + $0x9e4] sm:$0xf]
  %v1478 = vld [vmem:[%s1 + $0x9e8] sm:$0xf]
  %v1479 = vld [vmem:[%s1 + $0x9ec] sm:$0xf]
  %v1480 = vld [vmem:[%s1 + $0x9f0] sm:$0xf]
  %v1481 = vld [vmem:[%s1 + $0x9f4] sm:$0xf]
  %v1482 = vld [vmem:[%s1 + $0x9f8] sm:$0xf]
  %v1483 = vld [vmem:[%s1 + $0x9fc] sm:$0xf]
  %v1484 = vld [vmem:[%s1 + $0xa00] sm:$0xf]
  %v1485 = vld [vmem:[%s1 + $0xa04] sm:$0xf]
  %v1486 = vld [vmem:[%s1 + $0xa08] sm:$0xf]
  %v1487 = vld [vmem:[%s1 + $0xa0c] sm:$0xf]
  %v1488 = vld [vmem:[%s1 + $0xa10] sm:$0xf]
  %v1489 = vld [vmem:[%s1 + $0xa14] sm:$0xf]
  %v1490 = vld [vmem:[%s1 + $0xa18] sm:$0xf]
  %v1491 = vld [vmem:[%s1 + $0xa1c] sm:$0xf]
  %v1492 = vld [vmem:[%s1 + $0xa20] sm:$0xf]
  %v1493 = vld [vmem:[%s1 + $0xa24] sm:$0xf]
  %v1494 = vld [vmem:[%s1 + $0xa28] sm:$0xf]
  %v1495 = vld [vmem:[%s1 + $0xa2c] sm:$0xf]
  %v1496 = vld [vmem:[%s1 + $0xa30] sm:$0xf]
  %v1497 = vld [vmem:[%s1 + $0xa34] sm:$0xf]
  %v1498 = vld [vmem:[%s1 + $0xa38] sm:$0xf]
  %v1499 = vld [vmem:[%s1 + $0xa3c] sm:$0xf]
  %v1500 = vld [vmem:[%s1 + $0xa40] sm:$0xf]
  %v1501 = vld [vmem:[%s1 + $0xa44] sm:$0xf]
  %v1502 = vld [vmem:[%s1 + $0xa48] sm:$0xf]
  %v1503 = vld [vmem:[%s1 + $0xa4c] sm:$0xf]
  %v1504 = vld [vmem:[%s1 + $0xa50] sm:$0xf]
  %v1505 = vld [vmem:[%s1 + $0xa54] sm:$0xf]
  %v1506 = vld [vmem:[%s1 + $0xa58] sm:$0xf]
  %v1507 = vld [vmem:[%s1 + $0xa5c] sm:$0xf]
  %v1508 = vld [vmem:[%s1 + $0xa60] sm:$0xf]
  %v1509 = vld [vmem:[%s1 + $0xa64] sm:$0xf]
  %v1510 = vld [vmem:[%s1 + $0xa68] sm:$0xf]
  %v1511 = vld [vmem:[%s1 + $0xa6c] sm:$0xf]
  %v1512 = vld [vmem:[%s1 + $0xa70] sm:$0xf]
  %v1513 = vld [vmem:[%s1 + $0xa74] sm:$0xf]
  %v1514 = vld [vmem:[%s1 + $0xa78] sm:$0xf]
  %v1515 = vld [vmem:[%s1 + $0xa7c] sm:$0xf]
  %v1516 = vld [vmem:[%s1 + $0xa80] sm:$0xf]
  %v1517 = vld [vmem:[%s1 + $0xa84] sm:$0xf]
  %v1518 = vld [vmem:[%s1 + $0xa88] sm:$0xf]
  %v1519 = vld [vmem:[%s1 + $0xa8c] sm:$0xf]
  %v1520 = vld [vmem:[%s1 + $0xa90] sm:$0xf]
  %v1521 = vld [vmem:[%s1 + $0xa94] sm:$0xf]
  %v1522 = vld [vmem:[%s1 + $0xa98] sm:$0xf]
  %v1523 = vld [vmem:[%s1 + $0xa9c] sm:$0xf]
  %v1524 = vld [vmem:[%s1 + $0xaa0] sm:$0xf]
  %v1525 = vld [vmem:[%s1 + $0xaa4] sm:$0xf]
  %v1526 = vld [vmem:[%s1 + $0xaa8] sm:$0xf]
  %v1527 = vld [vmem:[%s1 + $0xaac] sm:$0xf]
  %v1528 = vld [vmem:[%s1 + $0xab0] sm:$0xf]
  %v1529 = vld [vmem:[%s1 + $0xab4] sm:$0xf]
  %v1530 = vld [vmem:[%s1 + $0xab8] sm:$0xf]
  %v1531 = vld [vmem:[%s1 + $0xabc] sm:$0xf]
  %v1532 = vld [vmem:[%s1 + $0xac0] sm:$0xf]
  %v1533 = vld [vmem:[%s1 + $0xac4] sm:$0xf]
  %v1534 = vld [vmem:[%s1 + $0xac8] sm:$0xf]
  %v1535 = vld [vmem:[%s1 + $0xacc] sm:$0xf]
  %v1536 = vld [vmem:[%s1 + $0xad0] sm:$0xf]
  %v1537 = vld [vmem:[%s1 + $0xad4] sm:$0xf]
  %v1538 = vld [vmem:[%s1 + $0xad8] sm:$0xf]
  %v1539 = vld [vmem:[%s1 + $0xadc] sm:$0xf]
  %v1540 = vld [vmem:[%s1 + $0xae0] sm:$0xf]
  %v1541 = vld [vmem:[%s1 + $0xae4] sm:$0xf]
  %v1542 = vld [vmem:[%s1 + $0xae8] sm:$0xf]
  %v1543 = vld [vmem:[%s1 + $0xaec] sm:$0xf]
  %v1544 = vld [vmem:[%s1 + $0xaf0] sm:$0xf]
  %v1545 = vld [vmem:[%s1 + $0xaf4] sm:$0xf]
  %v1546 = vld [vmem:[%s1 + $0xaf8] sm:$0xf]
  %v1547 = vld [vmem:[%s1 + $0xafc] sm:$0xf]
  %v1548 = vld [vmem:[%s1 + $0xb00] sm:$0xf]
  %v1549 = vld [vmem:[%s1 + $0xb04] sm:$0xf]
  %v1550 = vld [vmem:[%s1 + $0xb08] sm:$0xf]
  %v1551 = vld [vmem:[%s1 + $0xb0c] sm:$0xf]
  %v1552 = vld [vmem:[%s1 + $0xb10] sm:$0xf]
  %v1553 = vld [vmem:[%s1 + $0xb14] sm:$0xf]
  %v1554 = vld [vmem:[%s1 + $0xb18] sm:$0xf]
  %v1555 = vld [vmem:[%s1 + $0xb1c] sm:$0xf]
  %v1556 = vld [vmem:[%s1 + $0xb20] sm:$0xf]
  %v1557 = vld [vmem:[%s1 + $0xb24] sm:$0xf]
  %v1558 = vld [vmem:[%s1 + $0xb28] sm:$0xf]
  %v1559 = vld [vmem:[%s1 + $0xb2c] sm:$0xf]
  %v1560 = vld [vmem:[%s1 + $0xb30] sm:$0xf]
  %v1561 = vld [vmem:[%s1 + $0xb34] sm:$0xf]
  %v1562 = vld [vmem:[%s1 + $0xb38] sm:$0xf]
  %v1563 = vld [vmem:[%s1 + $0xb3c] sm:$0xf]
  %v1564 = vld [vmem:[%s1 + $0xb40] sm:$0xf]
  %v1565 = vld [vmem:[%s1 + $0xb44] sm:$0xf]
  %v1566 = vld [vmem:[%s1 + $0xb48] sm:$0xf]
  %v1567 = vld [vmem:[%s1 + $0xb4c] sm:$0xf]
  %v1568 = vld [vmem:[%s1 + $0xb50] sm:$0xf]
  %v1569 = vld [vmem:[%s1 + $0xb54] sm:$0xf]
  %v1570 = vld [vmem:[%s1 + $0xb58] sm:$0xf]
  %v1571 = vld [vmem:[%s1 + $0xb5c] sm:$0xf]
  %v1572 = vld [vmem:[%s1 + $0xb60] sm:$0xf]
  %v1573 = vld [vmem:[%s1 + $0xb64] sm:$0xf]
  %v1574 = vld [vmem:[%s1 + $0xb68] sm:$0xf]
  %v1575 = vld [vmem:[%s1 + $0xb6c] sm:$0xf]
  %v1576 = vld [vmem:[%s1 + $0xb70] sm:$0xf]
  %v1577 = vld [vmem:[%s1 + $0xb74] sm:$0xf]
  %v1578 = vld [vmem:[%s1 + $0xb78] sm:$0xf]
  %v1579 = vld [vmem:[%s1 + $0xb7c] sm:$0xf]
  %v1580 = vld [vmem:[%s1 + $0xb80] sm:$0xf]
  %v1581 = vld [vmem:[%s1 + $0xb84] sm:$0xf]
  %v1582 = vld [vmem:[%s1 + $0xb88] sm:$0xf]
  %v1583 = vld [vmem:[%s1 + $0xb8c] sm:$0xf]
  %v1584 = vld [vmem:[%s1 + $0xb90] sm:$0xf]
  %v1585 = vld [vmem:[%s1 + $0xb94] sm:$0xf]
  %v1586 = vld [vmem:[%s1 + $0xb98] sm:$0xf]
  %v1587 = vld [vmem:[%s1 + $0xb9c] sm:$0xf]
  %v1588 = vld [vmem:[%s1 + $0xba0] sm:$0xf]
  %v1589 = vld [vmem:[%s1 + $0xba4] sm:$0xf]
  %v1590 = vld [vmem:[%s1 + $0xba8] sm:$0xf]
  %v1591 = vld [vmem:[%s1 + $0xbac] sm:$0xf]
  %v1592 = vld [vmem:[%s1 + $0xbb0] sm:$0xf]
  %v1593 = vld [vmem:[%s1 + $0xbb4] sm:$0xf]
  %v1594 = vld [vmem:[%s1 + $0xbb8] sm:$0xf]
  %v1595 = vld [vmem:[%s1 + $0xbbc] sm:$0xf]
  %v1596 = vld [vmem:[%s1 + $0xbc0] sm:$0xf]
  %v1597 = vld [vmem:[%s1 + $0xbc4] sm:$0xf]
  %v1598 = vld [vmem:[%s1 + $0xbc8] sm:$0xf]
  %v1599 = vld [vmem:[%s1 + $0xbcc] sm:$0xf]
  %v1600 = vld [vmem:[%s1 + $0xbd0] sm:$0xf]
  %v1601 = vld [vmem:[%s1 + $0xbd4] sm:$0xf]
  %v1602 = vld [vmem:[%s1 + $0xbd8] sm:$0xf]
  %v1603 = vld [vmem:[%s1 + $0xbdc] sm:$0xf]
  %v1604 = vld [vmem:[%s1 + $0xbe0] sm:$0xf]
  %v1605 = vld [vmem:[%s1 + $0xbe4] sm:$0xf]
  %v1606 = vld [vmem:[%s1 + $0xbe8] sm:$0xf]
  %v1607 = vld [vmem:[%s1 + $0xbec] sm:$0xf]
  %v1608 = vld [vmem:[%s1 + $0xbf0] sm:$0xf]
  %v1609 = vld [vmem:[%s1 + $0xbf4] sm:$0xf]
  %v1610 = vld [vmem:[%s1 + $0xbf8] sm:$0xf]
  %v1611 = vld [vmem:[%s1 + $0xbfc] sm:$0xf]
  %v1612 = vld [vmem:[%s1 + $0xc00] sm:$0xf]
  %v1613 = vld [vmem:[%s1 + $0xc04] sm:$0xf]
  %v1614 = vld [vmem:[%s1 + $0xc08] sm:$0xf]
  %v1615 = vld [vmem:[%s1 + $0xc0c] sm:$0xf]
  %v1616 = vld [vmem:[%s1 + $0xc10] sm:$0xf]
  %v1617 = vld [vmem:[%s1 + $0xc14] sm:$0xf]
  %v1618 = vld [vmem:[%s1 + $0xc18] sm:$0xf]
  %v1619 = vld [vmem:[%s1 + $0xc1c] sm:$0xf]
  %v1620 = vld [vmem:[%s1 + $0xc20] sm:$0xf]
  %v1621 = vld [vmem:[%s1 + $0xc24] sm:$0xf]
  %v1622 = vld [vmem:[%s1 + $0xc28] sm:$0xf]
  %v1623 = vld [vmem:[%s1 + $0xc2c] sm:$0xf]
  %v1624 = vld [vmem:[%s1 + $0xc30] sm:$0xf]
  %v1625 = vld [vmem:[%s1 + $0xc34] sm:$0xf]
  %v1626 = vld [vmem:[%s1 + $0xc38] sm:$0xf]
  %v1627 = vld [vmem:[%s1 + $0xc3c] sm:$0xf]
  %v1628 = vld [vmem:[%s1 + $0xc40] sm:$0xf]
  %v1629 = vld [vmem:[%s1 + $0xc44] sm:$0xf]
  %v1630 = vld [vmem:[%s1 + $0xc48] sm:$0xf]
  %v1631 = vld [vmem:[%s1 + $0xc4c] sm:$0xf]
  %v1632 = vld [vmem:[%s1 + $0xc50] sm:$0xf]
  %v1633 = vld [vmem:[%s1 + $0xc54] sm:$0xf]
  %v1634 = vld [vmem:[%s1 + $0xc58] sm:$0xf]
  %v1635 = vld [vmem:[%s1 + $0xc5c] sm:$0xf]
  %v1636 = vld [vmem:[%s1 + $0xc60] sm:$0xf]
  %v1637 = vld [vmem:[%s1 + $0xc64] sm:$0xf]
  %v1638 = vld [vmem:[%s1 + $0xc68] sm:$0xf]
  %v1639 = vld [vmem:[%s1 + $0xc6c] sm:$0xf]
  %v1640 = vld [vmem:[%s1 + $0xc70] sm:$0xf]
  %v1641 = vld [vmem:[%s1 + $0xc74] sm:$0xf]
  %v1642 = vld [vmem:[%s1 + $0xc78] sm:$0xf]
  %v1643 = vld [vmem:[%s1 + $0xc7c] sm:$0xf]
  %v1644 = vld [vmem:[%s1 + $0xc80] sm:$0xf]
  %v1645 = vld [vmem:[%s1 + $0xc84] sm:$0xf]
  %v1646 = vld [vmem:[%s1 + $0xc88] sm:$0xf]
  %v1647 = vld [vmem:[%s1 + $0xc8c] sm:$0xf]
  %v1648 = vld [vmem:[%s1 + $0xc90] sm:$0xf]
  %v1649 = vld [vmem:[%s1 + $0xc94] sm:$0xf]
  %v1650 = vld [vmem:[%s1 + $0xc98] sm:$0xf]
  %v1651 = vld [vmem:[%s1 + $0xc9c] sm:$0xf]
  %v1652 = vld [vmem:[%s1 + $0xca0] sm:$0xf]
  %v1653 = vld [vmem:[%s1 + $0xca4] sm:$0xf]
  %v1654 = vld [vmem:[%s1 + $0xca8] sm:$0xf]
  %v1655 = vld [vmem:[%s1 + $0xcac] sm:$0xf]
  %v1656 = vld [vmem:[%s1 + $0xcb0] sm:$0xf]
  %v1657 = vld [vmem:[%s1 + $0xcb4] sm:$0xf]
  %v1658 = vld [vmem:[%s1 + $0xcb8] sm:$0xf]
  %v1659 = vld [vmem:[%s1 + $0xcbc] sm:$0xf]
  %v1660 = vld [vmem:[%s1 + $0xcc0] sm:$0xf]
  %v1661 = vld [vmem:[%s1 + $0xcc4] sm:$0xf]
  %v1662 = vld [vmem:[%s1 + $0xcc8] sm:$0xf]
  %v1663 = vld [vmem:[%s1 + $0xccc] sm:$0xf]
  %v1664 = vld [vmem:[%s1 + $0xcd0] sm:$0xf]
  %v1665 = vld [vmem:[%s1 + $0xcd4] sm:$0xf]
  %v1666 = vld [vmem:[%s1 + $0xcd8] sm:$0xf]
  %v1667 = vld [vmem:[%s1 + $0xcdc] sm:$0xf]
  %v1668 = vld [vmem:[%s1 + $0xce0] sm:$0xf]
  %v1669 = vld [vmem:[%s1 + $0xce4] sm:$0xf]
  %v1670 = vld [vmem:[%s1 + $0xce8] sm:$0xf]
  %v1671 = vld [vmem:[%s1 + $0xcec] sm:$0xf]
  %v1672 = vld [vmem:[%s1 + $0xcf0] sm:$0xf]
  %v1673 = vld [vmem:[%s1 + $0xcf4] sm:$0xf]
  %v1674 = vld [vmem:[%s1 + $0xcf8] sm:$0xf]
  %v1675 = vld [vmem:[%s1 + $0xcfc] sm:$0xf]
  %v1676 = vld [vmem:[%s1 + $0xd00] sm:$0xf]
  %v1677 = vld [vmem:[%s1 + $0xd04] sm:$0xf]
  %v1678 = vld [vmem:[%s1 + $0xd08] sm:$0xf]
  %v1679 = vld [vmem:[%s1 + $0xd0c] sm:$0xf]
  %v1680 = vld [vmem:[%s1 + $0xd10] sm:$0xf]
  %v1681 = vld [vmem:[%s1 + $0xd14] sm:$0xf]
  %v1682 = vld [vmem:[%s1 + $0xd18] sm:$0xf]
  %v1683 = vld [vmem:[%s1 + $0xd1c] sm:$0xf]
  %v1684 = vld [vmem:[%s1 + $0xd20] sm:$0xf]
  %v1685 = vld [vmem:[%s1 + $0xd24] sm:$0xf]
  %v1686 = vld [vmem:[%s1 + $0xd28] sm:$0xf]
  %v1687 = vld [vmem:[%s1 + $0xd2c] sm:$0xf]
  %v1688 = vld [vmem:[%s1 + $0xd30] sm:$0xf]
  %v1689 = vld [vmem:[%s1 + $0xd34] sm:$0xf]
  %v1690 = vld [vmem:[%s1 + $0xd38] sm:$0xf]
  %v1691 = vld [vmem:[%s1 + $0xd3c] sm:$0xf]
  %v1692 = vld [vmem:[%s1 + $0xd40] sm:$0xf]
  %v1693 = vld [vmem:[%s1 + $0xd44] sm:$0xf]
  %v1694 = vld [vmem:[%s1 + $0xd48] sm:$0xf]
  %v1695 = vld [vmem:[%s1 + $0xd4c] sm:$0xf]
  %v1696 = vld [vmem:[%s1 + $0xd50] sm:$0xf]
  %v1697 = vld [vmem:[%s1 + $0xd54] sm:$0xf]
  %v1698 = vld [vmem:[%s1 + $0xd58] sm:$0xf]
  %v1699 = vld [vmem:[%s1 + $0xd5c] sm:$0xf]
  %v1700 = vld [vmem:[%s1 + $0xd60] sm:$0xf]
  %v1701 = vld [vmem:[%s1 + $0xd64] sm:$0xf]
  %v1702 = vld [vmem:[%s1 + $0xd68] sm:$0xf]
  %v1703 = vld [vmem:[%s1 + $0xd6c] sm:$0xf]
  %v1704 = vld [vmem:[%s1 + $0xd70] sm:$0xf]
  %v1705 = vld [vmem:[%s1 + $0xd74] sm:$0xf]
  %v1706 = vld [vmem:[%s1 + $0xd78] sm:$0xf]
  %v1707 = vld [vmem:[%s1 + $0xd7c] sm:$0xf]
  %v1708 = vld [vmem:[%s1 + $0xd80] sm:$0xf]
  %v1709 = vld [vmem:[%s1 + $0xd84] sm:$0xf]
  %v1710 = vld [vmem:[%s1 + $0xd88] sm:$0xf]
  %v1711 = vld [vmem:[%s1 + $0xd8c] sm:$0xf]
  %v1712 = vld [vmem:[%s1 + $0xd90] sm:$0xf]
  %v1713 = vld [vmem:[%s1 + $0xd94] sm:$0xf]
  %v1714 = vld [vmem:[%s1 + $0xd98] sm:$0xf]
  %v1715 = vld [vmem:[%s1 + $0xd9c] sm:$0xf]
  %v1716 = vld [vmem:[%s1 + $0xda0] sm:$0xf]
  %v1717 = vld [vmem:[%s1 + $0xda4] sm:$0xf]
  %v1718 = vld [vmem:[%s1 + $0xda8] sm:$0xf]
  %v1719 = vld [vmem:[%s1 + $0xdac] sm:$0xf]
  %v1720 = vld [vmem:[%s1 + $0xdb0] sm:$0xf]
  %v1721 = vld [vmem:[%s1 + $0xdb4] sm:$0xf]
  %v1722 = vld [vmem:[%s1 + $0xdb8] sm:$0xf]
  %v1723 = vld [vmem:[%s1 + $0xdbc] sm:$0xf]
  %v1724 = vld [vmem:[%s1 + $0xdc0] sm:$0xf]
  %v1725 = vld [vmem:[%s1 + $0xdc4] sm:$0xf]
  %v1726 = vld [vmem:[%s1 + $0xdc8] sm:$0xf]
  %v1727 = vld [vmem:[%s1 + $0xdcc] sm:$0xf]
  %v1728 = vld [vmem:[%s1 + $0xdd0] sm:$0xf]
  %v1729 = vld [vmem:[%s1 + $0xdd4] sm:$0xf]
  %v1730 = vld [vmem:[%s1 + $0xdd8] sm:$0xf]
  %v1731 = vld [vmem:[%s1 + $0xddc] sm:$0xf]
  %v1732 = vld [vmem:[%s1 + $0xde0] sm:$0xf]
  %v1733 = vld [vmem:[%s1 + $0xde4] sm:$0xf]
  %v1734 = vld [vmem:[%s1 + $0xde8] sm:$0xf]
  %v1735 = vld [vmem:[%s1 + $0xdec] sm:$0xf]
  %v1736 = vld [vmem:[%s1 + $0xdf0] sm:$0xf]
  %v1737 = vld [vmem:[%s1 + $0xdf4] sm:$0xf]
  %v1738 = vld [vmem:[%s1 + $0xdf8] sm:$0xf]
  %v1739 = vld [vmem:[%s1 + $0xdfc] sm:$0xf]
  %v1740 = vld [vmem:[%s1 + $0xe00] sm:$0xf]
  %v1741 = vld [vmem:[%s1 + $0xe04] sm:$0xf]
  %v1742 = vld [vmem:[%s1 + $0xe08] sm:$0xf]
  %v1743 = vld [vmem:[%s1 + $0xe0c] sm:$0xf]
  %v1744 = vld [vmem:[%s1 + $0xe10] sm:$0xf]
  %v1745 = vld [vmem:[%s1 + $0xe14] sm:$0xf]
  %v1746 = vld [vmem:[%s1 + $0xe18] sm:$0xf]
  %v1747 = vld [vmem:[%s1 + $0xe1c] sm:$0xf]
  %v1748 = vld [vmem:[%s1 + $0xe20] sm:$0xf]
  %v1749 = vld [vmem:[%s1 + $0xe24] sm:$0xf]
  %v1750 = vld [vmem:[%s1 + $0xe28] sm:$0xf]
  %v1751 = vld [vmem:[%s1 + $0xe2c] sm:$0xf]
  %v1752 = vld [vmem:[%s1 + $0xe30] sm:$0xf]
  %v1753 = vld [vmem:[%s1 + $0xe34] sm:$0xf]
  %v1754 = vld [vmem:[%s1 + $0xe38] sm:$0xf]
  %v1755 = vld [vmem:[%s1 + $0xe3c] sm:$0xf]
  %v1756 = vld [vmem:[%s1 + $0xe40] sm:$0xf]
  %v1757 = vld [vmem:[%s1 + $0xe44] sm:$0xf]
  %v1758 = vld [vmem:[%s1 + $0xe48] sm:$0xf]
  %v1759 = vld [vmem:[%s1 + $0xe4c] sm:$0xf]
  %v1760 = vld [vmem:[%s1 + $0xe50] sm:$0xf]
  %v1761 = vld [vmem:[%s1 + $0xe54] sm:$0xf]
  %v1762 = vld [vmem:[%s1 + $0xe58] sm:$0xf]
  %v1763 = vld [vmem:[%s1 + $0xe5c] sm:$0xf]
  %v1764 = vld [vmem:[%s1 + $0xe60] sm:$0xf]
  %v1765 = vld [vmem:[%s1 + $0xe64] sm:$0xf]
  %v1766 = vld [vmem:[%s1 + $0xe68] sm:$0xf]
  %v1767 = vld [vmem:[%s1 + $0xe6c] sm:$0xf]
  %v1768 = vld [vmem:[%s1 + $0xe70] sm:$0xf]
  %v1769 = vld [vmem:[%s1 + $0xe74] sm:$0xf]
  %v1770 = vld [vmem:[%s1 + $0xe78] sm:$0xf]
  %v1771 = vld [vmem:[%s1 + $0xe7c] sm:$0xf]
  %v1772 = vld [vmem:[%s1 + $0xe80] sm:$0xf]
  %v1773 = vld [vmem:[%s1 + $0xe84] sm:$0xf]
  %v1774 = vld [vmem:[%s1 + $0xe88] sm:$0xf]
  %v1775 = vld [vmem:[%s1 + $0xe8c] sm:$0xf]
  %v1776 = vld [vmem:[%s1 + $0xe90] sm:$0xf]
  %v1777 = vld [vmem:[%s1 + $0xe94] sm:$0xf]
  %v1778 = vld [vmem:[%s1 + $0xe98] sm:$0xf]
  %v1779 = vld [vmem:[%s1 + $0xe9c] sm:$0xf]
  %v1780 = vld [vmem:[%s1 + $0xea0] sm:$0xf]
  %v1781 = vld [vmem:[%s1 + $0xea4] sm:$0xf]
  %v1782 = vld [vmem:[%s1 + $0xea8] sm:$0xf]
  %v1783 = vld [vmem:[%s1 + $0xeac] sm:$0xf]
  %v1784 = vld [vmem:[%s1 + $0xeb0] sm:$0xf]
  %v1785 = vld [vmem:[%s1 + $0xeb4] sm:$0xf]
  %v1786 = vld [vmem:[%s1 + $0xeb8] sm:$0xf]
  %v1787 = vld [vmem:[%s1 + $0xebc] sm:$0xf]
  %v1788 = vld [vmem:[%s1 + $0xec0] sm:$0xf]
  %v1789 = vld [vmem:[%s1 + $0xec4] sm:$0xf]
  %v1790 = vld [vmem:[%s1 + $0xec8] sm:$0xf]
  %v1791 = vld [vmem:[%s1 + $0xecc] sm:$0xf]
  %v1792 = vld [vmem:[%s1 + $0xed0] sm:$0xf]
  %v1793 = vld [vmem:[%s1 + $0xed4] sm:$0xf]
  %v1794 = vld [vmem:[%s1 + $0xed8] sm:$0xf]
  %v1795 = vld [vmem:[%s1 + $0xedc] sm:$0xf]
  %v1796 = vld [vmem:[%s1 + $0xee0] sm:$0xf]
  %v1797 = vld [vmem:[%s1 + $0xee4] sm:$0xf]
  %v1798 = vld [vmem:[%s1 + $0xee8] sm:$0xf]
  %v1799 = vld [vmem:[%s1 + $0xeec] sm:$0xf]
  %v1800 = vld [vmem:[%s1 + $0xef0] sm:$0xf]
  %v1801 = vld [vmem:[%s1 + $0xef4] sm:$0xf]
  %v1802 = vld [vmem:[%s1 + $0xef8] sm:$0xf]
  %v1803 = vld [vmem:[%s1 + $0xefc] sm:$0xf]
  %v1804 = vld [vmem:[%s1 + $0xf00] sm:$0xf]
  %v1805 = vld [vmem:[%s1 + $0xf04] sm:$0xf]
  %v1806 = vld [vmem:[%s1 + $0xf08] sm:$0xf]
  %v1807 = vld [vmem:[%s1 + $0xf0c] sm:$0xf]
  %v1808 = vld [vmem:[%s1 + $0xf10] sm:$0xf]
  %v1809 = vld [vmem:[%s1 + $0xf14] sm:$0xf]
  %v1810 = vld [vmem:[%s1 + $0xf18] sm:$0xf]
  %v1811 = vld [vmem:[%s1 + $0xf1c] sm:$0xf]
  %v1812 = vld [vmem:[%s1 + $0xf20] sm:$0xf]
  %v1813 = vld [vmem:[%s1 + $0xf24] sm:$0xf]
  %v1814 = vld [vmem:[%s1 + $0xf28] sm:$0xf]
  %v1815 = vld [vmem:[%s1 + $0xf2c] sm:$0xf]
  %v1816 = vld [vmem:[%s1 + $0xf30] sm:$0xf]
  %v1817 = vld [vmem:[%s1 + $0xf34] sm:$0xf]
  %v1818 = vld [vmem:[%s1 + $0xf38] sm:$0xf]
  %v1819 = vld [vmem:[%s1 + $0xf3c] sm:$0xf]
  %v1820 = vld [vmem:[%s1 + $0xf40] sm:$0xf]
  %v1821 = vld [vmem:[%s1 + $0xf44] sm:$0xf]
  %v1822 = vld [vmem:[%s1 + $0xf48] sm:$0xf]
  %v1823 = vld [vmem:[%s1 + $0xf4c] sm:$0xf]
  %v1824 = vld [vmem:[%s1 + $0xf50] sm:$0xf]
  %v1825 = vld [vmem:[%s1 + $0xf54] sm:$0xf]
  %v1826 = vld [vmem:[%s1 + $0xf58] sm:$0xf]
  %v1827 = vld [vmem:[%s1 + $0xf5c] sm:$0xf]
  %v1828 = vld [vmem:[%s1 + $0xf60] sm:$0xf]
  %v1829 = vld [vmem:[%s1 + $0xf64] sm:$0xf]
  %v1830 = vld [vmem:[%s1 + $0xf68] sm:$0xf]
  %v1831 = vld [vmem:[%s1 + $0xf6c] sm:$0xf]
  %v1832 = vld [vmem:[%s1 + $0xf70] sm:$0xf]
  %v1833 = vld [vmem:[%s1 + $0xf74] sm:$0xf]
  %v1834 = vld [vmem:[%s1 + $0xf78] sm:$0xf]
  %v1835 = vld [vmem:[%s1 + $0xf7c] sm:$0xf]
  %v1836 = vld [vmem:[%s1 + $0xf80] sm:$0xf]
  %v1837 = vld [vmem:[%s1 + $0xf84] sm:$0xf]
  %v1838 = vld [vmem:[%s1 + $0xf88] sm:$0xf]
  %v1839 = vld [vmem:[%s1 + $0xf8c] sm:$0xf]
  %v1840 = vld [vmem:[%s1 + $0xf90] sm:$0xf]
  %v1841 = vld [vmem:[%s1 + $0xf94] sm:$0xf]
  %v1842 = vld [vmem:[%s1 + $0xf98] sm:$0xf]
  %v1843 = vld [vmem:[%s1 + $0xf9c] sm:$0xf]
  %v1844 = vld [vmem:[%s1 + $0xfa0] sm:$0xf]
  %v1845 = vld [vmem:[%s1 + $0xfa4] sm:$0xf]
  %v1846 = vld [vmem:[%s1 + $0xfa8] sm:$0xf]
  %v1847 = vld [vmem:[%s1 + $0xfac] sm:$0xf]
  %v1848 = vld [vmem:[%s1 + $0xfb0] sm:$0xf]
  %v1849 = vld [vmem:[%s1 + $0xfb4] sm:$0xf]
  %v1850 = vld [vmem:[%s1 + $0xfb8] sm:$0xf]
  %v1851 = vld [vmem:[%s1 + $0xfbc] sm:$0xf]
  %v1852 = vld [vmem:[%s1 + $0xfc0] sm:$0xf]
  %v1853 = vld [vmem:[%s1 + $0xfc4] sm:$0xf]
  %v1854 = vld [vmem:[%s1 + $0xfc8] sm:$0xf]
  %v1855 = vld [vmem:[%s1 + $0xfcc] sm:$0xf]
  %v1856 = vld [vmem:[%s1 + $0xfd0] sm:$0xf]
  %v1857 = vld [vmem:[%s1 + $0xfd4] sm:$0xf]
  %v1858 = vld [vmem:[%s1 + $0xfd8] sm:$0xf]
  %v1859 = vld [vmem:[%s1 + $0xfdc] sm:$0xf]
  %v1860 = vld [vmem:[%s1 + $0xfe0] sm:$0xf]
  %v1861 = vld [vmem:[%s1 + $0xfe4] sm:$0xf]
  %v1862 = vld [vmem:[%s1 + $0xfe8] sm:$0xf]
  %v1863 = vld [vmem:[%s1 + $0xfec] sm:$0xf]
  %v1864 = vld [vmem:[%s1 + $0xff0] sm:$0xf]
  %v1865 = vld [vmem:[%s1 + $0xff4] sm:$0xf]
  %v1866 = vld [vmem:[%s1 + $0xff8] sm:$0xf]
  %v1867 = vld [vmem:[%s1 + $0xffc] sm:$0xf]
  %v2892 = vunpack.c.l.b16 %v844
  %v2893 = vunpack.c.l.b16 %v845
  %v2894 = vunpack.c.l.b16 %v846
  %v2895 = vunpack.c.l.b16 %v847
  %v2896 = vunpack.c.l.b16 %v848
  %v2897 = vunpack.c.l.b16 %v849
  %v2898 = vunpack.c.l.b16 %v850
  %v2899 = vunpack.c.l.b16 %v851
  %v2900 = vunpack.c.l.b16 %v852
  %v2901 = vunpack.c.l.b16 %v853
  %v2902 = vunpack.c.l.b16 %v854
  %v2903 = vunpack.c.l.b16 %v855
  %v2904 = vunpack.c.l.b16 %v856
  %v2905 = vunpack.c.l.b16 %v857
  %v2906 = vunpack.c.l.b16 %v858
  %v2907 = vunpack.c.l.b16 %v859
  %v2908 = vunpack.c.l.b16 %v860
  %v2909 = vunpack.c.l.b16 %v861
  %v2910 = vunpack.c.l.b16 %v862
  %v2911 = vunpack.c.l.b16 %v863
  %v2912 = vunpack.c.l.b16 %v864
  %v2913 = vunpack.c.l.b16 %v865
  %v2914 = vunpack.c.l.b16 %v866
  %v2915 = vunpack.c.l.b16 %v867
  %v2916 = vunpack.c.l.b16 %v868
  %v2917 = vunpack.c.l.b16 %v869
  %v2918 = vunpack.c.l.b16 %v870
  %v2919 = vunpack.c.l.b16 %v871
  %v2920 = vunpack.c.l.b16 %v872
  %v2921 = vunpack.c.l.b16 %v873
  %v2922 = vunpack.c.l.b16 %v874
  %v2923 = vunpack.c.l.b16 %v875
  %v2924 = vunpack.c.l.b16 %v876
  %v2925 = vunpack.c.l.b16 %v877
  %v2926 = vunpack.c.l.b16 %v878
  %v2927 = vunpack.c.l.b16 %v879
  %v2928 = vunpack.c.l.b16 %v880
  %v2929 = vunpack.c.l.b16 %v881
  %v2930 = vunpack.c.l.b16 %v882
  %v2931 = vunpack.c.l.b16 %v883
  %v2932 = vunpack.c.l.b16 %v884
  %v2933 = vunpack.c.l.b16 %v885
  %v2934 = vunpack.c.l.b16 %v886
  %v2935 = vunpack.c.l.b16 %v887
  %v2936 = vunpack.c.l.b16 %v888
  %v2937 = vunpack.c.l.b16 %v889
  %v2938 = vunpack.c.l.b16 %v890
  %v2939 = vunpack.c.l.b16 %v891
  %v2940 = vunpack.c.l.b16 %v892
  %v2941 = vunpack.c.l.b16 %v893
  %v2942 = vunpack.c.l.b16 %v894
  %v2943 = vunpack.c.l.b16 %v895
  %v2944 = vunpack.c.l.b16 %v896
  %v2945 = vunpack.c.l.b16 %v897
  %v2946 = vunpack.c.l.b16 %v898
  %v2947 = vunpack.c.l.b16 %v899
  %v2948 = vunpack.c.l.b16 %v900
  %v2949 = vunpack.c.l.b16 %v901
  %v2950 = vunpack.c.l.b16 %v902
  %v2951 = vunpack.c.l.b16 %v903
  %v2952 = vunpack.c.l.b16 %v904
  %v2953 = vunpack.c.l.b16 %v905
  %v2954 = vunpack.c.l.b16 %v906
  %v2955 = vunpack.c.l.b16 %v907
  %v2956 = vunpack.c.l.b16 %v908
  %v2957 = vunpack.c.l.b16 %v909
  %v2958 = vunpack.c.l.b16 %v910
  %v2959 = vunpack.c.l.b16 %v911
  %v2960 = vunpack.c.l.b16 %v912
  %v2961 = vunpack.c.l.b16 %v913
  %v2962 = vunpack.c.l.b16 %v914
  %v2963 = vunpack.c.l.b16 %v915
  %v2964 = vunpack.c.l.b16 %v916
  %v2965 = vunpack.c.l.b16 %v917
  %v2966 = vunpack.c.l.b16 %v918
  %v2967 = vunpack.c.l.b16 %v919
  %v2968 = vunpack.c.l.b16 %v920
  %v2969 = vunpack.c.l.b16 %v921
  %v2970 = vunpack.c.l.b16 %v922
  %v2971 = vunpack.c.l.b16 %v923
  %v2972 = vunpack.c.l.b16 %v924
  %v2973 = vunpack.c.l.b16 %v925
  %v2974 = vunpack.c.l.b16 %v926
  %v2975 = vunpack.c.l.b16 %v927
  %v2976 = vunpack.c.l.b16 %v928
  %v2977 = vunpack.c.l.b16 %v929
  %v2978 = vunpack.c.l.b16 %v930
  %v2979 = vunpack.c.l.b16 %v931
  %v2980 = vunpack.c.l.b16 %v932
  %v2981 = vunpack.c.l.b16 %v933
  %v2982 = vunpack.c.l.b16 %v934
  %v2983 = vunpack.c.l.b16 %v935
  %v2984 = vunpack.c.l.b16 %v936
  %v2985 = vunpack.c.l.b16 %v937
  %v2986 = vunpack.c.l.b16 %v938
  %v2987 = vunpack.c.l.b16 %v939
  %v2988 = vunpack.c.l.b16 %v940
  %v2989 = vunpack.c.l.b16 %v941
  %v2990 = vunpack.c.l.b16 %v942
  %v2991 = vunpack.c.l.b16 %v943
  %v2992 = vunpack.c.l.b16 %v944
  %v2993 = vunpack.c.l.b16 %v945
  %v2994 = vunpack.c.l.b16 %v946
  %v2995 = vunpack.c.l.b16 %v947
  %v2996 = vunpack.c.l.b16 %v948
  %v2997 = vunpack.c.l.b16 %v949
  %v2998 = vunpack.c.l.b16 %v950
  %v2999 = vunpack.c.l.b16 %v951
  %v3000 = vunpack.c.l.b16 %v952
  %v3001 = vunpack.c.l.b16 %v953
  %v3002 = vunpack.c.l.b16 %v954
  %v3003 = vunpack.c.l.b16 %v955
  %v3004 = vunpack.c.l.b16 %v956
  %v3005 = vunpack.c.l.b16 %v957
  %v3006 = vunpack.c.l.b16 %v958
  %v3007 = vunpack.c.l.b16 %v959
  %v3008 = vunpack.c.l.b16 %v960
  %v3009 = vunpack.c.l.b16 %v961
  %v3010 = vunpack.c.l.b16 %v962
  %v3011 = vunpack.c.l.b16 %v963
  %v3012 = vunpack.c.l.b16 %v964
  %v3013 = vunpack.c.l.b16 %v965
  %v3014 = vunpack.c.l.b16 %v966
  %v3015 = vunpack.c.l.b16 %v967
  %v3016 = vunpack.c.l.b16 %v968
  %v3017 = vunpack.c.l.b16 %v969
  %v3018 = vunpack.c.l.b16 %v970
  %v3019 = vunpack.c.l.b16 %v971
  %v3020 = vunpack.c.l.b16 %v972
  %v3021 = vunpack.c.l.b16 %v973
  %v3022 = vunpack.c.l.b16 %v974
  %v3023 = vunpack.c.l.b16 %v975
  %v3024 = vunpack.c.l.b16 %v976
  %v3025 = vunpack.c.l.b16 %v977
  %v3026 = vunpack.c.l.b16 %v978
  %v3027 = vunpack.c.l.b16 %v979
  %v3028 = vunpack.c.l.b16 %v980
  %v3029 = vunpack.c.l.b16 %v981
  %v3030 = vunpack.c.l.b16 %v982
  %v3031 = vunpack.c.l.b16 %v983
  %v3032 = vunpack.c.l.b16 %v984
  %v3033 = vunpack.c.l.b16 %v985
  %v3034 = vunpack.c.l.b16 %v986
  %v3035 = vunpack.c.l.b16 %v987
  %v3036 = vunpack.c.l.b16 %v988
  %v3037 = vunpack.c.l.b16 %v989
  %v3038 = vunpack.c.l.b16 %v990
  %v3039 = vunpack.c.l.b16 %v991
  %v3040 = vunpack.c.l.b16 %v992
  %v3041 = vunpack.c.l.b16 %v993
  %v3042 = vunpack.c.l.b16 %v994
  %v3043 = vunpack.c.l.b16 %v995
  %v3044 = vunpack.c.l.b16 %v996
  %v3045 = vunpack.c.l.b16 %v997
  %v3046 = vunpack.c.l.b16 %v998
  %v3047 = vunpack.c.l.b16 %v999
  %v3048 = vunpack.c.l.b16 %v1000
  %v3049 = vunpack.c.l.b16 %v1001
  %v3050 = vunpack.c.l.b16 %v1002
  %v3051 = vunpack.c.l.b16 %v1003
  %v3052 = vunpack.c.l.b16 %v1004
  %v3053 = vunpack.c.l.b16 %v1005
  %v3054 = vunpack.c.l.b16 %v1006
  %v3055 = vunpack.c.l.b16 %v1007
  %v3056 = vunpack.c.l.b16 %v1008
  %v3057 = vunpack.c.l.b16 %v1009
  %v3058 = vunpack.c.l.b16 %v1010
  %v3059 = vunpack.c.l.b16 %v1011
  %v3060 = vunpack.c.l.b16 %v1012
  %v3061 = vunpack.c.l.b16 %v1013
  %v3062 = vunpack.c.l.b16 %v1014
  %v3063 = vunpack.c.l.b16 %v1015
  %v3064 = vunpack.c.l.b16 %v1016
  %v3065 = vunpack.c.l.b16 %v1017
  %v3066 = vunpack.c.l.b16 %v1018
  %v3067 = vunpack.c.l.b16 %v1019
  %v3068 = vunpack.c.l.b16 %v1020
  %v3069 = vunpack.c.l.b16 %v1021
  %v3070 = vunpack.c.l.b16 %v1022
  %v3071 = vunpack.c.l.b16 %v1023
  %v3072 = vunpack.c.l.b16 %v1024
  %v3073 = vunpack.c.l.b16 %v1025
  %v3074 = vunpack.c.l.b16 %v1026
  %v3075 = vunpack.c.l.b16 %v1027
  %v3076 = vunpack.c.l.b16 %v1028
  %v3077 = vunpack.c.l.b16 %v1029
  %v3078 = vunpack.c.l.b16 %v1030
  %v3079 = vunpack.c.l.b16 %v1031
  %v3080 = vunpack.c.l.b16 %v1032
  %v3081 = vunpack.c.l.b16 %v1033
  %v3082 = vunpack.c.l.b16 %v1034
  %v3083 = vunpack.c.l.b16 %v1035
  %v3084 = vunpack.c.l.b16 %v1036
  %v3085 = vunpack.c.l.b16 %v1037
  %v3086 = vunpack.c.l.b16 %v1038
  %v3087 = vunpack.c.l.b16 %v1039
  %v3088 = vunpack.c.l.b16 %v1040
  %v3089 = vunpack.c.l.b16 %v1041
  %v3090 = vunpack.c.l.b16 %v1042
  %v3091 = vunpack.c.l.b16 %v1043
  %v3092 = vunpack.c.l.b16 %v1044
  %v3093 = vunpack.c.l.b16 %v1045
  %v3094 = vunpack.c.l.b16 %v1046
  %v3095 = vunpack.c.l.b16 %v1047
  %v3096 = vunpack.c.l.b16 %v1048
  %v3097 = vunpack.c.l.b16 %v1049
  %v3098 = vunpack.c.l.b16 %v1050
  %v3099 = vunpack.c.l.b16 %v1051
  %v3100 = vunpack.c.l.b16 %v1052
  %v3101 = vunpack.c.l.b16 %v1053
  %v3102 = vunpack.c.l.b16 %v1054
  %v3103 = vunpack.c.l.b16 %v1055
  %v3104 = vunpack.c.l.b16 %v1056
  %v3105 = vunpack.c.l.b16 %v1057
  %v3106 = vunpack.c.l.b16 %v1058
  %v3107 = vunpack.c.l.b16 %v1059
  %v3108 = vunpack.c.l.b16 %v1060
  %v3109 = vunpack.c.l.b16 %v1061
  %v3110 = vunpack.c.l.b16 %v1062
  %v3111 = vunpack.c.l.b16 %v1063
  %v3112 = vunpack.c.l.b16 %v1064
  %v3113 = vunpack.c.l.b16 %v1065
  %v3114 = vunpack.c.l.b16 %v1066
  %v3115 = vunpack.c.l.b16 %v1067
  %v3116 = vunpack.c.l.b16 %v1068
  %v3117 = vunpack.c.l.b16 %v1069
  %v3118 = vunpack.c.l.b16 %v1070
  %v3119 = vunpack.c.l.b16 %v1071
  %v3120 = vunpack.c.l.b16 %v1072
  %v3121 = vunpack.c.l.b16 %v1073
  %v3122 = vunpack.c.l.b16 %v1074
  %v3123 = vunpack.c.l.b16 %v1075
  %v3124 = vunpack.c.l.b16 %v1076
  %v3125 = vunpack.c.l.b16 %v1077
  %v3126 = vunpack.c.l.b16 %v1078
  %v3127 = vunpack.c.l.b16 %v1079
  %v3128 = vunpack.c.l.b16 %v1080
  %v3129 = vunpack.c.l.b16 %v1081
  %v3130 = vunpack.c.l.b16 %v1082
  %v3131 = vunpack.c.l.b16 %v1083
  %v3132 = vunpack.c.l.b16 %v1084
  %v3133 = vunpack.c.l.b16 %v1085
  %v3134 = vunpack.c.l.b16 %v1086
  %v3135 = vunpack.c.l.b16 %v1087
  %v3136 = vunpack.c.l.b16 %v1088
  %v3137 = vunpack.c.l.b16 %v1089
  %v3138 = vunpack.c.l.b16 %v1090
  %v3139 = vunpack.c.l.b16 %v1091
  %v3140 = vunpack.c.l.b16 %v1092
  %v3141 = vunpack.c.l.b16 %v1093
  %v3142 = vunpack.c.l.b16 %v1094
  %v3143 = vunpack.c.l.b16 %v1095
  %v3144 = vunpack.c.l.b16 %v1096
  %v3145 = vunpack.c.l.b16 %v1097
  %v3146 = vunpack.c.l.b16 %v1098
  %v3147 = vunpack.c.l.b16 %v1099
  %v3148 = vunpack.c.l.b16 %v1100
  %v3149 = vunpack.c.l.b16 %v1101
  %v3150 = vunpack.c.l.b16 %v1102
  %v3151 = vunpack.c.l.b16 %v1103
  %v3152 = vunpack.c.l.b16 %v1104
  %v3153 = vunpack.c.l.b16 %v1105
  %v3154 = vunpack.c.l.b16 %v1106
  %v3155 = vunpack.c.l.b16 %v1107
  %v3156 = vunpack.c.l.b16 %v1108
  %v3157 = vunpack.c.l.b16 %v1109
  %v3158 = vunpack.c.l.b16 %v1110
  %v3159 = vunpack.c.l.b16 %v1111
  %v3160 = vunpack.c.l.b16 %v1112
  %v3161 = vunpack.c.l.b16 %v1113
  %v3162 = vunpack.c.l.b16 %v1114
  %v3163 = vunpack.c.l.b16 %v1115
  %v3164 = vunpack.c.l.b16 %v1116
  %v3165 = vunpack.c.l.b16 %v1117
  %v3166 = vunpack.c.l.b16 %v1118
  %v3167 = vunpack.c.l.b16 %v1119
  %v3168 = vunpack.c.l.b16 %v1120
  %v3169 = vunpack.c.l.b16 %v1121
  %v3170 = vunpack.c.l.b16 %v1122
  %v3171 = vunpack.c.l.b16 %v1123
  %v3172 = vunpack.c.l.b16 %v1124
  %v3173 = vunpack.c.l.b16 %v1125
  %v3174 = vunpack.c.l.b16 %v1126
  %v3175 = vunpack.c.l.b16 %v1127
  %v3176 = vunpack.c.l.b16 %v1128
  %v3177 = vunpack.c.l.b16 %v1129
  %v3178 = vunpack.c.l.b16 %v1130
  %v3179 = vunpack.c.l.b16 %v1131
  %v3180 = vunpack.c.l.b16 %v1132
  %v3181 = vunpack.c.l.b16 %v1133
  %v3182 = vunpack.c.l.b16 %v1134
  %v3183 = vunpack.c.l.b16 %v1135
  %v3184 = vunpack.c.l.b16 %v1136
  %v3185 = vunpack.c.l.b16 %v1137
  %v3186 = vunpack.c.l.b16 %v1138
  %v3187 = vunpack.c.l.b16 %v1139
  %v3188 = vunpack.c.l.b16 %v1140
  %v3189 = vunpack.c.l.b16 %v1141
  %v3190 = vunpack.c.l.b16 %v1142
  %v3191 = vunpack.c.l.b16 %v1143
  %v3192 = vunpack.c.l.b16 %v1144
  %v3193 = vunpack.c.l.b16 %v1145
  %v3194 = vunpack.c.l.b16 %v1146
  %v3195 = vunpack.c.l.b16 %v1147
  %v3196 = vunpack.c.l.b16 %v1148
  %v3197 = vunpack.c.l.b16 %v1149
  %v3198 = vunpack.c.l.b16 %v1150
  %v3199 = vunpack.c.l.b16 %v1151
  %v3200 = vunpack.c.l.b16 %v1152
  %v3201 = vunpack.c.l.b16 %v1153
  %v3202 = vunpack.c.l.b16 %v1154
  %v3203 = vunpack.c.l.b16 %v1155
  %v3204 = vunpack.c.l.b16 %v1156
  %v3205 = vunpack.c.l.b16 %v1157
  %v3206 = vunpack.c.l.b16 %v1158
  %v3207 = vunpack.c.l.b16 %v1159
  %v3208 = vunpack.c.l.b16 %v1160
  %v3209 = vunpack.c.l.b16 %v1161
  %v3210 = vunpack.c.l.b16 %v1162
  %v3211 = vunpack.c.l.b16 %v1163
  %v3212 = vunpack.c.l.b16 %v1164
  %v3213 = vunpack.c.l.b16 %v1165
  %v3214 = vunpack.c.l.b16 %v1166
  %v3215 = vunpack.c.l.b16 %v1167
  %v3216 = vunpack.c.l.b16 %v1168
  %v3217 = vunpack.c.l.b16 %v1169
  %v3218 = vunpack.c.l.b16 %v1170
  %v3219 = vunpack.c.l.b16 %v1171
  %v3220 = vunpack.c.l.b16 %v1172
  %v3221 = vunpack.c.l.b16 %v1173
  %v3222 = vunpack.c.l.b16 %v1174
  %v3223 = vunpack.c.l.b16 %v1175
  %v3224 = vunpack.c.l.b16 %v1176
  %v3225 = vunpack.c.l.b16 %v1177
  %v3226 = vunpack.c.l.b16 %v1178
  %v3227 = vunpack.c.l.b16 %v1179
  %v3228 = vunpack.c.l.b16 %v1180
  %v3229 = vunpack.c.l.b16 %v1181
  %v3230 = vunpack.c.l.b16 %v1182
  %v3231 = vunpack.c.l.b16 %v1183
  %v3232 = vunpack.c.l.b16 %v1184
  %v3233 = vunpack.c.l.b16 %v1185
  %v3234 = vunpack.c.l.b16 %v1186
  %v3235 = vunpack.c.l.b16 %v1187
  %v3236 = vunpack.c.l.b16 %v1188
  %v3237 = vunpack.c.l.b16 %v1189
  %v3238 = vunpack.c.l.b16 %v1190
  %v3239 = vunpack.c.l.b16 %v1191
  %v3240 = vunpack.c.l.b16 %v1192
  %v3241 = vunpack.c.l.b16 %v1193
  %v3242 = vunpack.c.l.b16 %v1194
  %v3243 = vunpack.c.l.b16 %v1195
  %v3244 = vunpack.c.l.b16 %v1196
  %v3245 = vunpack.c.l.b16 %v1197
  %v3246 = vunpack.c.l.b16 %v1198
  %v3247 = vunpack.c.l.b16 %v1199
  %v3248 = vunpack.c.l.b16 %v1200
  %v3249 = vunpack.c.l.b16 %v1201
  %v3250 = vunpack.c.l.b16 %v1202
  %v3251 = vunpack.c.l.b16 %v1203
  %v3252 = vunpack.c.l.b16 %v1204
  %v3253 = vunpack.c.l.b16 %v1205
  %v3254 = vunpack.c.l.b16 %v1206
  %v3255 = vunpack.c.l.b16 %v1207
  %v3256 = vunpack.c.l.b16 %v1208
  %v3257 = vunpack.c.l.b16 %v1209
  %v3258 = vunpack.c.l.b16 %v1210
  %v3259 = vunpack.c.l.b16 %v1211
  %v3260 = vunpack.c.l.b16 %v1212
  %v3261 = vunpack.c.l.b16 %v1213
  %v3262 = vunpack.c.l.b16 %v1214
  %v3263 = vunpack.c.l.b16 %v1215
  %v3264 = vunpack.c.l.b16 %v1216
  %v3265 = vunpack.c.l.b16 %v1217
  %v3266 = vunpack.c.l.b16 %v1218
  %v3267 = vunpack.c.l.b16 %v1219
  %v3268 = vunpack.c.l.b16 %v1220
  %v3269 = vunpack.c.l.b16 %v1221
  %v3270 = vunpack.c.l.b16 %v1222
  %v3271 = vunpack.c.l.b16 %v1223
  %v3272 = vunpack.c.l.b16 %v1224
  %v3273 = vunpack.c.l.b16 %v1225
  %v3274 = vunpack.c.l.b16 %v1226
  %v3275 = vunpack.c.l.b16 %v1227
  %v3276 = vunpack.c.l.b16 %v1228
  %v3277 = vunpack.c.l.b16 %v1229
  %v3278 = vunpack.c.l.b16 %v1230
  %v3279 = vunpack.c.l.b16 %v1231
  %v3280 = vunpack.c.l.b16 %v1232
  %v3281 = vunpack.c.l.b16 %v1233
  %v3282 = vunpack.c.l.b16 %v1234
  %v3283 = vunpack.c.l.b16 %v1235
  %v3284 = vunpack.c.l.b16 %v1236
  %v3285 = vunpack.c.l.b16 %v1237
  %v3286 = vunpack.c.l.b16 %v1238
  %v3287 = vunpack.c.l.b16 %v1239
  %v3288 = vunpack.c.l.b16 %v1240
  %v3289 = vunpack.c.l.b16 %v1241
  %v3290 = vunpack.c.l.b16 %v1242
  %v3291 = vunpack.c.l.b16 %v1243
  %v3292 = vunpack.c.l.b16 %v1244
  %v3293 = vunpack.c.l.b16 %v1245
  %v3294 = vunpack.c.l.b16 %v1246
  %v3295 = vunpack.c.l.b16 %v1247
  %v3296 = vunpack.c.l.b16 %v1248
  %v3297 = vunpack.c.l.b16 %v1249
  %v3298 = vunpack.c.l.b16 %v1250
  %v3299 = vunpack.c.l.b16 %v1251
  %v3300 = vunpack.c.l.b16 %v1252
  %v3301 = vunpack.c.l.b16 %v1253
  %v3302 = vunpack.c.l.b16 %v1254
  %v3303 = vunpack.c.l.b16 %v1255
  %v3304 = vunpack.c.l.b16 %v1256
  %v3305 = vunpack.c.l.b16 %v1257
  %v3306 = vunpack.c.l.b16 %v1258
  %v3307 = vunpack.c.l.b16 %v1259
  %v3308 = vunpack.c.l.b16 %v1260
  %v3309 = vunpack.c.l.b16 %v1261
  %v3310 = vunpack.c.l.b16 %v1262
  %v3311 = vunpack.c.l.b16 %v1263
  %v3312 = vunpack.c.l.b16 %v1264
  %v3313 = vunpack.c.l.b16 %v1265
  %v3314 = vunpack.c.l.b16 %v1266
  %v3315 = vunpack.c.l.b16 %v1267
  %v3316 = vunpack.c.l.b16 %v1268
  %v3317 = vunpack.c.l.b16 %v1269
  %v3318 = vunpack.c.l.b16 %v1270
  %v3319 = vunpack.c.l.b16 %v1271
  %v3320 = vunpack.c.l.b16 %v1272
  %v3321 = vunpack.c.l.b16 %v1273
  %v3322 = vunpack.c.l.b16 %v1274
  %v3323 = vunpack.c.l.b16 %v1275
  %v3324 = vunpack.c.l.b16 %v1276
  %v3325 = vunpack.c.l.b16 %v1277
  %v3326 = vunpack.c.l.b16 %v1278
  %v3327 = vunpack.c.l.b16 %v1279
  %v3328 = vunpack.c.l.b16 %v1280
  %v3329 = vunpack.c.l.b16 %v1281
  %v3330 = vunpack.c.l.b16 %v1282
  %v3331 = vunpack.c.l.b16 %v1283
  %v3332 = vunpack.c.l.b16 %v1284
  %v3333 = vunpack.c.l.b16 %v1285
  %v3334 = vunpack.c.l.b16 %v1286
  %v3335 = vunpack.c.l.b16 %v1287
  %v3336 = vunpack.c.l.b16 %v1288
  %v3337 = vunpack.c.l.b16 %v1289
  %v3338 = vunpack.c.l.b16 %v1290
  %v3339 = vunpack.c.l.b16 %v1291
  %v3340 = vunpack.c.l.b16 %v1292
  %v3341 = vunpack.c.l.b16 %v1293
  %v3342 = vunpack.c.l.b16 %v1294
  %v3343 = vunpack.c.l.b16 %v1295
  %v3344 = vunpack.c.l.b16 %v1296
  %v3345 = vunpack.c.l.b16 %v1297
  %v3346 = vunpack.c.l.b16 %v1298
  %v3347 = vunpack.c.l.b16 %v1299
  %v3348 = vunpack.c.l.b16 %v1300
  %v3349 = vunpack.c.l.b16 %v1301
  %v3350 = vunpack.c.l.b16 %v1302
  %v3351 = vunpack.c.l.b16 %v1303
  %v3352 = vunpack.c.l.b16 %v1304
  %v3353 = vunpack.c.l.b16 %v1305
  %v3354 = vunpack.c.l.b16 %v1306
  %v3355 = vunpack.c.l.b16 %v1307
  %v3356 = vunpack.c.l.b16 %v1308
  %v3357 = vunpack.c.l.b16 %v1309
  %v3358 = vunpack.c.l.b16 %v1310
  %v3359 = vunpack.c.l.b16 %v1311
  %v3360 = vunpack.c.l.b16 %v1312
  %v3361 = vunpack.c.l.b16 %v1313
  %v3362 = vunpack.c.l.b16 %v1314
  %v3363 = vunpack.c.l.b16 %v1315
  %v3364 = vunpack.c.l.b16 %v1316
  %v3365 = vunpack.c.l.b16 %v1317
  %v3366 = vunpack.c.l.b16 %v1318
  %v3367 = vunpack.c.l.b16 %v1319
  %v3368 = vunpack.c.l.b16 %v1320
  %v3369 = vunpack.c.l.b16 %v1321
  %v3370 = vunpack.c.l.b16 %v1322
  %v3371 = vunpack.c.l.b16 %v1323
  %v3372 = vunpack.c.l.b16 %v1324
  %v3373 = vunpack.c.l.b16 %v1325
  %v3374 = vunpack.c.l.b16 %v1326
  %v3375 = vunpack.c.l.b16 %v1327
  %v3376 = vunpack.c.l.b16 %v1328
  %v3377 = vunpack.c.l.b16 %v1329
  %v3378 = vunpack.c.l.b16 %v1330
  %v3379 = vunpack.c.l.b16 %v1331
  %v3380 = vunpack.c.l.b16 %v1332
  %v3381 = vunpack.c.l.b16 %v1333
  %v3382 = vunpack.c.l.b16 %v1334
  %v3383 = vunpack.c.l.b16 %v1335
  %v3384 = vunpack.c.l.b16 %v1336
  %v3385 = vunpack.c.l.b16 %v1337
  %v3386 = vunpack.c.l.b16 %v1338
  %v3387 = vunpack.c.l.b16 %v1339
  %v3388 = vunpack.c.l.b16 %v1340
  %v3389 = vunpack.c.l.b16 %v1341
  %v3390 = vunpack.c.l.b16 %v1342
  %v3391 = vunpack.c.l.b16 %v1343
  %v3392 = vunpack.c.l.b16 %v1344
  %v3393 = vunpack.c.l.b16 %v1345
  %v3394 = vunpack.c.l.b16 %v1346
  %v3395 = vunpack.c.l.b16 %v1347
  %v3396 = vunpack.c.l.b16 %v1348
  %v3397 = vunpack.c.l.b16 %v1349
  %v3398 = vunpack.c.l.b16 %v1350
  %v3399 = vunpack.c.l.b16 %v1351
  %v3400 = vunpack.c.l.b16 %v1352
  %v3401 = vunpack.c.l.b16 %v1353
  %v3402 = vunpack.c.l.b16 %v1354
  %v3403 = vunpack.c.l.b16 %v1355
  %v3404 = vunpack.c.l.b16 %v1356
  %v3405 = vunpack.c.l.b16 %v1357
  %v3406 = vunpack.c.l.b16 %v1358
  %v3407 = vunpack.c.l.b16 %v1359
  %v3408 = vunpack.c.l.b16 %v1360
  %v3409 = vunpack.c.l.b16 %v1361
  %v3410 = vunpack.c.l.b16 %v1362
  %v3411 = vunpack.c.l.b16 %v1363
  %v3412 = vunpack.c.l.b16 %v1364
  %v3413 = vunpack.c.l.b16 %v1365
  %v3414 = vunpack.c.l.b16 %v1366
  %v3415 = vunpack.c.l.b16 %v1367
  %v3416 = vunpack.c.l.b16 %v1368
  %v3417 = vunpack.c.l.b16 %v1369
  %v3418 = vunpack.c.l.b16 %v1370
  %v3419 = vunpack.c.l.b16 %v1371
  %v3420 = vunpack.c.l.b16 %v1372
  %v3421 = vunpack.c.l.b16 %v1373
  %v3422 = vunpack.c.l.b16 %v1374
  %v3423 = vunpack.c.l.b16 %v1375
  %v3424 = vunpack.c.l.b16 %v1376
  %v3425 = vunpack.c.l.b16 %v1377
  %v3426 = vunpack.c.l.b16 %v1378
  %v3427 = vunpack.c.l.b16 %v1379
  %v3428 = vunpack.c.l.b16 %v1380
  %v3429 = vunpack.c.l.b16 %v1381
  %v3430 = vunpack.c.l.b16 %v1382
  %v3431 = vunpack.c.l.b16 %v1383
  %v3432 = vunpack.c.l.b16 %v1384
  %v3433 = vunpack.c.l.b16 %v1385
  %v3434 = vunpack.c.l.b16 %v1386
  %v3435 = vunpack.c.l.b16 %v1387
  %v3436 = vunpack.c.l.b16 %v1388
  %v3437 = vunpack.c.l.b16 %v1389
  %v3438 = vunpack.c.l.b16 %v1390
  %v3439 = vunpack.c.l.b16 %v1391
  %v3440 = vunpack.c.l.b16 %v1392
  %v3441 = vunpack.c.l.b16 %v1393
  %v3442 = vunpack.c.l.b16 %v1394
  %v3443 = vunpack.c.l.b16 %v1395
  %v3444 = vunpack.c.l.b16 %v1396
  %v3445 = vunpack.c.l.b16 %v1397
  %v3446 = vunpack.c.l.b16 %v1398
  %v3447 = vunpack.c.l.b16 %v1399
  %v3448 = vunpack.c.l.b16 %v1400
  %v3449 = vunpack.c.l.b16 %v1401
  %v3450 = vunpack.c.l.b16 %v1402
  %v3451 = vunpack.c.l.b16 %v1403
  %v3452 = vunpack.c.l.b16 %v1404
  %v3453 = vunpack.c.l.b16 %v1405
  %v3454 = vunpack.c.l.b16 %v1406
  %v3455 = vunpack.c.l.b16 %v1407
  %v3456 = vunpack.c.l.b16 %v1408
  %v3457 = vunpack.c.l.b16 %v1409
  %v3458 = vunpack.c.l.b16 %v1410
  %v3459 = vunpack.c.l.b16 %v1411
  %v3460 = vunpack.c.l.b16 %v1412
  %v3461 = vunpack.c.l.b16 %v1413
  %v3462 = vunpack.c.l.b16 %v1414
  %v3463 = vunpack.c.l.b16 %v1415
  %v3464 = vunpack.c.l.b16 %v1416
  %v3465 = vunpack.c.l.b16 %v1417
  %v3466 = vunpack.c.l.b16 %v1418
  %v3467 = vunpack.c.l.b16 %v1419
  %v3468 = vunpack.c.l.b16 %v1420
  %v3469 = vunpack.c.l.b16 %v1421
  %v3470 = vunpack.c.l.b16 %v1422
  %v3471 = vunpack.c.l.b16 %v1423
  %v3472 = vunpack.c.l.b16 %v1424
  %v3473 = vunpack.c.l.b16 %v1425
  %v3474 = vunpack.c.l.b16 %v1426
  %v3475 = vunpack.c.l.b16 %v1427
  %v3476 = vunpack.c.l.b16 %v1428
  %v3477 = vunpack.c.l.b16 %v1429
  %v3478 = vunpack.c.l.b16 %v1430
  %v3479 = vunpack.c.l.b16 %v1431
  %v3480 = vunpack.c.l.b16 %v1432
  %v3481 = vunpack.c.l.b16 %v1433
  %v3482 = vunpack.c.l.b16 %v1434
  %v3483 = vunpack.c.l.b16 %v1435
  %v3484 = vunpack.c.l.b16 %v1436
  %v3485 = vunpack.c.l.b16 %v1437
  %v3486 = vunpack.c.l.b16 %v1438
  %v3487 = vunpack.c.l.b16 %v1439
  %v3488 = vunpack.c.l.b16 %v1440
  %v3489 = vunpack.c.l.b16 %v1441
  %v3490 = vunpack.c.l.b16 %v1442
  %v3491 = vunpack.c.l.b16 %v1443
  %v3492 = vunpack.c.l.b16 %v1444
  %v3493 = vunpack.c.l.b16 %v1445
  %v3494 = vunpack.c.l.b16 %v1446
  %v3495 = vunpack.c.l.b16 %v1447
  %v3496 = vunpack.c.l.b16 %v1448
  %v3497 = vunpack.c.l.b16 %v1449
  %v3498 = vunpack.c.l.b16 %v1450
  %v3499 = vunpack.c.l.b16 %v1451
  %v3500 = vunpack.c.l.b16 %v1452
  %v3501 = vunpack.c.l.b16 %v1453
  %v3502 = vunpack.c.l.b16 %v1454
  %v3503 = vunpack.c.l.b16 %v1455
  %v3504 = vunpack.c.l.b16 %v1456
  %v3505 = vunpack.c.l.b16 %v1457
  %v3506 = vunpack.c.l.b16 %v1458
  %v3507 = vunpack.c.l.b16 %v1459
  %v3508 = vunpack.c.l.b16 %v1460
  %v3509 = vunpack.c.l.b16 %v1461
  %v3510 = vunpack.c.l.b16 %v1462
  %v3511 = vunpack.c.l.b16 %v1463
  %v3512 = vunpack.c.l.b16 %v1464
  %v3513 = vunpack.c.l.b16 %v1465
  %v3514 = vunpack.c.l.b16 %v1466
  %v3515 = vunpack.c.l.b16 %v1467
  %v3516 = vunpack.c.l.b16 %v1468
  %v3517 = vunpack.c.l.b16 %v1469
  %v3518 = vunpack.c.l.b16 %v1470
  %v3519 = vunpack.c.l.b16 %v1471
  %v3520 = vunpack.c.l.b16 %v1472
  %v3521 = vunpack.c.l.b16 %v1473
  %v3522 = vunpack.c.l.b16 %v1474
  %v3523 = vunpack.c.l.b16 %v1475
  %v3524 = vunpack.c.l.b16 %v1476
  %v3525 = vunpack.c.l.b16 %v1477
  %v3526 = vunpack.c.l.b16 %v1478
  %v3527 = vunpack.c.l.b16 %v1479
  %v3528 = vunpack.c.l.b16 %v1480
  %v3529 = vunpack.c.l.b16 %v1481
  %v3530 = vunpack.c.l.b16 %v1482
  %v3531 = vunpack.c.l.b16 %v1483
  %v3532 = vunpack.c.l.b16 %v1484
  %v3533 = vunpack.c.l.b16 %v1485
  %v3534 = vunpack.c.l.b16 %v1486
  %v3535 = vunpack.c.l.b16 %v1487
  %v3536 = vunpack.c.l.b16 %v1488
  %v3537 = vunpack.c.l.b16 %v1489
  %v3538 = vunpack.c.l.b16 %v1490
  %v3539 = vunpack.c.l.b16 %v1491
  %v3540 = vunpack.c.l.b16 %v1492
  %v3541 = vunpack.c.l.b16 %v1493
  %v3542 = vunpack.c.l.b16 %v1494
  %v3543 = vunpack.c.l.b16 %v1495
  %v3544 = vunpack.c.l.b16 %v1496
  %v3545 = vunpack.c.l.b16 %v1497
  %v3546 = vunpack.c.l.b16 %v1498
  %v3547 = vunpack.c.l.b16 %v1499
  %v3548 = vunpack.c.l.b16 %v1500
  %v3549 = vunpack.c.l.b16 %v1501
  %v3550 = vunpack.c.l.b16 %v1502
  %v3551 = vunpack.c.l.b16 %v1503
  %v3552 = vunpack.c.l.b16 %v1504
  %v3553 = vunpack.c.l.b16 %v1505
  %v3554 = vunpack.c.l.b16 %v1506
  %v3555 = vunpack.c.l.b16 %v1507
  %v3556 = vunpack.c.l.b16 %v1508
  %v3557 = vunpack.c.l.b16 %v1509
  %v3558 = vunpack.c.l.b16 %v1510
  %v3559 = vunpack.c.l.b16 %v1511
  %v3560 = vunpack.c.l.b16 %v1512
  %v3561 = vunpack.c.l.b16 %v1513
  %v3562 = vunpack.c.l.b16 %v1514
  %v3563 = vunpack.c.l.b16 %v1515
  %v3564 = vunpack.c.l.b16 %v1516
  %v3565 = vunpack.c.l.b16 %v1517
  %v3566 = vunpack.c.l.b16 %v1518
  %v3567 = vunpack.c.l.b16 %v1519
  %v3568 = vunpack.c.l.b16 %v1520
  %v3569 = vunpack.c.l.b16 %v1521
  %v3570 = vunpack.c.l.b16 %v1522
  %v3571 = vunpack.c.l.b16 %v1523
  %v3572 = vunpack.c.l.b16 %v1524
  %v3573 = vunpack.c.l.b16 %v1525
  %v3574 = vunpack.c.l.b16 %v1526
  %v3575 = vunpack.c.l.b16 %v1527
  %v3576 = vunpack.c.l.b16 %v1528
  %v3577 = vunpack.c.l.b16 %v1529
  %v3578 = vunpack.c.l.b16 %v1530
  %v3579 = vunpack.c.l.b16 %v1531
  %v3580 = vunpack.c.l.b16 %v1532
  %v3581 = vunpack.c.l.b16 %v1533
  %v3582 = vunpack.c.l.b16 %v1534
  %v3583 = vunpack.c.l.b16 %v1535
  %v3584 = vunpack.c.l.b16 %v1536
  %v3585 = vunpack.c.l.b16 %v1537
  %v3586 = vunpack.c.l.b16 %v1538
  %v3587 = vunpack.c.l.b16 %v1539
  %v3588 = vunpack.c.l.b16 %v1540
  %v3589 = vunpack.c.l.b16 %v1541
  %v3590 = vunpack.c.l.b16 %v1542
  %v3591 = vunpack.c.l.b16 %v1543
  %v3592 = vunpack.c.l.b16 %v1544
  %v3593 = vunpack.c.l.b16 %v1545
  %v3594 = vunpack.c.l.b16 %v1546
  %v3595 = vunpack.c.l.b16 %v1547
  %v3596 = vunpack.c.l.b16 %v1548
  %v3597 = vunpack.c.l.b16 %v1549
  %v3598 = vunpack.c.l.b16 %v1550
  %v3599 = vunpack.c.l.b16 %v1551
  %v3600 = vunpack.c.l.b16 %v1552
  %v3601 = vunpack.c.l.b16 %v1553
  %v3602 = vunpack.c.l.b16 %v1554
  %v3603 = vunpack.c.l.b16 %v1555
  %v3604 = vunpack.c.l.b16 %v1556
  %v3605 = vunpack.c.l.b16 %v1557
  %v3606 = vunpack.c.l.b16 %v1558
  %v3607 = vunpack.c.l.b16 %v1559
  %v3608 = vunpack.c.l.b16 %v1560
  %v3609 = vunpack.c.l.b16 %v1561
  %v3610 = vunpack.c.l.b16 %v1562
  %v3611 = vunpack.c.l.b16 %v1563
  %v3612 = vunpack.c.l.b16 %v1564
  %v3613 = vunpack.c.l.b16 %v1565
  %v3614 = vunpack.c.l.b16 %v1566
  %v3615 = vunpack.c.l.b16 %v1567
  %v3616 = vunpack.c.l.b16 %v1568
  %v3617 = vunpack.c.l.b16 %v1569
  %v3618 = vunpack.c.l.b16 %v1570
  %v3619 = vunpack.c.l.b16 %v1571
  %v3620 = vunpack.c.l.b16 %v1572
  %v3621 = vunpack.c.l.b16 %v1573
  %v3622 = vunpack.c.l.b16 %v1574
  %v3623 = vunpack.c.l.b16 %v1575
  %v3624 = vunpack.c.l.b16 %v1576
  %v3625 = vunpack.c.l.b16 %v1577
  %v3626 = vunpack.c.l.b16 %v1578
  %v3627 = vunpack.c.l.b16 %v1579
  %v3628 = vunpack.c.l.b16 %v1580
  %v3629 = vunpack.c.l.b16 %v1581
  %v3630 = vunpack.c.l.b16 %v1582
  %v3631 = vunpack.c.l.b16 %v1583
  %v3632 = vunpack.c.l.b16 %v1584
  %v3633 = vunpack.c.l.b16 %v1585
  %v3634 = vunpack.c.l.b16 %v1586
  %v3635 = vunpack.c.l.b16 %v1587
  %v3636 = vunpack.c.l.b16 %v1588
  %v3637 = vunpack.c.l.b16 %v1589
  %v3638 = vunpack.c.l.b16 %v1590
  %v3639 = vunpack.c.l.b16 %v1591
  %v3640 = vunpack.c.l.b16 %v1592
  %v3641 = vunpack.c.l.b16 %v1593
  %v3642 = vunpack.c.l.b16 %v1594
  %v3643 = vunpack.c.l.b16 %v1595
  %v3644 = vunpack.c.l.b16 %v1596
  %v3645 = vunpack.c.l.b16 %v1597
  %v3646 = vunpack.c.l.b16 %v1598
  %v3647 = vunpack.c.l.b16 %v1599
  %v3648 = vunpack.c.l.b16 %v1600
  %v3649 = vunpack.c.l.b16 %v1601
  %v3650 = vunpack.c.l.b16 %v1602
  %v3651 = vunpack.c.l.b16 %v1603
  %v3652 = vunpack.c.l.b16 %v1604
  %v3653 = vunpack.c.l.b16 %v1605
  %v3654 = vunpack.c.l.b16 %v1606
  %v3655 = vunpack.c.l.b16 %v1607
  %v3656 = vunpack.c.l.b16 %v1608
  %v3657 = vunpack.c.l.b16 %v1609
  %v3658 = vunpack.c.l.b16 %v1610
  %v3659 = vunpack.c.l.b16 %v1611
  %v3660 = vunpack.c.l.b16 %v1612
  %v3661 = vunpack.c.l.b16 %v1613
  %v3662 = vunpack.c.l.b16 %v1614
  %v3663 = vunpack.c.l.b16 %v1615
  %v3664 = vunpack.c.l.b16 %v1616
  %v3665 = vunpack.c.l.b16 %v1617
  %v3666 = vunpack.c.l.b16 %v1618
  %v3667 = vunpack.c.l.b16 %v1619
  %v3668 = vunpack.c.l.b16 %v1620
  %v3669 = vunpack.c.l.b16 %v1621
  %v3670 = vunpack.c.l.b16 %v1622
  %v3671 = vunpack.c.l.b16 %v1623
  %v3672 = vunpack.c.l.b16 %v1624
  %v3673 = vunpack.c.l.b16 %v1625
  %v3674 = vunpack.c.l.b16 %v1626
  %v3675 = vunpack.c.l.b16 %v1627
  %v3676 = vunpack.c.l.b16 %v1628
  %v3677 = vunpack.c.l.b16 %v1629
  %v3678 = vunpack.c.l.b16 %v1630
  %v3679 = vunpack.c.l.b16 %v1631
  %v3680 = vunpack.c.l.b16 %v1632
  %v3681 = vunpack.c.l.b16 %v1633
  %v3682 = vunpack.c.l.b16 %v1634
  %v3683 = vunpack.c.l.b16 %v1635
  %v3684 = vunpack.c.l.b16 %v1636
  %v3685 = vunpack.c.l.b16 %v1637
  %v3686 = vunpack.c.l.b16 %v1638
  %v3687 = vunpack.c.l.b16 %v1639
  %v3688 = vunpack.c.l.b16 %v1640
  %v3689 = vunpack.c.l.b16 %v1641
  %v3690 = vunpack.c.l.b16 %v1642
  %v3691 = vunpack.c.l.b16 %v1643
  %v3692 = vunpack.c.l.b16 %v1644
  %v3693 = vunpack.c.l.b16 %v1645
  %v3694 = vunpack.c.l.b16 %v1646
  %v3695 = vunpack.c.l.b16 %v1647
  %v3696 = vunpack.c.l.b16 %v1648
  %v3697 = vunpack.c.l.b16 %v1649
  %v3698 = vunpack.c.l.b16 %v1650
  %v3699 = vunpack.c.l.b16 %v1651
  %v3700 = vunpack.c.l.b16 %v1652
  %v3701 = vunpack.c.l.b16 %v1653
  %v3702 = vunpack.c.l.b16 %v1654
  %v3703 = vunpack.c.l.b16 %v1655
  %v3704 = vunpack.c.l.b16 %v1656
  %v3705 = vunpack.c.l.b16 %v1657
  %v3706 = vunpack.c.l.b16 %v1658
  %v3707 = vunpack.c.l.b16 %v1659
  %v3708 = vunpack.c.l.b16 %v1660
  %v3709 = vunpack.c.l.b16 %v1661
  %v3710 = vunpack.c.l.b16 %v1662
  %v3711 = vunpack.c.l.b16 %v1663
  %v3712 = vunpack.c.l.b16 %v1664
  %v3713 = vunpack.c.l.b16 %v1665
  %v3714 = vunpack.c.l.b16 %v1666
  %v3715 = vunpack.c.l.b16 %v1667
  %v3716 = vunpack.c.l.b16 %v1668
  %v3717 = vunpack.c.l.b16 %v1669
  %v3718 = vunpack.c.l.b16 %v1670
  %v3719 = vunpack.c.l.b16 %v1671
  %v3720 = vunpack.c.l.b16 %v1672
  %v3721 = vunpack.c.l.b16 %v1673
  %v3722 = vunpack.c.l.b16 %v1674
  %v3723 = vunpack.c.l.b16 %v1675
  %v3724 = vunpack.c.l.b16 %v1676
  %v3725 = vunpack.c.l.b16 %v1677
  %v3726 = vunpack.c.l.b16 %v1678
  %v3727 = vunpack.c.l.b16 %v1679
  %v3728 = vunpack.c.l.b16 %v1680
  %v3729 = vunpack.c.l.b16 %v1681
  %v3730 = vunpack.c.l.b16 %v1682
  %v3731 = vunpack.c.l.b16 %v1683
  %v3732 = vunpack.c.l.b16 %v1684
  %v3733 = vunpack.c.l.b16 %v1685
  %v3734 = vunpack.c.l.b16 %v1686
  %v3735 = vunpack.c.l.b16 %v1687
  %v3736 = vunpack.c.l.b16 %v1688
  %v3737 = vunpack.c.l.b16 %v1689
  %v3738 = vunpack.c.l.b16 %v1690
  %v3739 = vunpack.c.l.b16 %v1691
  %v3740 = vunpack.c.l.b16 %v1692
  %v3741 = vunpack.c.l.b16 %v1693
  %v3742 = vunpack.c.l.b16 %v1694
  %v3743 = vunpack.c.l.b16 %v1695
  %v3744 = vunpack.c.l.b16 %v1696
  %v3745 = vunpack.c.l.b16 %v1697
  %v3746 = vunpack.c.l.b16 %v1698
  %v3747 = vunpack.c.l.b16 %v1699
  %v3748 = vunpack.c.l.b16 %v1700
  %v3749 = vunpack.c.l.b16 %v1701
  %v3750 = vunpack.c.l.b16 %v1702
  %v3751 = vunpack.c.l.b16 %v1703
  %v3752 = vunpack.c.l.b16 %v1704
  %v3753 = vunpack.c.l.b16 %v1705
  %v3754 = vunpack.c.l.b16 %v1706
  %v3755 = vunpack.c.l.b16 %v1707
  %v3756 = vunpack.c.l.b16 %v1708
  %v3757 = vunpack.c.l.b16 %v1709
  %v3758 = vunpack.c.l.b16 %v1710
  %v3759 = vunpack.c.l.b16 %v1711
  %v3760 = vunpack.c.l.b16 %v1712
  %v3761 = vunpack.c.l.b16 %v1713
  %v3762 = vunpack.c.l.b16 %v1714
  %v3763 = vunpack.c.l.b16 %v1715
  %v3764 = vunpack.c.l.b16 %v1716
  %v3765 = vunpack.c.l.b16 %v1717
  %v3766 = vunpack.c.l.b16 %v1718
  %v3767 = vunpack.c.l.b16 %v1719
  %v3768 = vunpack.c.l.b16 %v1720
  %v3769 = vunpack.c.l.b16 %v1721
  %v3770 = vunpack.c.l.b16 %v1722
  %v3771 = vunpack.c.l.b16 %v1723
  %v3772 = vunpack.c.l.b16 %v1724
  %v3773 = vunpack.c.l.b16 %v1725
  %v3774 = vunpack.c.l.b16 %v1726
  %v3775 = vunpack.c.l.b16 %v1727
  %v3776 = vunpack.c.l.b16 %v1728
  %v3777 = vunpack.c.l.b16 %v1729
  %v3778 = vunpack.c.l.b16 %v1730
  %v3779 = vunpack.c.l.b16 %v1731
  %v3780 = vunpack.c.l.b16 %v1732
  %v3781 = vunpack.c.l.b16 %v1733
  %v3782 = vunpack.c.l.b16 %v1734
  %v3783 = vunpack.c.l.b16 %v1735
  %v3784 = vunpack.c.l.b16 %v1736
  %v3785 = vunpack.c.l.b16 %v1737
  %v3786 = vunpack.c.l.b16 %v1738
  %v3787 = vunpack.c.l.b16 %v1739
  %v3788 = vunpack.c.l.b16 %v1740
  %v3789 = vunpack.c.l.b16 %v1741
  %v3790 = vunpack.c.l.b16 %v1742
  %v3791 = vunpack.c.l.b16 %v1743
  %v3792 = vunpack.c.l.b16 %v1744
  %v3793 = vunpack.c.l.b16 %v1745
  %v3794 = vunpack.c.l.b16 %v1746
  %v3795 = vunpack.c.l.b16 %v1747
  %v3796 = vunpack.c.l.b16 %v1748
  %v3797 = vunpack.c.l.b16 %v1749
  %v3798 = vunpack.c.l.b16 %v1750
  %v3799 = vunpack.c.l.b16 %v1751
  %v3800 = vunpack.c.l.b16 %v1752
  %v3801 = vunpack.c.l.b16 %v1753
  %v3802 = vunpack.c.l.b16 %v1754
  %v3803 = vunpack.c.l.b16 %v1755
  %v3804 = vunpack.c.l.b16 %v1756
  %v3805 = vunpack.c.l.b16 %v1757
  %v3806 = vunpack.c.l.b16 %v1758
  %v3807 = vunpack.c.l.b16 %v1759
  %v3808 = vunpack.c.l.b16 %v1760
  %v3809 = vunpack.c.l.b16 %v1761
  %v3810 = vunpack.c.l.b16 %v1762
  %v3811 = vunpack.c.l.b16 %v1763
  %v3812 = vunpack.c.l.b16 %v1764
  %v3813 = vunpack.c.l.b16 %v1765
  %v3814 = vunpack.c.l.b16 %v1766
  %v3815 = vunpack.c.l.b16 %v1767
  %v3816 = vunpack.c.l.b16 %v1768
  %v3817 = vunpack.c.l.b16 %v1769
  %v3818 = vunpack.c.l.b16 %v1770
  %v3819 = vunpack.c.l.b16 %v1771
  %v3820 = vunpack.c.l.b16 %v1772
  %v3821 = vunpack.c.l.b16 %v1773
  %v3822 = vunpack.c.l.b16 %v1774
  %v3823 = vunpack.c.l.b16 %v1775
  %v3824 = vunpack.c.l.b16 %v1776
  %v3825 = vunpack.c.l.b16 %v1777
  %v3826 = vunpack.c.l.b16 %v1778
  %v3827 = vunpack.c.l.b16 %v1779
  %v3828 = vunpack.c.l.b16 %v1780
  %v3829 = vunpack.c.l.b16 %v1781
  %v3830 = vunpack.c.l.b16 %v1782
  %v3831 = vunpack.c.l.b16 %v1783
  %v3832 = vunpack.c.l.b16 %v1784
  %v3833 = vunpack.c.l.b16 %v1785
  %v3834 = vunpack.c.l.b16 %v1786
  %v3835 = vunpack.c.l.b16 %v1787
  %v3836 = vunpack.c.l.b16 %v1788
  %v3837 = vunpack.c.l.b16 %v1789
  %v3838 = vunpack.c.l.b16 %v1790
  %v3839 = vunpack.c.l.b16 %v1791
  %v3840 = vunpack.c.l.b16 %v1792
  %v3841 = vunpack.c.l.b16 %v1793
  %v3842 = vunpack.c.l.b16 %v1794
  %v3843 = vunpack.c.l.b16 %v1795
  %v3844 = vunpack.c.l.b16 %v1796
  %v3845 = vunpack.c.l.b16 %v1797
  %v3846 = vunpack.c.l.b16 %v1798
  %v3847 = vunpack.c.l.b16 %v1799
  %v3848 = vunpack.c.l.b16 %v1800
  %v3849 = vunpack.c.l.b16 %v1801
  %v3850 = vunpack.c.l.b16 %v1802
  %v3851 = vunpack.c.l.b16 %v1803
  %v3852 = vunpack.c.l.b16 %v1804
  %v3853 = vunpack.c.l.b16 %v1805
  %v3854 = vunpack.c.l.b16 %v1806
  %v3855 = vunpack.c.l.b16 %v1807
  %v3856 = vunpack.c.l.b16 %v1808
  %v3857 = vunpack.c.l.b16 %v1809
  %v3858 = vunpack.c.l.b16 %v1810
  %v3859 = vunpack.c.l.b16 %v1811
  %v3860 = vunpack.c.l.b16 %v1812
  %v3861 = vunpack.c.l.b16 %v1813
  %v3862 = vunpack.c.l.b16 %v1814
  %v3863 = vunpack.c.l.b16 %v1815
  %v3864 = vunpack.c.l.b16 %v1816
  %v3865 = vunpack.c.l.b16 %v1817
  %v3866 = vunpack.c.l.b16 %v1818
  %v3867 = vunpack.c.l.b16 %v1819
  %v3868 = vunpack.c.l.b16 %v1820
  %v3869 = vunpack.c.l.b16 %v1821
  %v3870 = vunpack.c.l.b16 %v1822
  %v3871 = vunpack.c.l.b16 %v1823
  %v3872 = vunpack.c.l.b16 %v1824
  %v3873 = vunpack.c.l.b16 %v1825
  %v3874 = vunpack.c.l.b16 %v1826
  %v3875 = vunpack.c.l.b16 %v1827
  %v3876 = vunpack.c.l.b16 %v1828
  %v3877 = vunpack.c.l.b16 %v1829
  %v3878 = vunpack.c.l.b16 %v1830
  %v3879 = vunpack.c.l.b16 %v1831
  %v3880 = vunpack.c.l.b16 %v1832
  %v3881 = vunpack.c.l.b16 %v1833
  %v3882 = vunpack.c.l.b16 %v1834
  %v3883 = vunpack.c.l.b16 %v1835
  %v3884 = vunpack.c.l.b16 %v1836
  %v3885 = vunpack.c.l.b16 %v1837
  %v3886 = vunpack.c.l.b16 %v1838
  %v3887 = vunpack.c.l.b16 %v1839
  %v3888 = vunpack.c.l.b16 %v1840
  %v3889 = vunpack.c.l.b16 %v1841
  %v3890 = vunpack.c.l.b16 %v1842
  %v3891 = vunpack.c.l.b16 %v1843
  %v3892 = vunpack.c.l.b16 %v1844
  %v3893 = vunpack.c.l.b16 %v1845
  %v3894 = vunpack.c.l.b16 %v1846
  %v3895 = vunpack.c.l.b16 %v1847
  %v3896 = vunpack.c.l.b16 %v1848
  %v3897 = vunpack.c.l.b16 %v1849
  %v3898 = vunpack.c.l.b16 %v1850
  %v3899 = vunpack.c.l.b16 %v1851
  %v3900 = vunpack.c.l.b16 %v1852
  %v3901 = vunpack.c.l.b16 %v1853
  %v3902 = vunpack.c.l.b16 %v1854
  %v3903 = vunpack.c.l.b16 %v1855
  %v3904 = vunpack.c.l.b16 %v1856
  %v3905 = vunpack.c.l.b16 %v1857
  %v3906 = vunpack.c.l.b16 %v1858
  %v3907 = vunpack.c.l.b16 %v1859
  %v3908 = vunpack.c.l.b16 %v1860
  %v3909 = vunpack.c.l.b16 %v1861
  %v3910 = vunpack.c.l.b16 %v1862
  %v3911 = vunpack.c.l.b16 %v1863
  %v3912 = vunpack.c.l.b16 %v1864
  %v3913 = vunpack.c.l.b16 %v1865
  %v3914 = vunpack.c.l.b16 %v1866
  %v3915 = vunpack.c.l.b16 %v1867
  %v3916 = vpack.c.b16 %v2893, %v2892
  %v3917 = vpack.c.b16 %v2895, %v2894
  %v3918 = vpack.c.b16 %v2897, %v2896
  %v3919 = vpack.c.b16 %v2899, %v2898
  %v3920 = vpack.c.b16 %v2901, %v2900
  %v3921 = vpack.c.b16 %v2903, %v2902
  %v3922 = vpack.c.b16 %v2905, %v2904
  %v3923 = vpack.c.b16 %v2907, %v2906
  %v3924 = vpack.c.b16 %v2909, %v2908
  %v3925 = vpack.c.b16 %v2911, %v2910
  %v3926 = vpack.c.b16 %v2913, %v2912
  %v3927 = vpack.c.b16 %v2915, %v2914
  %v3928 = vpack.c.b16 %v2917, %v2916
  %v3929 = vpack.c.b16 %v2919, %v2918
  %v3930 = vpack.c.b16 %v2921, %v2920
  %v3931 = vpack.c.b16 %v2923, %v2922
  %v3932 = vpack.c.b16 %v2925, %v2924
  %v3933 = vpack.c.b16 %v2927, %v2926
  %v3934 = vpack.c.b16 %v2929, %v2928
  %v3935 = vpack.c.b16 %v2931, %v2930
  %v3936 = vpack.c.b16 %v2933, %v2932
  %v3937 = vpack.c.b16 %v2935, %v2934
  %v3938 = vpack.c.b16 %v2937, %v2936
  %v3939 = vpack.c.b16 %v2939, %v2938
  %v3940 = vpack.c.b16 %v2941, %v2940
  %v3941 = vpack.c.b16 %v2943, %v2942
  %v3942 = vpack.c.b16 %v2945, %v2944
  %v3943 = vpack.c.b16 %v2947, %v2946
  %v3944 = vpack.c.b16 %v2949, %v2948
  %v3945 = vpack.c.b16 %v2951, %v2950
  %v3946 = vpack.c.b16 %v2953, %v2952
  %v3947 = vpack.c.b16 %v2955, %v2954
  %v3948 = vpack.c.b16 %v2957, %v2956
  %v3949 = vpack.c.b16 %v2959, %v2958
  %v3950 = vpack.c.b16 %v2961, %v2960
  %v3951 = vpack.c.b16 %v2963, %v2962
  %v3952 = vpack.c.b16 %v2965, %v2964
  %v3953 = vpack.c.b16 %v2967, %v2966
  %v3954 = vpack.c.b16 %v2969, %v2968
  %v3955 = vpack.c.b16 %v2971, %v2970
  %v3956 = vpack.c.b16 %v2973, %v2972
  %v3957 = vpack.c.b16 %v2975, %v2974
  %v3958 = vpack.c.b16 %v2977, %v2976
  %v3959 = vpack.c.b16 %v2979, %v2978
  %v3960 = vpack.c.b16 %v2981, %v2980
  %v3961 = vpack.c.b16 %v2983, %v2982
  %v3962 = vpack.c.b16 %v2985, %v2984
  %v3963 = vpack.c.b16 %v2987, %v2986
  %v3964 = vpack.c.b16 %v2989, %v2988
  %v3965 = vpack.c.b16 %v2991, %v2990
  %v3966 = vpack.c.b16 %v2993, %v2992
  %v3967 = vpack.c.b16 %v2995, %v2994
  %v3968 = vpack.c.b16 %v2997, %v2996
  %v3969 = vpack.c.b16 %v2999, %v2998
  %v3970 = vpack.c.b16 %v3001, %v3000
  %v3971 = vpack.c.b16 %v3003, %v3002
  %v3972 = vpack.c.b16 %v3005, %v3004
  %v3973 = vpack.c.b16 %v3007, %v3006
  %v3974 = vpack.c.b16 %v3009, %v3008
  %v3975 = vpack.c.b16 %v3011, %v3010
  %v3976 = vpack.c.b16 %v3013, %v3012
  %v3977 = vpack.c.b16 %v3015, %v3014
  %v3978 = vpack.c.b16 %v3017, %v3016
  %v3979 = vpack.c.b16 %v3019, %v3018
  %v3980 = vpack.c.b16 %v3021, %v3020
  %v3981 = vpack.c.b16 %v3023, %v3022
  %v3982 = vpack.c.b16 %v3025, %v3024
  %v3983 = vpack.c.b16 %v3027, %v3026
  %v3984 = vpack.c.b16 %v3029, %v3028
  %v3985 = vpack.c.b16 %v3031, %v3030
  %v3986 = vpack.c.b16 %v3033, %v3032
  %v3987 = vpack.c.b16 %v3035, %v3034
  %v3988 = vpack.c.b16 %v3037, %v3036
  %v3989 = vpack.c.b16 %v3039, %v3038
  %v3990 = vpack.c.b16 %v3041, %v3040
  %v3991 = vpack.c.b16 %v3043, %v3042
  %v3992 = vpack.c.b16 %v3045, %v3044
  %v3993 = vpack.c.b16 %v3047, %v3046
  %v3994 = vpack.c.b16 %v3049, %v3048
  %v3995 = vpack.c.b16 %v3051, %v3050
  %v3996 = vpack.c.b16 %v3053, %v3052
  %v3997 = vpack.c.b16 %v3055, %v3054
  %v3998 = vpack.c.b16 %v3057, %v3056
  %v3999 = vpack.c.b16 %v3059, %v3058
  %v4000 = vpack.c.b16 %v3061, %v3060
  %v4001 = vpack.c.b16 %v3063, %v3062
  %v4002 = vpack.c.b16 %v3065, %v3064
  %v4003 = vpack.c.b16 %v3067, %v3066
  %v4004 = vpack.c.b16 %v3069, %v3068
  %v4005 = vpack.c.b16 %v3071, %v3070
  %v4006 = vpack.c.b16 %v3073, %v3072
  %v4007 = vpack.c.b16 %v3075, %v3074
  %v4008 = vpack.c.b16 %v3077, %v3076
  %v4009 = vpack.c.b16 %v3079, %v3078
  %v4010 = vpack.c.b16 %v3081, %v3080
  %v4011 = vpack.c.b16 %v3083, %v3082
  %v4012 = vpack.c.b16 %v3085, %v3084
  %v4013 = vpack.c.b16 %v3087, %v3086
  %v4014 = vpack.c.b16 %v3089, %v3088
  %v4015 = vpack.c.b16 %v3091, %v3090
  %v4016 = vpack.c.b16 %v3093, %v3092
  %v4017 = vpack.c.b16 %v3095, %v3094
  %v4018 = vpack.c.b16 %v3097, %v3096
  %v4019 = vpack.c.b16 %v3099, %v3098
  %v4020 = vpack.c.b16 %v3101, %v3100
  %v4021 = vpack.c.b16 %v3103, %v3102
  %v4022 = vpack.c.b16 %v3105, %v3104
  %v4023 = vpack.c.b16 %v3107, %v3106
  %v4024 = vpack.c.b16 %v3109, %v3108
  %v4025 = vpack.c.b16 %v3111, %v3110
  %v4026 = vpack.c.b16 %v3113, %v3112
  %v4027 = vpack.c.b16 %v3115, %v3114
  %v4028 = vpack.c.b16 %v3117, %v3116
  %v4029 = vpack.c.b16 %v3119, %v3118
  %v4030 = vpack.c.b16 %v3121, %v3120
  %v4031 = vpack.c.b16 %v3123, %v3122
  %v4032 = vpack.c.b16 %v3125, %v3124
  %v4033 = vpack.c.b16 %v3127, %v3126
  %v4034 = vpack.c.b16 %v3129, %v3128
  %v4035 = vpack.c.b16 %v3131, %v3130
  %v4036 = vpack.c.b16 %v3133, %v3132
  %v4037 = vpack.c.b16 %v3135, %v3134
  %v4038 = vpack.c.b16 %v3137, %v3136
  %v4039 = vpack.c.b16 %v3139, %v3138
  %v4040 = vpack.c.b16 %v3141, %v3140
  %v4041 = vpack.c.b16 %v3143, %v3142
  %v4042 = vpack.c.b16 %v3145, %v3144
  %v4043 = vpack.c.b16 %v3147, %v3146
  %v4044 = vpack.c.b16 %v3149, %v3148
  %v4045 = vpack.c.b16 %v3151, %v3150
  %v4046 = vpack.c.b16 %v3153, %v3152
  %v4047 = vpack.c.b16 %v3155, %v3154
  %v4048 = vpack.c.b16 %v3157, %v3156
  %v4049 = vpack.c.b16 %v3159, %v3158
  %v4050 = vpack.c.b16 %v3161, %v3160
  %v4051 = vpack.c.b16 %v3163, %v3162
  %v4052 = vpack.c.b16 %v3165, %v3164
  %v4053 = vpack.c.b16 %v3167, %v3166
  %v4054 = vpack.c.b16 %v3169, %v3168
  %v4055 = vpack.c.b16 %v3171, %v3170
  %v4056 = vpack.c.b16 %v3173, %v3172
  %v4057 = vpack.c.b16 %v3175, %v3174
  %v4058 = vpack.c.b16 %v3177, %v3176
  %v4059 = vpack.c.b16 %v3179, %v3178
  %v4060 = vpack.c.b16 %v3181, %v3180
  %v4061 = vpack.c.b16 %v3183, %v3182
  %v4062 = vpack.c.b16 %v3185, %v3184
  %v4063 = vpack.c.b16 %v3187, %v3186
  %v4064 = vpack.c.b16 %v3189, %v3188
  %v4065 = vpack.c.b16 %v3191, %v3190
  %v4066 = vpack.c.b16 %v3193, %v3192
  %v4067 = vpack.c.b16 %v3195, %v3194
  %v4068 = vpack.c.b16 %v3197, %v3196
  %v4069 = vpack.c.b16 %v3199, %v3198
  %v4070 = vpack.c.b16 %v3201, %v3200
  %v4071 = vpack.c.b16 %v3203, %v3202
  %v4072 = vpack.c.b16 %v3205, %v3204
  %v4073 = vpack.c.b16 %v3207, %v3206
  %v4074 = vpack.c.b16 %v3209, %v3208
  %v4075 = vpack.c.b16 %v3211, %v3210
  %v4076 = vpack.c.b16 %v3213, %v3212
  %v4077 = vpack.c.b16 %v3215, %v3214
  %v4078 = vpack.c.b16 %v3217, %v3216
  %v4079 = vpack.c.b16 %v3219, %v3218
  %v4080 = vpack.c.b16 %v3221, %v3220
  %v4081 = vpack.c.b16 %v3223, %v3222
  %v4082 = vpack.c.b16 %v3225, %v3224
  %v4083 = vpack.c.b16 %v3227, %v3226
  %v4084 = vpack.c.b16 %v3229, %v3228
  %v4085 = vpack.c.b16 %v3231, %v3230
  %v4086 = vpack.c.b16 %v3233, %v3232
  %v4087 = vpack.c.b16 %v3235, %v3234
  %v4088 = vpack.c.b16 %v3237, %v3236
  %v4089 = vpack.c.b16 %v3239, %v3238
  %v4090 = vpack.c.b16 %v3241, %v3240
  %v4091 = vpack.c.b16 %v3243, %v3242
  %v4092 = vpack.c.b16 %v3245, %v3244
  %v4093 = vpack.c.b16 %v3247, %v3246
  %v4094 = vpack.c.b16 %v3249, %v3248
  %v4095 = vpack.c.b16 %v3251, %v3250
  %v4096 = vpack.c.b16 %v3253, %v3252
  %v4097 = vpack.c.b16 %v3255, %v3254
  %v4098 = vpack.c.b16 %v3257, %v3256
  %v4099 = vpack.c.b16 %v3259, %v3258
  %v4100 = vpack.c.b16 %v3261, %v3260
  %v4101 = vpack.c.b16 %v3263, %v3262
  %v4102 = vpack.c.b16 %v3265, %v3264
  %v4103 = vpack.c.b16 %v3267, %v3266
  %v4104 = vpack.c.b16 %v3269, %v3268
  %v4105 = vpack.c.b16 %v3271, %v3270
  %v4106 = vpack.c.b16 %v3273, %v3272
  %v4107 = vpack.c.b16 %v3275, %v3274
  %v4108 = vpack.c.b16 %v3277, %v3276
  %v4109 = vpack.c.b16 %v3279, %v3278
  %v4110 = vpack.c.b16 %v3281, %v3280
  %v4111 = vpack.c.b16 %v3283, %v3282
  %v4112 = vpack.c.b16 %v3285, %v3284
  %v4113 = vpack.c.b16 %v3287, %v3286
  %v4114 = vpack.c.b16 %v3289, %v3288
  %v4115 = vpack.c.b16 %v3291, %v3290
  %v4116 = vpack.c.b16 %v3293, %v3292
  %v4117 = vpack.c.b16 %v3295, %v3294
  %v4118 = vpack.c.b16 %v3297, %v3296
  %v4119 = vpack.c.b16 %v3299, %v3298
  %v4120 = vpack.c.b16 %v3301, %v3300
  %v4121 = vpack.c.b16 %v3303, %v3302
  %v4122 = vpack.c.b16 %v3305, %v3304
  %v4123 = vpack.c.b16 %v3307, %v3306
  %v4124 = vpack.c.b16 %v3309, %v3308
  %v4125 = vpack.c.b16 %v3311, %v3310
  %v4126 = vpack.c.b16 %v3313, %v3312
  %v4127 = vpack.c.b16 %v3315, %v3314
  %v4128 = vpack.c.b16 %v3317, %v3316
  %v4129 = vpack.c.b16 %v3319, %v3318
  %v4130 = vpack.c.b16 %v3321, %v3320
  %v4131 = vpack.c.b16 %v3323, %v3322
  %v4132 = vpack.c.b16 %v3325, %v3324
  %v4133 = vpack.c.b16 %v3327, %v3326
  %v4134 = vpack.c.b16 %v3329, %v3328
  %v4135 = vpack.c.b16 %v3331, %v3330
  %v4136 = vpack.c.b16 %v3333, %v3332
  %v4137 = vpack.c.b16 %v3335, %v3334
  %v4138 = vpack.c.b16 %v3337, %v3336
  %v4139 = vpack.c.b16 %v3339, %v3338
  %v4140 = vpack.c.b16 %v3341, %v3340
  %v4141 = vpack.c.b16 %v3343, %v3342
  %v4142 = vpack.c.b16 %v3345, %v3344
  %v4143 = vpack.c.b16 %v3347, %v3346
  %v4144 = vpack.c.b16 %v3349, %v3348
  %v4145 = vpack.c.b16 %v3351, %v3350
  %v4146 = vpack.c.b16 %v3353, %v3352
  %v4147 = vpack.c.b16 %v3355, %v3354
  %v4148 = vpack.c.b16 %v3357, %v3356
  %v4149 = vpack.c.b16 %v3359, %v3358
  %v4150 = vpack.c.b16 %v3361, %v3360
  %v4151 = vpack.c.b16 %v3363, %v3362
  %v4152 = vpack.c.b16 %v3365, %v3364
  %v4153 = vpack.c.b16 %v3367, %v3366
  %v4154 = vpack.c.b16 %v3369, %v3368
  %v4155 = vpack.c.b16 %v3371, %v3370
  %v4156 = vpack.c.b16 %v3373, %v3372
  %v4157 = vpack.c.b16 %v3375, %v3374
  %v4158 = vpack.c.b16 %v3377, %v3376
  %v4159 = vpack.c.b16 %v3379, %v3378
  %v4160 = vpack.c.b16 %v3381, %v3380
  %v4161 = vpack.c.b16 %v3383, %v3382
  %v4162 = vpack.c.b16 %v3385, %v3384
  %v4163 = vpack.c.b16 %v3387, %v3386
  %v4164 = vpack.c.b16 %v3389, %v3388
  %v4165 = vpack.c.b16 %v3391, %v3390
  %v4166 = vpack.c.b16 %v3393, %v3392
  %v4167 = vpack.c.b16 %v3395, %v3394
  %v4168 = vpack.c.b16 %v3397, %v3396
  %v4169 = vpack.c.b16 %v3399, %v3398
  %v4170 = vpack.c.b16 %v3401, %v3400
  %v4171 = vpack.c.b16 %v3403, %v3402
  %v4172 = vpack.c.b16 %v3405, %v3404
  %v4173 = vpack.c.b16 %v3407, %v3406
  %v4174 = vpack.c.b16 %v3409, %v3408
  %v4175 = vpack.c.b16 %v3411, %v3410
  %v4176 = vpack.c.b16 %v3413, %v3412
  %v4177 = vpack.c.b16 %v3415, %v3414
  %v4178 = vpack.c.b16 %v3417, %v3416
  %v4179 = vpack.c.b16 %v3419, %v3418
  %v4180 = vpack.c.b16 %v3421, %v3420
  %v4181 = vpack.c.b16 %v3423, %v3422
  %v4182 = vpack.c.b16 %v3425, %v3424
  %v4183 = vpack.c.b16 %v3427, %v3426
  %v4184 = vpack.c.b16 %v3429, %v3428
  %v4185 = vpack.c.b16 %v3431, %v3430
  %v4186 = vpack.c.b16 %v3433, %v3432
  %v4187 = vpack.c.b16 %v3435, %v3434
  %v4188 = vpack.c.b16 %v3437, %v3436
  %v4189 = vpack.c.b16 %v3439, %v3438
  %v4190 = vpack.c.b16 %v3441, %v3440
  %v4191 = vpack.c.b16 %v3443, %v3442
  %v4192 = vpack.c.b16 %v3445, %v3444
  %v4193 = vpack.c.b16 %v3447, %v3446
  %v4194 = vpack.c.b16 %v3449, %v3448
  %v4195 = vpack.c.b16 %v3451, %v3450
  %v4196 = vpack.c.b16 %v3453, %v3452
  %v4197 = vpack.c.b16 %v3455, %v3454
  %v4198 = vpack.c.b16 %v3457, %v3456
  %v4199 = vpack.c.b16 %v3459, %v3458
  %v4200 = vpack.c.b16 %v3461, %v3460
  %v4201 = vpack.c.b16 %v3463, %v3462
  %v4202 = vpack.c.b16 %v3465, %v3464
  %v4203 = vpack.c.b16 %v3467, %v3466
  %v4204 = vpack.c.b16 %v3469, %v3468
  %v4205 = vpack.c.b16 %v3471, %v3470
  %v4206 = vpack.c.b16 %v3473, %v3472
  %v4207 = vpack.c.b16 %v3475, %v3474
  %v4208 = vpack.c.b16 %v3477, %v3476
  %v4209 = vpack.c.b16 %v3479, %v3478
  %v4210 = vpack.c.b16 %v3481, %v3480
  %v4211 = vpack.c.b16 %v3483, %v3482
  %v4212 = vpack.c.b16 %v3485, %v3484
  %v4213 = vpack.c.b16 %v3487, %v3486
  %v4214 = vpack.c.b16 %v3489, %v3488
  %v4215 = vpack.c.b16 %v3491, %v3490
  %v4216 = vpack.c.b16 %v3493, %v3492
  %v4217 = vpack.c.b16 %v3495, %v3494
  %v4218 = vpack.c.b16 %v3497, %v3496
  %v4219 = vpack.c.b16 %v3499, %v3498
  %v4220 = vpack.c.b16 %v3501, %v3500
  %v4221 = vpack.c.b16 %v3503, %v3502
  %v4222 = vpack.c.b16 %v3505, %v3504
  %v4223 = vpack.c.b16 %v3507, %v3506
  %v4224 = vpack.c.b16 %v3509, %v3508
  %v4225 = vpack.c.b16 %v3511, %v3510
  %v4226 = vpack.c.b16 %v3513, %v3512
  %v4227 = vpack.c.b16 %v3515, %v3514
  %v4228 = vpack.c.b16 %v3517, %v3516
  %v4229 = vpack.c.b16 %v3519, %v3518
  %v4230 = vpack.c.b16 %v3521, %v3520
  %v4231 = vpack.c.b16 %v3523, %v3522
  %v4232 = vpack.c.b16 %v3525, %v3524
  %v4233 = vpack.c.b16 %v3527, %v3526
  %v4234 = vpack.c.b16 %v3529, %v3528
  %v4235 = vpack.c.b16 %v3531, %v3530
  %v4236 = vpack.c.b16 %v3533, %v3532
  %v4237 = vpack.c.b16 %v3535, %v3534
  %v4238 = vpack.c.b16 %v3537, %v3536
  %v4239 = vpack.c.b16 %v3539, %v3538
  %v4240 = vpack.c.b16 %v3541, %v3540
  %v4241 = vpack.c.b16 %v3543, %v3542
  %v4242 = vpack.c.b16 %v3545, %v3544
  %v4243 = vpack.c.b16 %v3547, %v3546
  %v4244 = vpack.c.b16 %v3549, %v3548
  %v4245 = vpack.c.b16 %v3551, %v3550
  %v4246 = vpack.c.b16 %v3553, %v3552
  %v4247 = vpack.c.b16 %v3555, %v3554
  %v4248 = vpack.c.b16 %v3557, %v3556
  %v4249 = vpack.c.b16 %v3559, %v3558
  %v4250 = vpack.c.b16 %v3561, %v3560
  %v4251 = vpack.c.b16 %v3563, %v3562
  %v4252 = vpack.c.b16 %v3565, %v3564
  %v4253 = vpack.c.b16 %v3567, %v3566
  %v4254 = vpack.c.b16 %v3569, %v3568
  %v4255 = vpack.c.b16 %v3571, %v3570
  %v4256 = vpack.c.b16 %v3573, %v3572
  %v4257 = vpack.c.b16 %v3575, %v3574
  %v4258 = vpack.c.b16 %v3577, %v3576
  %v4259 = vpack.c.b16 %v3579, %v3578
  %v4260 = vpack.c.b16 %v3581, %v3580
  %v4261 = vpack.c.b16 %v3583, %v3582
  %v4262 = vpack.c.b16 %v3585, %v3584
  %v4263 = vpack.c.b16 %v3587, %v3586
  %v4264 = vpack.c.b16 %v3589, %v3588
  %v4265 = vpack.c.b16 %v3591, %v3590
  %v4266 = vpack.c.b16 %v3593, %v3592
  %v4267 = vpack.c.b16 %v3595, %v3594
  %v4268 = vpack.c.b16 %v3597, %v3596
  %v4269 = vpack.c.b16 %v3599, %v3598
  %v4270 = vpack.c.b16 %v3601, %v3600
  %v4271 = vpack.c.b16 %v3603, %v3602
  %v4272 = vpack.c.b16 %v3605, %v3604
  %v4273 = vpack.c.b16 %v3607, %v3606
  %v4274 = vpack.c.b16 %v3609, %v3608
  %v4275 = vpack.c.b16 %v3611, %v3610
  %v4276 = vpack.c.b16 %v3613, %v3612
  %v4277 = vpack.c.b16 %v3615, %v3614
  %v4278 = vpack.c.b16 %v3617, %v3616
  %v4279 = vpack.c.b16 %v3619, %v3618
  %v4280 = vpack.c.b16 %v3621, %v3620
  %v4281 = vpack.c.b16 %v3623, %v3622
  %v4282 = vpack.c.b16 %v3625, %v3624
  %v4283 = vpack.c.b16 %v3627, %v3626
  %v4284 = vpack.c.b16 %v3629, %v3628
  %v4285 = vpack.c.b16 %v3631, %v3630
  %v4286 = vpack.c.b16 %v3633, %v3632
  %v4287 = vpack.c.b16 %v3635, %v3634
  %v4288 = vpack.c.b16 %v3637, %v3636
  %v4289 = vpack.c.b16 %v3639, %v3638
  %v4290 = vpack.c.b16 %v3641, %v3640
  %v4291 = vpack.c.b16 %v3643, %v3642
  %v4292 = vpack.c.b16 %v3645, %v3644
  %v4293 = vpack.c.b16 %v3647, %v3646
  %v4294 = vpack.c.b16 %v3649, %v3648
  %v4295 = vpack.c.b16 %v3651, %v3650
  %v4296 = vpack.c.b16 %v3653, %v3652
  %v4297 = vpack.c.b16 %v3655, %v3654
  %v4298 = vpack.c.b16 %v3657, %v3656
  %v4299 = vpack.c.b16 %v3659, %v3658
  %v4300 = vpack.c.b16 %v3661, %v3660
  %v4301 = vpack.c.b16 %v3663, %v3662
  %v4302 = vpack.c.b16 %v3665, %v3664
  %v4303 = vpack.c.b16 %v3667, %v3666
  %v4304 = vpack.c.b16 %v3669, %v3668
  %v4305 = vpack.c.b16 %v3671, %v3670
  %v4306 = vpack.c.b16 %v3673, %v3672
  %v4307 = vpack.c.b16 %v3675, %v3674
  %v4308 = vpack.c.b16 %v3677, %v3676
  %v4309 = vpack.c.b16 %v3679, %v3678
  %v4310 = vpack.c.b16 %v3681, %v3680
  %v4311 = vpack.c.b16 %v3683, %v3682
  %v4312 = vpack.c.b16 %v3685, %v3684
  %v4313 = vpack.c.b16 %v3687, %v3686
  %v4314 = vpack.c.b16 %v3689, %v3688
  %v4315 = vpack.c.b16 %v3691, %v3690
  %v4316 = vpack.c.b16 %v3693, %v3692
  %v4317 = vpack.c.b16 %v3695, %v3694
  %v4318 = vpack.c.b16 %v3697, %v3696
  %v4319 = vpack.c.b16 %v3699, %v3698
  %v4320 = vpack.c.b16 %v3701, %v3700
  %v4321 = vpack.c.b16 %v3703, %v3702
  %v4322 = vpack.c.b16 %v3705, %v3704
  %v4323 = vpack.c.b16 %v3707, %v3706
  %v4324 = vpack.c.b16 %v3709, %v3708
  %v4325 = vpack.c.b16 %v3711, %v3710
  %v4326 = vpack.c.b16 %v3713, %v3712
  %v4327 = vpack.c.b16 %v3715, %v3714
  %v4328 = vpack.c.b16 %v3717, %v3716
  %v4329 = vpack.c.b16 %v3719, %v3718
  %v4330 = vpack.c.b16 %v3721, %v3720
  %v4331 = vpack.c.b16 %v3723, %v3722
  %v4332 = vpack.c.b16 %v3725, %v3724
  %v4333 = vpack.c.b16 %v3727, %v3726
  %v4334 = vpack.c.b16 %v3729, %v3728
  %v4335 = vpack.c.b16 %v3731, %v3730
  %v4336 = vpack.c.b16 %v3733, %v3732
  %v4337 = vpack.c.b16 %v3735, %v3734
  %v4338 = vpack.c.b16 %v3737, %v3736
  %v4339 = vpack.c.b16 %v3739, %v3738
  %v4340 = vpack.c.b16 %v3741, %v3740
  %v4341 = vpack.c.b16 %v3743, %v3742
  %v4342 = vpack.c.b16 %v3745, %v3744
  %v4343 = vpack.c.b16 %v3747, %v3746
  %v4344 = vpack.c.b16 %v3749, %v3748
  %v4345 = vpack.c.b16 %v3751, %v3750
  %v4346 = vpack.c.b16 %v3753, %v3752
  %v4347 = vpack.c.b16 %v3755, %v3754
  %v4348 = vpack.c.b16 %v3757, %v3756
  %v4349 = vpack.c.b16 %v3759, %v3758
  %v4350 = vpack.c.b16 %v3761, %v3760
  %v4351 = vpack.c.b16 %v3763, %v3762
  %v4352 = vpack.c.b16 %v3765, %v3764
  %v4353 = vpack.c.b16 %v3767, %v3766
  %v4354 = vpack.c.b16 %v3769, %v3768
  %v4355 = vpack.c.b16 %v3771, %v3770
  %v4356 = vpack.c.b16 %v3773, %v3772
  %v4357 = vpack.c.b16 %v3775, %v3774
  %v4358 = vpack.c.b16 %v3777, %v3776
  %v4359 = vpack.c.b16 %v3779, %v3778
  %v4360 = vpack.c.b16 %v3781, %v3780
  %v4361 = vpack.c.b16 %v3783, %v3782
  %v4362 = vpack.c.b16 %v3785, %v3784
  %v4363 = vpack.c.b16 %v3787, %v3786
  %v4364 = vpack.c.b16 %v3789, %v3788
  %v4365 = vpack.c.b16 %v3791, %v3790
  %v4366 = vpack.c.b16 %v3793, %v3792
  %v4367 = vpack.c.b16 %v3795, %v3794
  %v4368 = vpack.c.b16 %v3797, %v3796
  %v4369 = vpack.c.b16 %v3799, %v3798
  %v4370 = vpack.c.b16 %v3801, %v3800
  %v4371 = vpack.c.b16 %v3803, %v3802
  %v4372 = vpack.c.b16 %v3805, %v3804
  %v4373 = vpack.c.b16 %v3807, %v3806
  %v4374 = vpack.c.b16 %v3809, %v3808
  %v4375 = vpack.c.b16 %v3811, %v3810
  %v4376 = vpack.c.b16 %v3813, %v3812
  %v4377 = vpack.c.b16 %v3815, %v3814
  %v4378 = vpack.c.b16 %v3817, %v3816
  %v4379 = vpack.c.b16 %v3819, %v3818
  %v4380 = vpack.c.b16 %v3821, %v3820
  %v4381 = vpack.c.b16 %v3823, %v3822
  %v4382 = vpack.c.b16 %v3825, %v3824
  %v4383 = vpack.c.b16 %v3827, %v3826
  %v4384 = vpack.c.b16 %v3829, %v3828
  %v4385 = vpack.c.b16 %v3831, %v3830
  %v4386 = vpack.c.b16 %v3833, %v3832
  %v4387 = vpack.c.b16 %v3835, %v3834
  %v4388 = vpack.c.b16 %v3837, %v3836
  %v4389 = vpack.c.b16 %v3839, %v3838
  %v4390 = vpack.c.b16 %v3841, %v3840
  %v4391 = vpack.c.b16 %v3843, %v3842
  %v4392 = vpack.c.b16 %v3845, %v3844
  %v4393 = vpack.c.b16 %v3847, %v3846
  %v4394 = vpack.c.b16 %v3849, %v3848
  %v4395 = vpack.c.b16 %v3851, %v3850
  %v4396 = vpack.c.b16 %v3853, %v3852
  %v4397 = vpack.c.b16 %v3855, %v3854
  %v4398 = vpack.c.b16 %v3857, %v3856
  %v4399 = vpack.c.b16 %v3859, %v3858
  %v4400 = vpack.c.b16 %v3861, %v3860
  %v4401 = vpack.c.b16 %v3863, %v3862
  %v4402 = vpack.c.b16 %v3865, %v3864
  %v4403 = vpack.c.b16 %v3867, %v3866
  %v4404 = vpack.c.b16 %v3869, %v3868
  %v4405 = vpack.c.b16 %v3871, %v3870
  %v4406 = vpack.c.b16 %v3873, %v3872
  %v4407 = vpack.c.b16 %v3875, %v3874
  %v4408 = vpack.c.b16 %v3877, %v3876
  %v4409 = vpack.c.b16 %v3879, %v3878
  %v4410 = vpack.c.b16 %v3881, %v3880
  %v4411 = vpack.c.b16 %v3883, %v3882
  %v4412 = vpack.c.b16 %v3885, %v3884
  %v4413 = vpack.c.b16 %v3887, %v3886
  %v4414 = vpack.c.b16 %v3889, %v3888
  %v4415 = vpack.c.b16 %v3891, %v3890
  %v4416 = vpack.c.b16 %v3893, %v3892
  %v4417 = vpack.c.b16 %v3895, %v3894
  %v4418 = vpack.c.b16 %v3897, %v3896
  %v4419 = vpack.c.b16 %v3899, %v3898
  %v4420 = vpack.c.b16 %v3901, %v3900
  %v4421 = vpack.c.b16 %v3903, %v3902
  %v4422 = vpack.c.b16 %v3905, %v3904
  %v4423 = vpack.c.b16 %v3907, %v3906
  %v4424 = vpack.c.b16 %v3909, %v3908
  %v4425 = vpack.c.b16 %v3911, %v3910
  %v4426 = vpack.c.b16 %v3913, %v3912
  %v4427 = vpack.c.b16 %v3915, %v3914
  %4940 = vmatprep.subr.bf16.mxu0 0
  %4941 = vmatpush1.bf16.msra.mxu0 %v3916
  %4942 = vmatprep.subr.bf16.mxu0 0
  %4943 = vmatpush1.bf16.msra.mxu0 %v3917
  %4944 = vmatprep.subr.bf16.mxu0 0
  %4945 = vmatpush1.bf16.msra.mxu0 %v3918
  %4946 = vmatprep.subr.bf16.mxu0 0
  %4947 = vmatpush1.bf16.msra.mxu0 %v3919
  %4948 = vmatprep.subr.bf16.mxu0 0
  %4949 = vmatpush1.bf16.msra.mxu0 %v3920
  %4950 = vmatprep.subr.bf16.mxu0 0
  %4951 = vmatpush1.bf16.msra.mxu0 %v3921
  %4952 = vmatprep.subr.bf16.mxu0 0
  %4953 = vmatpush1.bf16.msra.mxu0 %v3922
  %4954 = vmatprep.subr.bf16.mxu0 0
  %4955 = vmatpush1.bf16.msra.mxu0 %v3923
  %4956 = vmatprep.subr.bf16.mxu0 0
  %4957 = vmatpush1.bf16.msra.mxu0 %v3924
  %4958 = vmatprep.subr.bf16.mxu0 0
  %4959 = vmatpush1.bf16.msra.mxu0 %v3925
  %4960 = vmatprep.subr.bf16.mxu0 0
  %4961 = vmatpush1.bf16.msra.mxu0 %v3926
  %4962 = vmatprep.subr.bf16.mxu0 0
  %4963 = vmatpush1.bf16.msra.mxu0 %v3927
  %4964 = vmatprep.subr.bf16.mxu0 0
  %4965 = vmatpush1.bf16.msra.mxu0 %v3928
  %4966 = vmatprep.subr.bf16.mxu0 0
  %4967 = vmatpush1.bf16.msra.mxu0 %v3929
  %4968 = vmatprep.subr.bf16.mxu0 0
  %4969 = vmatpush1.bf16.msra.mxu0 %v3930
  %4970 = vmatprep.subr.bf16.mxu0 0
  %4971 = vmatpush1.bf16.msra.mxu0 %v3931
  %4972 = vmatprep.mubr.bf16.mxu0 %v781
  %4973 = vmatmul.mubr.bf16.gmra.mrb[0].mxu0 %v780
  %v4974 = vpop.f32.mrb[0].mxu0
  %v4975 = vadd.f32 0.0, %v4974
  %v4976 = vpop.f32.mrb[0].mxu0
  %v4977 = vpop.f32.mrb[0].mxu0
  %v4978 = vpop.f32.mrb[0].mxu0
  %4979 = vdwg.mxu0
  %4980 = vmatprep.subr.bf16.mxu0 0
  %4981 = vmatpush1.bf16.msra.mxu0 %v3932
  %4982 = vmatprep.subr.bf16.mxu0 0
  %4983 = vmatpush1.bf16.msra.mxu0 %v3933
  %4984 = vmatprep.subr.bf16.mxu0 0
  %4985 = vmatpush1.bf16.msra.mxu0 %v3934
  %4986 = vmatprep.subr.bf16.mxu0 0
  %4987 = vmatpush1.bf16.msra.mxu0 %v3935
  %4988 = vmatprep.subr.bf16.mxu0 0
  %4989 = vmatpush1.bf16.msra.mxu0 %v3936
  %4990 = vmatprep.subr.bf16.mxu0 0
  %4991 = vmatpush1.bf16.msra.mxu0 %v3937
  %4992 = vmatprep.subr.bf16.mxu0 0
  %4993 = vmatpush1.bf16.msra.mxu0 %v3938
  %4994 = vmatprep.subr.bf16.mxu0 0
  %4995 = vmatpush1.bf16.msra.mxu0 %v3939
  %4996 = vmatprep.subr.bf16.mxu0 0
  %4997 = vmatpush1.bf16.msra.mxu0 %v3940
  %4998 = vmatprep.subr.bf16.mxu0 0
  %4999 = vmatpush1.bf16.msra.mxu0 %v3941
  %5000 = vmatprep.subr.bf16.mxu0 0
  %5001 = vmatpush1.bf16.msra.mxu0 %v3942
  %5002 = vmatprep.subr.bf16.mxu0 0
  %5003 = vmatpush1.bf16.msra.mxu0 %v3943
  %5004 = vmatprep.subr.bf16.mxu0 0
  %5005 = vmatpush1.bf16.msra.mxu0 %v3944
  %5006 = vmatprep.subr.bf16.mxu0 0
  %5007 = vmatpush1.bf16.msra.mxu0 %v3945
  %5008 = vmatprep.subr.bf16.mxu0 0
  %5009 = vmatpush1.bf16.msra.mxu0 %v3946
  %5010 = vmatprep.subr.bf16.mxu0 0
  %5011 = vmatpush1.bf16.msra.mxu0 %v3947
  %5012 = vmatprep.mubr.bf16.mxu0 %v783
  %5013 = vmatmul.mubr.bf16.gmra.mrb[0].mxu0 %v782
  %v5014 = vpop.f32.mrb[0].mxu0
  %v5015 = vadd.f32 %v4975, %v5014
  %v5016 = vpop.f32.mrb[0].mxu0
  %v5017 = vpop.f32.mrb[0].mxu0
  %v5018 = vpop.f32.mrb[0].mxu0
  %5019 = vdwg.mxu0
  %5020 = vmatprep.subr.bf16.mxu0 0
  %5021 = vmatpush1.bf16.msra.mxu0 %v3948
  %5022 = vmatprep.subr.bf16.mxu0 0
  %5023 = vmatpush1.bf16.msra.mxu0 %v3949
  %5024 = vmatprep.subr.bf16.mxu0 0
  %5025 = vmatpush1.bf16.msra.mxu0 %v3950
  %5026 = vmatprep.subr.bf16.mxu0 0
  %5027 = vmatpush1.bf16.msra.mxu0 %v3951
  %5028 = vmatprep.subr.bf16.mxu0 0
  %5029 = vmatpush1.bf16.msra.mxu0 %v3952
  %5030 = vmatprep.subr.bf16.mxu0 0
  %5031 = vmatpush1.bf16.msra.mxu0 %v3953
  %5032 = vmatprep.subr.bf16.mxu0 0
  %5033 = vmatpush1.bf16.msra.mxu0 %v3954
  %5034 = vmatprep.subr.bf16.mxu0 0
  %5035 = vmatpush1.bf16.msra.mxu0 %v3955
  %5036 = vmatprep.subr.bf16.mxu0 0
  %5037 = vmatpush1.bf16.msra.mxu0 %v3956
  %5038 = vmatprep.subr.bf16.mxu0 0
  %5039 = vmatpush1.bf16.msra.mxu0 %v3957
  %5040 = vmatprep.subr.bf16.mxu0 0
  %5041 = vmatpush1.bf16.msra.mxu0 %v3958
  %5042 = vmatprep.subr.bf16.mxu0 0
  %5043 = vmatpush1.bf16.msra.mxu0 %v3959
  %5044 = vmatprep.subr.bf16.mxu0 0
  %5045 = vmatpush1.bf16.msra.mxu0 %v3960
  %5046 = vmatprep.subr.bf16.mxu0 0
  %5047 = vmatpush1.bf16.msra.mxu0 %v3961
  %5048 = vmatprep.subr.bf16.mxu0 0
  %5049 = vmatpush1.bf16.msra.mxu0 %v3962
  %5050 = vmatprep.subr.bf16.mxu0 0
  %5051 = vmatpush1.bf16.msra.mxu0 %v3963
  %5052 = vmatprep.mubr.bf16.mxu0 %v785
  %5053 = vmatmul.mubr.bf16.gmra.mrb[0].mxu0 %v784
  %v5054 = vpop.f32.mrb[0].mxu0
  %v5055 = vadd.f32 %v5015, %v5054
  %v5056 = vpop.f32.mrb[0].mxu0
  %v5057 = vpop.f32.mrb[0].mxu0
  %v5058 = vpop.f32.mrb[0].mxu0
  %5059 = vdwg.mxu0
  %5060 = vmatprep.subr.bf16.mxu0 0
  %5061 = vmatpush1.bf16.msra.mxu0 %v3964
  %5062 = vmatprep.subr.bf16.mxu0 0
  %5063 = vmatpush1.bf16.msra.mxu0 %v3965
  %5064 = vmatprep.subr.bf16.mxu0 0
  %5065 = vmatpush1.bf16.msra.mxu0 %v3966
  %5066 = vmatprep.subr.bf16.mxu0 0
  %5067 = vmatpush1.bf16.msra.mxu0 %v3967
  %5068 = vmatprep.subr.bf16.mxu0 0
  %5069 = vmatpush1.bf16.msra.mxu0 %v3968
  %5070 = vmatprep.subr.bf16.mxu0 0
  %5071 = vmatpush1.bf16.msra.mxu0 %v3969
  %5072 = vmatprep.subr.bf16.mxu0 0
  %5073 = vmatpush1.bf16.msra.mxu0 %v3970
  %5074 = vmatprep.subr.bf16.mxu0 0
  %5075 = vmatpush1.bf16.msra.mxu0 %v3971
  %5076 = vmatprep.subr.bf16.mxu0 0
  %5077 = vmatpush1.bf16.msra.mxu0 %v3972
  %5078 = vmatprep.subr.bf16.mxu0 0
  %5079 = vmatpush1.bf16.msra.mxu0 %v3973
  %5080 = vmatprep.subr.bf16.mxu0 0
  %5081 = vmatpush1.bf16.msra.mxu0 %v3974
  %5082 = vmatprep.subr.bf16.mxu0 0
  %5083 = vmatpush1.bf16.msra.mxu0 %v3975
  %5084 = vmatprep.subr.bf16.mxu0 0
  %5085 = vmatpush1.bf16.msra.mxu0 %v3976
  %5086 = vmatprep.subr.bf16.mxu0 0
  %5087 = vmatpush1.bf16.msra.mxu0 %v3977
  %5088 = vmatprep.subr.bf16.mxu0 0
  %5089 = vmatpush1.bf16.msra.mxu0 %v3978
  %5090 = vmatprep.subr.bf16.mxu0 0
  %5091 = vmatpush1.bf16.msra.mxu0 %v3979
  %5092 = vmatprep.mubr.bf16.mxu0 %v787
  %5093 = vmatmul.mubr.bf16.gmra.mrb[0].mxu0 %v786
  %v5094 = vpop.f32.mrb[0].mxu0
  %v5095 = vadd.f32 %v5055, %v5094
  %v5096 = vpop.f32.mrb[0].mxu0
  %v5097 = vpop.f32.mrb[0].mxu0
  %v5098 = vpop.f32.mrb[0].mxu0
  %5099 = vdwg.mxu0
  %5100 = vmatprep.subr.bf16.mxu0 0
  %5101 = vmatpush1.bf16.msra.mxu0 %v3980
  %5102 = vmatprep.subr.bf16.mxu0 0
  %5103 = vmatpush1.bf16.msra.mxu0 %v3981
  %5104 = vmatprep.subr.bf16.mxu0 0
  %5105 = vmatpush1.bf16.msra.mxu0 %v3982
  %5106 = vmatprep.subr.bf16.mxu0 0
  %5107 = vmatpush1.bf16.msra.mxu0 %v3983
  %5108 = vmatprep.subr.bf16.mxu0 0
  %5109 = vmatpush1.bf16.msra.mxu0 %v3984
  %5110 = vmatprep.subr.bf16.mxu0 0
  %5111 = vmatpush1.bf16.msra.mxu0 %v3985
  %5112 = vmatprep.subr.bf16.mxu0 0
  %5113 = vmatpush1.bf16.msra.mxu0 %v3986
  %5114 = vmatprep.subr.bf16.mxu0 0
  %5115 = vmatpush1.bf16.msra.mxu0 %v3987
  %5116 = vmatprep.subr.bf16.mxu0 0
  %5117 = vmatpush1.bf16.msra.mxu0 %v3988
  %5118 = vmatprep.subr.bf16.mxu0 0
  %5119 = vmatpush1.bf16.msra.mxu0 %v3989
  %5120 = vmatprep.subr.bf16.mxu0 0
  %5121 = vmatpush1.bf16.msra.mxu0 %v3990
  %5122 = vmatprep.subr.bf16.mxu0 0
  %5123 = vmatpush1.bf16.msra.mxu0 %v3991
  %5124 = vmatprep.subr.bf16.mxu0 0
  %5125 = vmatpush1.bf16.msra.mxu0 %v3992
  %5126 = vmatprep.subr.bf16.mxu0 0
  %5127 = vmatpush1.bf16.msra.mxu0 %v3993
  %5128 = vmatprep.subr.bf16.mxu0 0
  %5129 = vmatpush1.bf16.msra.mxu0 %v3994
  %5130 = vmatprep.subr.bf16.mxu0 0
  %5131 = vmatpush1.bf16.msra.mxu0 %v3995
  %5132 = vmatprep.mubr.bf16.mxu0 %v789
  %5133 = vmatmul.mubr.bf16.gmra.mrb[0].mxu0 %v788
  %v5134 = vpop.f32.mrb[0].mxu0
  %v5135 = vadd.f32 %v5095, %v5134
  %v5136 = vpop.f32.mrb[0].mxu0
  %v5137 = vpop.f32.mrb[0].mxu0
  %v5138 = vpop.f32.mrb[0].mxu0
  %5139 = vdwg.mxu0
  %5140 = vmatprep.subr.bf16.mxu0 0
  %5141 = vmatpush1.bf16.msra.mxu0 %v3996
  %5142 = vmatprep.subr.bf16.mxu0 0
  %5143 = vmatpush1.bf16.msra.mxu0 %v3997
  %5144 = vmatprep.subr.bf16.mxu0 0
  %5145 = vmatpush1.bf16.msra.mxu0 %v3998
  %5146 = vmatprep.subr.bf16.mxu0 0
  %5147 = vmatpush1.bf16.msra.mxu0 %v3999
  %5148 = vmatprep.subr.bf16.mxu0 0
  %5149 = vmatpush1.bf16.msra.mxu0 %v4000
  %5150 = vmatprep.subr.bf16.mxu0 0
  %5151 = vmatpush1.bf16.msra.mxu0 %v4001
  %5152 = vmatprep.subr.bf16.mxu0 0
  %5153 = vmatpush1.bf16.msra.mxu0 %v4002
  %5154 = vmatprep.subr.bf16.mxu0 0
  %5155 = vmatpush1.bf16.msra.mxu0 %v4003
  %5156 = vmatprep.subr.bf16.mxu0 0
  %5157 = vmatpush1.bf16.msra.mxu0 %v4004
  %5158 = vmatprep.subr.bf16.mxu0 0
  %5159 = vmatpush1.bf16.msra.mxu0 %v4005
  %5160 = vmatprep.subr.bf16.mxu0 0
  %5161 = vmatpush1.bf16.msra.mxu0 %v4006
  %5162 = vmatprep.subr.bf16.mxu0 0
  %5163 = vmatpush1.bf16.msra.mxu0 %v4007
  %5164 = vmatprep.subr.bf16.mxu0 0
  %5165 = vmatpush1.bf16.msra.mxu0 %v4008
  %5166 = vmatprep.subr.bf16.mxu0 0
  %5167 = vmatpush1.bf16.msra.mxu0 %v4009
  %5168 = vmatprep.subr.bf16.mxu0 0
  %5169 = vmatpush1.bf16.msra.mxu0 %v4010
  %5170 = vmatprep.subr.bf16.mxu0 0
  %5171 = vmatpush1.bf16.msra.mxu0 %v4011
  %5172 = vmatprep.mubr.bf16.mxu0 %v791
  %5173 = vmatmul.mubr.bf16.gmra.mrb[0].mxu0 %v790
  %v5174 = vpop.f32.mrb[0].mxu0
  %v5175 = vadd.f32 %v5135, %v5174
  %v5176 = vpop.f32.mrb[0].mxu0
  %v5177 = vpop.f32.mrb[0].mxu0
  %v5178 = vpop.f32.mrb[0].mxu0
  %5179 = vdwg.mxu0
  %5180 = vmatprep.subr.bf16.mxu0 0
  %5181 = vmatpush1.bf16.msra.mxu0 %v4012
  %5182 = vmatprep.subr.bf16.mxu0 0
  %5183 = vmatpush1.bf16.msra.mxu0 %v4013
  %5184 = vmatprep.subr.bf16.mxu0 0
  %5185 = vmatpush1.bf16.msra.mxu0 %v4014
  %5186 = vmatprep.subr.bf16.mxu0 0
  %5187 = vmatpush1.bf16.msra.mxu0 %v4015
  %5188 = vmatprep.subr.bf16.mxu0 0
  %5189 = vmatpush1.bf16.msra.mxu0 %v4016
  %5190 = vmatprep.subr.bf16.mxu0 0
  %5191 = vmatpush1.bf16.msra.mxu0 %v4017
  %5192 = vmatprep.subr.bf16.mxu0 0
  %5193 = vmatpush1.bf16.msra.mxu0 %v4018
  %5194 = vmatprep.subr.bf16.mxu0 0
  %5195 = vmatpush1.bf16.msra.mxu0 %v4019
  %5196 = vmatprep.subr.bf16.mxu0 0
  %5197 = vmatpush1.bf16.msra.mxu0 %v4020
  %5198 = vmatprep.subr.bf16.mxu0 0
  %5199 = vmatpush1.bf16.msra.mxu0 %v4021
  %5200 = vmatprep.subr.bf16.mxu0 0
  %5201 = vmatpush1.bf16.msra.mxu0 %v4022
  %5202 = vmatprep.subr.bf16.mxu0 0
  %5203 = vmatpush1.bf16.msra.mxu0 %v4023
  %5204 = vmatprep.subr.bf16.mxu0 0
  %5205 = vmatpush1.bf16.msra.mxu0 %v4024
  %5206 = vmatprep.subr.bf16.mxu0 0
  %5207 = vmatpush1.bf16.msra.mxu0 %v4025
  %5208 = vmatprep.subr.bf16.mxu0 0
  %5209 = vmatpush1.bf16.msra.mxu0 %v4026
  %5210 = vmatprep.subr.bf16.mxu0 0
  %5211 = vmatpush1.bf16.msra.mxu0 %v4027
  %5212 = vmatprep.mubr.bf16.mxu0 %v793
  %5213 = vmatmul.mubr.bf16.gmra.mrb[0].mxu0 %v792
  %v5214 = vpop.f32.mrb[0].mxu0
  %v5215 = vadd.f32 %v5175, %v5214
  %v5216 = vpop.f32.mrb[0].mxu0
  %v5217 = vpop.f32.mrb[0].mxu0
  %v5218 = vpop.f32.mrb[0].mxu0
  %5219 = vdwg.mxu0
  %5220 = vmatprep.subr.bf16.mxu0 0
  %5221 = vmatpush1.bf16.msra.mxu0 %v4028
  %5222 = vmatprep.subr.bf16.mxu0 0
  %5223 = vmatpush1.bf16.msra.mxu0 %v4029
  %5224 = vmatprep.subr.bf16.mxu0 0
  %5225 = vmatpush1.bf16.msra.mxu0 %v4030
  %5226 = vmatprep.subr.bf16.mxu0 0
  %5227 = vmatpush1.bf16.msra.mxu0 %v4031
  %5228 = vmatprep.subr.bf16.mxu0 0
  %5229 = vmatpush1.bf16.msra.mxu0 %v4032
  %5230 = vmatprep.subr.bf16.mxu0 0
  %5231 = vmatpush1.bf16.msra.mxu0 %v4033
  %5232 = vmatprep.subr.bf16.mxu0 0
  %5233 = vmatpush1.bf16.msra.mxu0 %v4034
  %5234 = vmatprep.subr.bf16.mxu0 0
  %5235 = vmatpush1.bf16.msra.mxu0 %v4035
  %5236 = vmatprep.subr.bf16.mxu0 0
  %5237 = vmatpush1.bf16.msra.mxu0 %v4036
  %5238 = vmatprep.subr.bf16.mxu0 0
  %5239 = vmatpush1.bf16.msra.mxu0 %v4037
  %5240 = vmatprep.subr.bf16.mxu0 0
  %5241 = vmatpush1.bf16.msra.mxu0 %v4038
  %5242 = vmatprep.subr.bf16.mxu0 0
  %5243 = vmatpush1.bf16.msra.mxu0 %v4039
  %5244 = vmatprep.subr.bf16.mxu0 0
  %5245 = vmatpush1.bf16.msra.mxu0 %v4040
  %5246 = vmatprep.subr.bf16.mxu0 0
  %5247 = vmatpush1.bf16.msra.mxu0 %v4041
  %5248 = vmatprep.subr.bf16.mxu0 0
  %5249 = vmatpush1.bf16.msra.mxu0 %v4042
  %5250 = vmatprep.subr.bf16.mxu0 0
  %5251 = vmatpush1.bf16.msra.mxu0 %v4043
  %5252 = vmatprep.mubr.bf16.mxu0 %v795
  %5253 = vmatmul.mubr.bf16.gmra.mrb[0].mxu0 %v794
  %v5254 = vpop.f32.mrb[0].mxu0
  %v5255 = vadd.f32 %v5215, %v5254
  %v5256 = vpop.f32.mrb[0].mxu0
  %v5257 = vpop.f32.mrb[0].mxu0
  %v5258 = vpop.f32.mrb[0].mxu0
  %5259 = vdwg.mxu0
  %5260 = vmatprep.subr.bf16.mxu0 0
  %5261 = vmatpush1.bf16.msra.mxu0 %v4044
  %5262 = vmatprep.subr.bf16.mxu0 0
  %5263 = vmatpush1.bf16.msra.mxu0 %v4045
  %5264 = vmatprep.subr.bf16.mxu0 0
  %5265 = vmatpush1.bf16.msra.mxu0 %v4046
  %5266 = vmatprep.subr.bf16.mxu0 0
  %5267 = vmatpush1.bf16.msra.mxu0 %v4047
  %5268 = vmatprep.subr.bf16.mxu0 0
  %5269 = vmatpush1.bf16.msra.mxu0 %v4048
  %5270 = vmatprep.subr.bf16.mxu0 0
  %5271 = vmatpush1.bf16.msra.mxu0 %v4049
  %5272 = vmatprep.subr.bf16.mxu0 0
  %5273 = vmatpush1.bf16.msra.mxu0 %v4050
  %5274 = vmatprep.subr.bf16.mxu0 0
  %5275 = vmatpush1.bf16.msra.mxu0 %v4051
  %5276 = vmatprep.subr.bf16.mxu0 0
  %5277 = vmatpush1.bf16.msra.mxu0 %v4052
  %5278 = vmatprep.subr.bf16.mxu0 0
  %5279 = vmatpush1.bf16.msra.mxu0 %v4053
  %5280 = vmatprep.subr.bf16.mxu0 0
  %5281 = vmatpush1.bf16.msra.mxu0 %v4054
  %5282 = vmatprep.subr.bf16.mxu0 0
  %5283 = vmatpush1.bf16.msra.mxu0 %v4055
  %5284 = vmatprep.subr.bf16.mxu0 0
  %5285 = vmatpush1.bf16.msra.mxu0 %v4056
  %5286 = vmatprep.subr.bf16.mxu0 0
  %5287 = vmatpush1.bf16.msra.mxu0 %v4057
  %5288 = vmatprep.subr.bf16.mxu0 0
  %5289 = vmatpush1.bf16.msra.mxu0 %v4058
  %5290 = vmatprep.subr.bf16.mxu0 0
  %5291 = vmatpush1.bf16.msra.mxu0 %v4059
  %5292 = vmatprep.mubr.bf16.mxu0 %v797
  %5293 = vmatmul.mubr.bf16.gmra.mrb[0].mxu0 %v796
  %v5294 = vpop.f32.mrb[0].mxu0
  %v5295 = vadd.f32 %v5255, %v5294
  %v5296 = vpop.f32.mrb[0].mxu0
  %v5297 = vpop.f32.mrb[0].mxu0
  %v5298 = vpop.f32.mrb[0].mxu0
  %5299 = vdwg.mxu0
  %5300 = vmatprep.subr.bf16.mxu0 0
  %5301 = vmatpush1.bf16.msra.mxu0 %v4060
  %5302 = vmatprep.subr.bf16.mxu0 0
  %5303 = vmatpush1.bf16.msra.mxu0 %v4061
  %5304 = vmatprep.subr.bf16.mxu0 0
  %5305 = vmatpush1.bf16.msra.mxu0 %v4062
  %5306 = vmatprep.subr.bf16.mxu0 0
  %5307 = vmatpush1.bf16.msra.mxu0 %v4063
  %5308 = vmatprep.subr.bf16.mxu0 0
  %5309 = vmatpush1.bf16.msra.mxu0 %v4064
  %5310 = vmatprep.subr.bf16.mxu0 0
  %5311 = vmatpush1.bf16.msra.mxu0 %v4065
  %5312 = vmatprep.subr.bf16.mxu0 0
  %5313 = vmatpush1.bf16.msra.mxu0 %v4066
  %5314 = vmatprep.subr.bf16.mxu0 0
  %5315 = vmatpush1.bf16.msra.mxu0 %v4067
  %5316 = vmatprep.subr.bf16.mxu0 0
  %5317 = vmatpush1.bf16.msra.mxu0 %v4068
  %5318 = vmatprep.subr.bf16.mxu0 0
  %5319 = vmatpush1.bf16.msra.mxu0 %v4069
  %5320 = vmatprep.subr.bf16.mxu0 0
  %5321 = vmatpush1.bf16.msra.mxu0 %v4070
  %5322 = vmatprep.subr.bf16.mxu0 0
  %5323 = vmatpush1.bf16.msra.mxu0 %v4071
  %5324 = vmatprep.subr.bf16.mxu0 0
  %5325 = vmatpush1.bf16.msra.mxu0 %v4072
  %5326 = vmatprep.subr.bf16.mxu0 0
  %5327 = vmatpush1.bf16.msra.mxu0 %v4073
  %5328 = vmatprep.subr.bf16.mxu0 0
  %5329 = vmatpush1.bf16.msra.mxu0 %v4074
  %5330 = vmatprep.subr.bf16.mxu0 0
  %5331 = vmatpush1.bf16.msra.mxu0 %v4075
  %5332 = vmatprep.mubr.bf16.mxu0 %v799
  %5333 = vmatmul.mubr.bf16.gmra.mrb[0].mxu0 %v798
  %v5334 = vpop.f32.mrb[0].mxu0
  %v5335 = vadd.f32 %v5295, %v5334
  %v5336 = vpop.f32.mrb[0].mxu0
  %v5337 = vpop.f32.mrb[0].mxu0
  %v5338 = vpop.f32.mrb[0].mxu0
  %5339 = vdwg.mxu0
  %5340 = vmatprep.subr.bf16.mxu0 0
  %5341 = vmatpush1.bf16.msra.mxu0 %v4076
  %5342 = vmatprep.subr.bf16.mxu0 0
  %5343 = vmatpush1.bf16.msra.mxu0 %v4077
  %5344 = vmatprep.subr.bf16.mxu0 0
  %5345 = vmatpush1.bf16.msra.mxu0 %v4078
  %5346 = vmatprep.subr.bf16.mxu0 0
  %5347 = vmatpush1.bf16.msra.mxu0 %v4079
  %5348 = vmatprep.subr.bf16.mxu0 0
  %5349 = vmatpush1.bf16.msra.mxu0 %v4080
  %5350 = vmatprep.subr.bf16.mxu0 0
  %5351 = vmatpush1.bf16.msra.mxu0 %v4081
  %5352 = vmatprep.subr.bf16.mxu0 0
  %5353 = vmatpush1.bf16.msra.mxu0 %v4082
  %5354 = vmatprep.subr.bf16.mxu0 0
  %5355 = vmatpush1.bf16.msra.mxu0 %v4083
  %5356 = vmatprep.subr.bf16.mxu0 0
  %5357 = vmatpush1.bf16.msra.mxu0 %v4084
  %5358 = vmatprep.subr.bf16.mxu0 0
  %5359 = vmatpush1.bf16.msra.mxu0 %v4085
  %5360 = vmatprep.subr.bf16.mxu0 0
  %5361 = vmatpush1.bf16.msra.mxu0 %v4086
  %5362 = vmatprep.subr.bf16.mxu0 0
  %5363 = vmatpush1.bf16.msra.mxu0 %v4087
  %5364 = vmatprep.subr.bf16.mxu0 0
  %5365 = vmatpush1.bf16.msra.mxu0 %v4088
  %5366 = vmatprep.subr.bf16.mxu0 0
  %5367 = vmatpush1.bf16.msra.mxu0 %v4089
  %5368 = vmatprep.subr.bf16.mxu0 0
  %5369 = vmatpush1.bf16.msra.mxu0 %v4090
  %5370 = vmatprep.subr.bf16.mxu0 0
  %5371 = vmatpush1.bf16.msra.mxu0 %v4091
  %5372 = vmatprep.mubr.bf16.mxu0 %v801
  %5373 = vmatmul.mubr.bf16.gmra.mrb[0].mxu0 %v800
  %v5374 = vpop.f32.mrb[0].mxu0
  %v5375 = vadd.f32 %v5335, %v5374
  %v5376 = vpop.f32.mrb[0].mxu0
  %v5377 = vpop.f32.mrb[0].mxu0
  %v5378 = vpop.f32.mrb[0].mxu0
  %5379 = vdwg.mxu0
  %5380 = vmatprep.subr.bf16.mxu0 0
  %5381 = vmatpush1.bf16.msra.mxu0 %v4092
  %5382 = vmatprep.subr.bf16.mxu0 0
  %5383 = vmatpush1.bf16.msra.mxu0 %v4093
  %5384 = vmatprep.subr.bf16.mxu0 0
  %5385 = vmatpush1.bf16.msra.mxu0 %v4094
  %5386 = vmatprep.subr.bf16.mxu0 0
  %5387 = vmatpush1.bf16.msra.mxu0 %v4095
  %5388 = vmatprep.subr.bf16.mxu0 0
  %5389 = vmatpush1.bf16.msra.mxu0 %v4096
  %5390 = vmatprep.subr.bf16.mxu0 0
  %5391 = vmatpush1.bf16.msra.mxu0 %v4097
  %5392 = vmatprep.subr.bf16.mxu0 0
  %5393 = vmatpush1.bf16.msra.mxu0 %v4098
  %5394 = vmatprep.subr.bf16.mxu0 0
  %5395 = vmatpush1.bf16.msra.mxu0 %v4099
  %5396 = vmatprep.subr.bf16.mxu0 0
  %5397 = vmatpush1.bf16.msra.mxu0 %v4100
  %5398 = vmatprep.subr.bf16.mxu0 0
  %5399 = vmatpush1.bf16.msra.mxu0 %v4101
  %5400 = vmatprep.subr.bf16.mxu0 0
  %5401 = vmatpush1.bf16.msra.mxu0 %v4102
  %5402 = vmatprep.subr.bf16.mxu0 0
  %5403 = vmatpush1.bf16.msra.mxu0 %v4103
  %5404 = vmatprep.subr.bf16.mxu0 0
  %5405 = vmatpush1.bf16.msra.mxu0 %v4104
  %5406 = vmatprep.subr.bf16.mxu0 0
  %5407 = vmatpush1.bf16.msra.mxu0 %v4105
  %5408 = vmatprep.subr.bf16.mxu0 0
  %5409 = vmatpush1.bf16.msra.mxu0 %v4106
  %5410 = vmatprep.subr.bf16.mxu0 0
  %5411 = vmatpush1.bf16.msra.mxu0 %v4107
  %5412 = vmatprep.mubr.bf16.mxu0 %v803
  %5413 = vmatmul.mubr.bf16.gmra.mrb[0].mxu0 %v802
  %v5414 = vpop.f32.mrb[0].mxu0
  %v5415 = vadd.f32 %v5375, %v5414
  %v5416 = vpop.f32.mrb[0].mxu0
  %v5417 = vpop.f32.mrb[0].mxu0
  %v5418 = vpop.f32.mrb[0].mxu0
  %5419 = vdwg.mxu0
  %5420 = vmatprep.subr.bf16.mxu0 0
  %5421 = vmatpush1.bf16.msra.mxu0 %v4108
  %5422 = vmatprep.subr.bf16.mxu0 0
  %5423 = vmatpush1.bf16.msra.mxu0 %v4109
  %5424 = vmatprep.subr.bf16.mxu0 0
  %5425 = vmatpush1.bf16.msra.mxu0 %v4110
  %5426 = vmatprep.subr.bf16.mxu0 0
  %5427 = vmatpush1.bf16.msra.mxu0 %v4111
  %5428 = vmatprep.subr.bf16.mxu0 0
  %5429 = vmatpush1.bf16.msra.mxu0 %v4112
  %5430 = vmatprep.subr.bf16.mxu0 0
  %5431 = vmatpush1.bf16.msra.mxu0 %v4113
  %5432 = vmatprep.subr.bf16.mxu0 0
  %5433 = vmatpush1.bf16.msra.mxu0 %v4114
  %5434 = vmatprep.subr.bf16.mxu0 0
  %5435 = vmatpush1.bf16.msra.mxu0 %v4115
  %5436 = vmatprep.subr.bf16.mxu0 0
  %5437 = vmatpush1.bf16.msra.mxu0 %v4116
  %5438 = vmatprep.subr.bf16.mxu0 0
  %5439 = vmatpush1.bf16.msra.mxu0 %v4117
  %5440 = vmatprep.subr.bf16.mxu0 0
  %5441 = vmatpush1.bf16.msra.mxu0 %v4118
  %5442 = vmatprep.subr.bf16.mxu0 0
  %5443 = vmatpush1.bf16.msra.mxu0 %v4119
  %5444 = vmatprep.subr.bf16.mxu0 0
  %5445 = vmatpush1.bf16.msra.mxu0 %v4120
  %5446 = vmatprep.subr.bf16.mxu0 0
  %5447 = vmatpush1.bf16.msra.mxu0 %v4121
  %5448 = vmatprep.subr.bf16.mxu0 0
  %5449 = vmatpush1.bf16.msra.mxu0 %v4122
  %5450 = vmatprep.subr.bf16.mxu0 0
  %5451 = vmatpush1.bf16.msra.mxu0 %v4123
  %5452 = vmatprep.mubr.bf16.mxu0 %v805
  %5453 = vmatmul.mubr.bf16.gmra.mrb[0].mxu0 %v804
  %v5454 = vpop.f32.mrb[0].mxu0
  %v5455 = vadd.f32 %v5415, %v5454
  %v5456 = vpop.f32.mrb[0].mxu0
  %v5457 = vpop.f32.mrb[0].mxu0
  %v5458 = vpop.f32.mrb[0].mxu0
  %5459 = vdwg.mxu0
  %5460 = vmatprep.subr.bf16.mxu0 0
  %5461 = vmatpush1.bf16.msra.mxu0 %v4124
  %5462 = vmatprep.subr.bf16.mxu0 0
  %5463 = vmatpush1.bf16.msra.mxu0 %v4125
  %5464 = vmatprep.subr.bf16.mxu0 0
  %5465 = vmatpush1.bf16.msra.mxu0 %v4126
  %5466 = vmatprep.subr.bf16.mxu0 0
  %5467 = vmatpush1.bf16.msra.mxu0 %v4127
  %5468 = vmatprep.subr.bf16.mxu0 0
  %5469 = vmatpush1.bf16.msra.mxu0 %v4128
  %5470 = vmatprep.subr.bf16.mxu0 0
  %5471 = vmatpush1.bf16.msra.mxu0 %v4129
  %5472 = vmatprep.subr.bf16.mxu0 0
  %5473 = vmatpush1.bf16.msra.mxu0 %v4130
  %5474 = vmatprep.subr.bf16.mxu0 0
  %5475 = vmatpush1.bf16.msra.mxu0 %v4131
  %5476 = vmatprep.subr.bf16.mxu0 0
  %5477 = vmatpush1.bf16.msra.mxu0 %v4132
  %5478 = vmatprep.subr.bf16.mxu0 0
  %5479 = vmatpush1.bf16.msra.mxu0 %v4133
  %5480 = vmatprep.subr.bf16.mxu0 0
  %5481 = vmatpush1.bf16.msra.mxu0 %v4134
  %5482 = vmatprep.subr.bf16.mxu0 0
  %5483 = vmatpush1.bf16.msra.mxu0 %v4135
  %5484 = vmatprep.subr.bf16.mxu0 0
  %5485 = vmatpush1.bf16.msra.mxu0 %v4136
  %5486 = vmatprep.subr.bf16.mxu0 0
  %5487 = vmatpush1.bf16.msra.mxu0 %v4137
  %5488 = vmatprep.subr.bf16.mxu0 0
  %5489 = vmatpush1.bf16.msra.mxu0 %v4138
  %5490 = vmatprep.subr.bf16.mxu0 0
  %5491 = vmatpush1.bf16.msra.mxu0 %v4139
  %5492 = vmatprep.mubr.bf16.mxu0 %v807
  %5493 = vmatmul.mubr.bf16.gmra.mrb[0].mxu0 %v806
  %v5494 = vpop.f32.mrb[0].mxu0
  %v5495 = vadd.f32 %v5455, %v5494
  %v5496 = vpop.f32.mrb[0].mxu0
  %v5497 = vpop.f32.mrb[0].mxu0
  %v5498 = vpop.f32.mrb[0].mxu0
  %5499 = vdwg.mxu0
  %5500 = vmatprep.subr.bf16.mxu0 0
  %5501 = vmatpush1.bf16.msra.mxu0 %v4140
  %5502 = vmatprep.subr.bf16.mxu0 0
  %5503 = vmatpush1.bf16.msra.mxu0 %v4141
  %5504 = vmatprep.subr.bf16.mxu0 0
  %5505 = vmatpush1.bf16.msra.mxu0 %v4142
  %5506 = vmatprep.subr.bf16.mxu0 0
  %5507 = vmatpush1.bf16.msra.mxu0 %v4143
  %5508 = vmatprep.subr.bf16.mxu0 0
  %5509 = vmatpush1.bf16.msra.mxu0 %v4144
  %5510 = vmatprep.subr.bf16.mxu0 0
  %5511 = vmatpush1.bf16.msra.mxu0 %v4145
  %5512 = vmatprep.subr.bf16.mxu0 0
  %5513 = vmatpush1.bf16.msra.mxu0 %v4146
  %5514 = vmatprep.subr.bf16.mxu0 0
  %5515 = vmatpush1.bf16.msra.mxu0 %v4147
  %5516 = vmatprep.subr.bf16.mxu0 0
  %5517 = vmatpush1.bf16.msra.mxu0 %v4148
  %5518 = vmatprep.subr.bf16.mxu0 0
  %5519 = vmatpush1.bf16.msra.mxu0 %v4149
  %5520 = vmatprep.subr.bf16.mxu0 0
  %5521 = vmatpush1.bf16.msra.mxu0 %v4150
  %5522 = vmatprep.subr.bf16.mxu0 0
  %5523 = vmatpush1.bf16.msra.mxu0 %v4151
  %5524 = vmatprep.subr.bf16.mxu0 0
  %5525 = vmatpush1.bf16.msra.mxu0 %v4152
  %5526 = vmatprep.subr.bf16.mxu0 0
  %5527 = vmatpush1.bf16.msra.mxu0 %v4153
  %5528 = vmatprep.subr.bf16.mxu0 0
  %5529 = vmatpush1.bf16.msra.mxu0 %v4154
  %5530 = vmatprep.subr.bf16.mxu0 0
  %5531 = vmatpush1.bf16.msra.mxu0 %v4155
  %5532 = vmatprep.mubr.bf16.mxu0 %v809
  %5533 = vmatmul.mubr.bf16.gmra.mrb[0].mxu0 %v808
  %v5534 = vpop.f32.mrb[0].mxu0
  %v5535 = vadd.f32 %v5495, %v5534
  %v5536 = vpop.f32.mrb[0].mxu0
  %v5537 = vpop.f32.mrb[0].mxu0
  %v5538 = vpop.f32.mrb[0].mxu0
  %5539 = vdwg.mxu0
  %5540 = vmatprep.subr.bf16.mxu0 0
  %5541 = vmatpush1.bf16.msra.mxu0 %v4156
  %5542 = vmatprep.subr.bf16.mxu0 0
  %5543 = vmatpush1.bf16.msra.mxu0 %v4157
  %5544 = vmatprep.subr.bf16.mxu0 0
  %5545 = vmatpush1.bf16.msra.mxu0 %v4158
  %5546 = vmatprep.subr.bf16.mxu0 0
  %5547 = vmatpush1.bf16.msra.mxu0 %v4159
  %5548 = vmatprep.subr.bf16.mxu0 0
  %5549 = vmatpush1.bf16.msra.mxu0 %v4160
  %5550 = vmatprep.subr.bf16.mxu0 0
  %5551 = vmatpush1.bf16.msra.mxu0 %v4161
  %5552 = vmatprep.subr.bf16.mxu0 0
  %5553 = vmatpush1.bf16.msra.mxu0 %v4162
  %5554 = vmatprep.subr.bf16.mxu0 0
  %5555 = vmatpush1.bf16.msra.mxu0 %v4163
  %5556 = vmatprep.subr.bf16.mxu0 0
  %5557 = vmatpush1.bf16.msra.mxu0 %v4164
  %5558 = vmatprep.subr.bf16.mxu0 0
  %5559 = vmatpush1.bf16.msra.mxu0 %v4165
  %5560 = vmatprep.subr.bf16.mxu0 0
  %5561 = vmatpush1.bf16.msra.mxu0 %v4166
  %5562 = vmatprep.subr.bf16.mxu0 0
  %5563 = vmatpush1.bf16.msra.mxu0 %v4167
  %5564 = vmatprep.subr.bf16.mxu0 0
  %5565 = vmatpush1.bf16.msra.mxu0 %v4168
  %5566 = vmatprep.subr.bf16.mxu0 0
  %5567 = vmatpush1.bf16.msra.mxu0 %v4169
  %5568 = vmatprep.subr.bf16.mxu0 0
  %5569 = vmatpush1.bf16.msra.mxu0 %v4170
  %5570 = vmatprep.subr.bf16.mxu0 0
  %5571 = vmatpush1.bf16.msra.mxu0 %v4171
  %5572 = vmatprep.mubr.bf16.mxu0 %v811
  %5573 = vmatmul.mubr.bf16.gmra.mrb[0].mxu0 %v810
  %v5574 = vpop.f32.mrb[0].mxu0
  %v5575 = vadd.f32 %v5535, %v5574
  %v5576 = vpop.f32.mrb[0].mxu0
  %v5577 = vpop.f32.mrb[0].mxu0
  %v5578 = vpop.f32.mrb[0].mxu0
  %5579 = vdwg.mxu0
  %5580 = vmatprep.subr.bf16.mxu0 0
  %5581 = vmatpush1.bf16.msra.mxu0 %v4172
  %5582 = vmatprep.subr.bf16.mxu0 0
  %5583 = vmatpush1.bf16.msra.mxu0 %v4173
  %5584 = vmatprep.subr.bf16.mxu0 0
  %5585 = vmatpush1.bf16.msra.mxu0 %v4174
  %5586 = vmatprep.subr.bf16.mxu0 0
  %5587 = vmatpush1.bf16.msra.mxu0 %v4175
  %5588 = vmatprep.subr.bf16.mxu0 0
  %5589 = vmatpush1.bf16.msra.mxu0 %v4176
  %5590 = vmatprep.subr.bf16.mxu0 0
  %5591 = vmatpush1.bf16.msra.mxu0 %v4177
  %5592 = vmatprep.subr.bf16.mxu0 0
  %5593 = vmatpush1.bf16.msra.mxu0 %v4178
  %5594 = vmatprep.subr.bf16.mxu0 0
  %5595 = vmatpush1.bf16.msra.mxu0 %v4179
  %5596 = vmatprep.subr.bf16.mxu0 0
  %5597 = vmatpush1.bf16.msra.mxu0 %v4180
  %5598 = vmatprep.subr.bf16.mxu0 0
  %5599 = vmatpush1.bf16.msra.mxu0 %v4181
  %5600 = vmatprep.subr.bf16.mxu0 0
  %5601 = vmatpush1.bf16.msra.mxu0 %v4182
  %5602 = vmatprep.subr.bf16.mxu0 0
  %5603 = vmatpush1.bf16.msra.mxu0 %v4183
  %5604 = vmatprep.subr.bf16.mxu0 0
  %5605 = vmatpush1.bf16.msra.mxu0 %v4184
  %5606 = vmatprep.subr.bf16.mxu0 0
  %5607 = vmatpush1.bf16.msra.mxu0 %v4185
  %5608 = vmatprep.subr.bf16.mxu0 0
  %5609 = vmatpush1.bf16.msra.mxu0 %v4186
  %5610 = vmatprep.subr.bf16.mxu0 0
  %5611 = vmatpush1.bf16.msra.mxu0 %v4187
  %5612 = vmatprep.mubr.bf16.mxu0 %v813
  %5613 = vmatmul.mubr.bf16.gmra.mrb[0].mxu0 %v812
  %v5614 = vpop.f32.mrb[0].mxu0
  %v5615 = vadd.f32 %v5575, %v5614
  %v5616 = vpop.f32.mrb[0].mxu0
  %v5617 = vpop.f32.mrb[0].mxu0
  %v5618 = vpop.f32.mrb[0].mxu0
  %5619 = vdwg.mxu0
  %5620 = vmatprep.subr.bf16.mxu0 0
  %5621 = vmatpush1.bf16.msra.mxu0 %v4188
  %5622 = vmatprep.subr.bf16.mxu0 0
  %5623 = vmatpush1.bf16.msra.mxu0 %v4189
  %5624 = vmatprep.subr.bf16.mxu0 0
  %5625 = vmatpush1.bf16.msra.mxu0 %v4190
  %5626 = vmatprep.subr.bf16.mxu0 0
  %5627 = vmatpush1.bf16.msra.mxu0 %v4191
  %5628 = vmatprep.subr.bf16.mxu0 0
  %5629 = vmatpush1.bf16.msra.mxu0 %v4192
  %5630 = vmatprep.subr.bf16.mxu0 0
  %5631 = vmatpush1.bf16.msra.mxu0 %v4193
  %5632 = vmatprep.subr.bf16.mxu0 0
  %5633 = vmatpush1.bf16.msra.mxu0 %v4194
  %5634 = vmatprep.subr.bf16.mxu0 0
  %5635 = vmatpush1.bf16.msra.mxu0 %v4195
  %5636 = vmatprep.subr.bf16.mxu0 0
  %5637 = vmatpush1.bf16.msra.mxu0 %v4196
  %5638 = vmatprep.subr.bf16.mxu0 0
  %5639 = vmatpush1.bf16.msra.mxu0 %v4197
  %5640 = vmatprep.subr.bf16.mxu0 0
  %5641 = vmatpush1.bf16.msra.mxu0 %v4198
  %5642 = vmatprep.subr.bf16.mxu0 0
  %5643 = vmatpush1.bf16.msra.mxu0 %v4199
  %5644 = vmatprep.subr.bf16.mxu0 0
  %5645 = vmatpush1.bf16.msra.mxu0 %v4200
  %5646 = vmatprep.subr.bf16.mxu0 0
  %5647 = vmatpush1.bf16.msra.mxu0 %v4201
  %5648 = vmatprep.subr.bf16.mxu0 0
  %5649 = vmatpush1.bf16.msra.mxu0 %v4202
  %5650 = vmatprep.subr.bf16.mxu0 0
  %5651 = vmatpush1.bf16.msra.mxu0 %v4203
  %5652 = vmatprep.mubr.bf16.mxu0 %v815
  %5653 = vmatmul.mubr.bf16.gmra.mrb[0].mxu0 %v814
  %v5654 = vpop.f32.mrb[0].mxu0
  %v5655 = vadd.f32 %v5615, %v5654
  %v5656 = vpop.f32.mrb[0].mxu0
  %v5657 = vpop.f32.mrb[0].mxu0
  %v5658 = vpop.f32.mrb[0].mxu0
  %5659 = vdwg.mxu0
  %5660 = vmatprep.subr.bf16.mxu0 0
  %5661 = vmatpush1.bf16.msra.mxu0 %v4204
  %5662 = vmatprep.subr.bf16.mxu0 0
  %5663 = vmatpush1.bf16.msra.mxu0 %v4205
  %5664 = vmatprep.subr.bf16.mxu0 0
  %5665 = vmatpush1.bf16.msra.mxu0 %v4206
  %5666 = vmatprep.subr.bf16.mxu0 0
  %5667 = vmatpush1.bf16.msra.mxu0 %v4207
  %5668 = vmatprep.subr.bf16.mxu0 0
  %5669 = vmatpush1.bf16.msra.mxu0 %v4208
  %5670 = vmatprep.subr.bf16.mxu0 0
  %5671 = vmatpush1.bf16.msra.mxu0 %v4209
  %5672 = vmatprep.subr.bf16.mxu0 0
  %5673 = vmatpush1.bf16.msra.mxu0 %v4210
  %5674 = vmatprep.subr.bf16.mxu0 0
  %5675 = vmatpush1.bf16.msra.mxu0 %v4211
  %5676 = vmatprep.subr.bf16.mxu0 0
  %5677 = vmatpush1.bf16.msra.mxu0 %v4212
  %5678 = vmatprep.subr.bf16.mxu0 0
  %5679 = vmatpush1.bf16.msra.mxu0 %v4213
  %5680 = vmatprep.subr.bf16.mxu0 0
  %5681 = vmatpush1.bf16.msra.mxu0 %v4214
  %5682 = vmatprep.subr.bf16.mxu0 0
  %5683 = vmatpush1.bf16.msra.mxu0 %v4215
  %5684 = vmatprep.subr.bf16.mxu0 0
  %5685 = vmatpush1.bf16.msra.mxu0 %v4216
  %5686 = vmatprep.subr.bf16.mxu0 0
  %5687 = vmatpush1.bf16.msra.mxu0 %v4217
  %5688 = vmatprep.subr.bf16.mxu0 0
  %5689 = vmatpush1.bf16.msra.mxu0 %v4218
  %5690 = vmatprep.subr.bf16.mxu0 0
  %5691 = vmatpush1.bf16.msra.mxu0 %v4219
  %5692 = vmatprep.mubr.bf16.mxu0 %v817
  %5693 = vmatmul.mubr.bf16.gmra.mrb[0].mxu0 %v816
  %v5694 = vpop.f32.mrb[0].mxu0
  %v5695 = vadd.f32 %v5655, %v5694
  %v5696 = vpop.f32.mrb[0].mxu0
  %v5697 = vpop.f32.mrb[0].mxu0
  %v5698 = vpop.f32.mrb[0].mxu0
  %5699 = vdwg.mxu0
  %5700 = vmatprep.subr.bf16.mxu0 0
  %5701 = vmatpush1.bf16.msra.mxu0 %v4220
  %5702 = vmatprep.subr.bf16.mxu0 0
  %5703 = vmatpush1.bf16.msra.mxu0 %v4221
  %5704 = vmatprep.subr.bf16.mxu0 0
  %5705 = vmatpush1.bf16.msra.mxu0 %v4222
  %5706 = vmatprep.subr.bf16.mxu0 0
  %5707 = vmatpush1.bf16.msra.mxu0 %v4223
  %5708 = vmatprep.subr.bf16.mxu0 0
  %5709 = vmatpush1.bf16.msra.mxu0 %v4224
  %5710 = vmatprep.subr.bf16.mxu0 0
  %5711 = vmatpush1.bf16.msra.mxu0 %v4225
  %5712 = vmatprep.subr.bf16.mxu0 0
  %5713 = vmatpush1.bf16.msra.mxu0 %v4226
  %5714 = vmatprep.subr.bf16.mxu0 0
  %5715 = vmatpush1.bf16.msra.mxu0 %v4227
  %5716 = vmatprep.subr.bf16.mxu0 0
  %5717 = vmatpush1.bf16.msra.mxu0 %v4228
  %5718 = vmatprep.subr.bf16.mxu0 0
  %5719 = vmatpush1.bf16.msra.mxu0 %v4229
  %5720 = vmatprep.subr.bf16.mxu0 0
  %5721 = vmatpush1.bf16.msra.mxu0 %v4230
  %5722 = vmatprep.subr.bf16.mxu0 0
  %5723 = vmatpush1.bf16.msra.mxu0 %v4231
  %5724 = vmatprep.subr.bf16.mxu0 0
  %5725 = vmatpush1.bf16.msra.mxu0 %v4232
  %5726 = vmatprep.subr.bf16.mxu0 0
  %5727 = vmatpush1.bf16.msra.mxu0 %v4233
  %5728 = vmatprep.subr.bf16.mxu0 0
  %5729 = vmatpush1.bf16.msra.mxu0 %v4234
  %5730 = vmatprep.subr.bf16.mxu0 0
  %5731 = vmatpush1.bf16.msra.mxu0 %v4235
  %5732 = vmatprep.mubr.bf16.mxu0 %v819
  %5733 = vmatmul.mubr.bf16.gmra.mrb[0].mxu0 %v818
  %v5734 = vpop.f32.mrb[0].mxu0
  %v5735 = vadd.f32 %v5695, %v5734
  %v5736 = vpop.f32.mrb[0].mxu0
  %v5737 = vpop.f32.mrb[0].mxu0
  %v5738 = vpop.f32.mrb[0].mxu0
  %5739 = vdwg.mxu0
  %5740 = vmatprep.subr.bf16.mxu0 0
  %5741 = vmatpush1.bf16.msra.mxu0 %v4236
  %5742 = vmatprep.subr.bf16.mxu0 0
  %5743 = vmatpush1.bf16.msra.mxu0 %v4237
  %5744 = vmatprep.subr.bf16.mxu0 0
  %5745 = vmatpush1.bf16.msra.mxu0 %v4238
  %5746 = vmatprep.subr.bf16.mxu0 0
  %5747 = vmatpush1.bf16.msra.mxu0 %v4239
  %5748 = vmatprep.subr.bf16.mxu0 0
  %5749 = vmatpush1.bf16.msra.mxu0 %v4240
  %5750 = vmatprep.subr.bf16.mxu0 0
  %5751 = vmatpush1.bf16.msra.mxu0 %v4241
  %5752 = vmatprep.subr.bf16.mxu0 0
  %5753 = vmatpush1.bf16.msra.mxu0 %v4242
  %5754 = vmatprep.subr.bf16.mxu0 0
  %5755 = vmatpush1.bf16.msra.mxu0 %v4243
  %5756 = vmatprep.subr.bf16.mxu0 0
  %5757 = vmatpush1.bf16.msra.mxu0 %v4244
  %5758 = vmatprep.subr.bf16.mxu0 0
  %5759 = vmatpush1.bf16.msra.mxu0 %v4245
  %5760 = vmatprep.subr.bf16.mxu0 0
  %5761 = vmatpush1.bf16.msra.mxu0 %v4246
  %5762 = vmatprep.subr.bf16.mxu0 0
  %5763 = vmatpush1.bf16.msra.mxu0 %v4247
  %5764 = vmatprep.subr.bf16.mxu0 0
  %5765 = vmatpush1.bf16.msra.mxu0 %v4248
  %5766 = vmatprep.subr.bf16.mxu0 0
  %5767 = vmatpush1.bf16.msra.mxu0 %v4249
  %5768 = vmatprep.subr.bf16.mxu0 0
  %5769 = vmatpush1.bf16.msra.mxu0 %v4250
  %5770 = vmatprep.subr.bf16.mxu0 0
  %5771 = vmatpush1.bf16.msra.mxu0 %v4251
  %5772 = vmatprep.mubr.bf16.mxu0 %v821
  %5773 = vmatmul.mubr.bf16.gmra.mrb[0].mxu0 %v820
  %v5774 = vpop.f32.mrb[0].mxu0
  %v5775 = vadd.f32 %v5735, %v5774
  %v5776 = vpop.f32.mrb[0].mxu0
  %v5777 = vpop.f32.mrb[0].mxu0
  %v5778 = vpop.f32.mrb[0].mxu0
  %5779 = vdwg.mxu0
  %5780 = vmatprep.subr.bf16.mxu0 0
  %5781 = vmatpush1.bf16.msra.mxu0 %v4252
  %5782 = vmatprep.subr.bf16.mxu0 0
  %5783 = vmatpush1.bf16.msra.mxu0 %v4253
  %5784 = vmatprep.subr.bf16.mxu0 0
  %5785 = vmatpush1.bf16.msra.mxu0 %v4254
  %5786 = vmatprep.subr.bf16.mxu0 0
  %5787 = vmatpush1.bf16.msra.mxu0 %v4255
  %5788 = vmatprep.subr.bf16.mxu0 0
  %5789 = vmatpush1.bf16.msra.mxu0 %v4256
  %5790 = vmatprep.subr.bf16.mxu0 0
  %5791 = vmatpush1.bf16.msra.mxu0 %v4257
  %5792 = vmatprep.subr.bf16.mxu0 0
  %5793 = vmatpush1.bf16.msra.mxu0 %v4258
  %5794 = vmatprep.subr.bf16.mxu0 0
  %5795 = vmatpush1.bf16.msra.mxu0 %v4259
  %5796 = vmatprep.subr.bf16.mxu0 0
  %5797 = vmatpush1.bf16.msra.mxu0 %v4260
  %5798 = vmatprep.subr.bf16.mxu0 0
  %5799 = vmatpush1.bf16.msra.mxu0 %v4261
  %5800 = vmatprep.subr.bf16.mxu0 0
  %5801 = vmatpush1.bf16.msra.mxu0 %v4262
  %5802 = vmatprep.subr.bf16.mxu0 0
  %5803 = vmatpush1.bf16.msra.mxu0 %v4263
  %5804 = vmatprep.subr.bf16.mxu0 0
  %5805 = vmatpush1.bf16.msra.mxu0 %v4264
  %5806 = vmatprep.subr.bf16.mxu0 0
  %5807 = vmatpush1.bf16.msra.mxu0 %v4265
  %5808 = vmatprep.subr.bf16.mxu0 0
  %5809 = vmatpush1.bf16.msra.mxu0 %v4266
  %5810 = vmatprep.subr.bf16.mxu0 0
  %5811 = vmatpush1.bf16.msra.mxu0 %v4267
  %5812 = vmatprep.mubr.bf16.mxu0 %v823
  %5813 = vmatmul.mubr.bf16.gmra.mrb[0].mxu0 %v822
  %v5814 = vpop.f32.mrb[0].mxu0
  %v5815 = vadd.f32 %v5775, %v5814
  %v5816 = vpop.f32.mrb[0].mxu0
  %v5817 = vpop.f32.mrb[0].mxu0
  %v5818 = vpop.f32.mrb[0].mxu0
  %5819 = vdwg.mxu0
  %5820 = vmatprep.subr.bf16.mxu0 0
  %5821 = vmatpush1.bf16.msra.mxu0 %v4268
  %5822 = vmatprep.subr.bf16.mxu0 0
  %5823 = vmatpush1.bf16.msra.mxu0 %v4269
  %5824 = vmatprep.subr.bf16.mxu0 0
  %5825 = vmatpush1.bf16.msra.mxu0 %v4270
  %5826 = vmatprep.subr.bf16.mxu0 0
  %5827 = vmatpush1.bf16.msra.mxu0 %v4271
  %5828 = vmatprep.subr.bf16.mxu0 0
  %5829 = vmatpush1.bf16.msra.mxu0 %v4272
  %5830 = vmatprep.subr.bf16.mxu0 0
  %5831 = vmatpush1.bf16.msra.mxu0 %v4273
  %5832 = vmatprep.subr.bf16.mxu0 0
  %5833 = vmatpush1.bf16.msra.mxu0 %v4274
  %5834 = vmatprep.subr.bf16.mxu0 0
  %5835 = vmatpush1.bf16.msra.mxu0 %v4275
  %5836 = vmatprep.subr.bf16.mxu0 0
  %5837 = vmatpush1.bf16.msra.mxu0 %v4276
  %5838 = vmatprep.subr.bf16.mxu0 0
  %5839 = vmatpush1.bf16.msra.mxu0 %v4277
  %5840 = vmatprep.subr.bf16.mxu0 0
  %5841 = vmatpush1.bf16.msra.mxu0 %v4278
  %5842 = vmatprep.subr.bf16.mxu0 0
  %5843 = vmatpush1.bf16.msra.mxu0 %v4279
  %5844 = vmatprep.subr.bf16.mxu0 0
  %5845 = vmatpush1.bf16.msra.mxu0 %v4280
  %5846 = vmatprep.subr.bf16.mxu0 0
  %5847 = vmatpush1.bf16.msra.mxu0 %v4281
  %5848 = vmatprep.subr.bf16.mxu0 0
  %5849 = vmatpush1.bf16.msra.mxu0 %v4282
  %5850 = vmatprep.subr.bf16.mxu0 0
  %5851 = vmatpush1.bf16.msra.mxu0 %v4283
  %5852 = vmatprep.mubr.bf16.mxu0 %v825
  %5853 = vmatmul.mubr.bf16.gmra.mrb[0].mxu0 %v824
  %v5854 = vpop.f32.mrb[0].mxu0
  %v5855 = vadd.f32 %v5815, %v5854
  %v5856 = vpop.f32.mrb[0].mxu0
  %v5857 = vpop.f32.mrb[0].mxu0
  %v5858 = vpop.f32.mrb[0].mxu0
  %5859 = vdwg.mxu0
  %5860 = vmatprep.subr.bf16.mxu0 0
  %5861 = vmatpush1.bf16.msra.mxu0 %v4284
  %5862 = vmatprep.subr.bf16.mxu0 0
  %5863 = vmatpush1.bf16.msra.mxu0 %v4285
  %5864 = vmatprep.subr.bf16.mxu0 0
  %5865 = vmatpush1.bf16.msra.mxu0 %v4286
  %5866 = vmatprep.subr.bf16.mxu0 0
  %5867 = vmatpush1.bf16.msra.mxu0 %v4287
  %5868 = vmatprep.subr.bf16.mxu0 0
  %5869 = vmatpush1.bf16.msra.mxu0 %v4288
  %5870 = vmatprep.subr.bf16.mxu0 0
  %5871 = vmatpush1.bf16.msra.mxu0 %v4289
  %5872 = vmatprep.subr.bf16.mxu0 0
  %5873 = vmatpush1.bf16.msra.mxu0 %v4290
  %5874 = vmatprep.subr.bf16.mxu0 0
  %5875 = vmatpush1.bf16.msra.mxu0 %v4291
  %5876 = vmatprep.subr.bf16.mxu0 0
  %5877 = vmatpush1.bf16.msra.mxu0 %v4292
  %5878 = vmatprep.subr.bf16.mxu0 0
  %5879 = vmatpush1.bf16.msra.mxu0 %v4293
  %5880 = vmatprep.subr.bf16.mxu0 0
  %5881 = vmatpush1.bf16.msra.mxu0 %v4294
  %5882 = vmatprep.subr.bf16.mxu0 0
  %5883 = vmatpush1.bf16.msra.mxu0 %v4295
  %5884 = vmatprep.subr.bf16.mxu0 0
  %5885 = vmatpush1.bf16.msra.mxu0 %v4296
  %5886 = vmatprep.subr.bf16.mxu0 0
  %5887 = vmatpush1.bf16.msra.mxu0 %v4297
  %5888 = vmatprep.subr.bf16.mxu0 0
  %5889 = vmatpush1.bf16.msra.mxu0 %v4298
  %5890 = vmatprep.subr.bf16.mxu0 0
  %5891 = vmatpush1.bf16.msra.mxu0 %v4299
  %5892 = vmatprep.mubr.bf16.mxu0 %v827
  %5893 = vmatmul.mubr.bf16.gmra.mrb[0].mxu0 %v826
  %v5894 = vpop.f32.mrb[0].mxu0
  %v5895 = vadd.f32 %v5855, %v5894
  %v5896 = vpop.f32.mrb[0].mxu0
  %v5897 = vpop.f32.mrb[0].mxu0
  %v5898 = vpop.f32.mrb[0].mxu0
  %5899 = vdwg.mxu0
  %5900 = vmatprep.subr.bf16.mxu0 0
  %5901 = vmatpush1.bf16.msra.mxu0 %v4300
  %5902 = vmatprep.subr.bf16.mxu0 0
  %5903 = vmatpush1.bf16.msra.mxu0 %v4301
  %5904 = vmatprep.subr.bf16.mxu0 0
  %5905 = vmatpush1.bf16.msra.mxu0 %v4302
  %5906 = vmatprep.subr.bf16.mxu0 0
  %5907 = vmatpush1.bf16.msra.mxu0 %v4303
  %5908 = vmatprep.subr.bf16.mxu0 0
  %5909 = vmatpush1.bf16.msra.mxu0 %v4304
  %5910 = vmatprep.subr.bf16.mxu0 0
  %5911 = vmatpush1.bf16.msra.mxu0 %v4305
  %5912 = vmatprep.subr.bf16.mxu0 0
  %5913 = vmatpush1.bf16.msra.mxu0 %v4306
  %5914 = vmatprep.subr.bf16.mxu0 0
  %5915 = vmatpush1.bf16.msra.mxu0 %v4307
  %5916 = vmatprep.subr.bf16.mxu0 0
  %5917 = vmatpush1.bf16.msra.mxu0 %v4308
  %5918 = vmatprep.subr.bf16.mxu0 0
  %5919 = vmatpush1.bf16.msra.mxu0 %v4309
  %5920 = vmatprep.subr.bf16.mxu0 0
  %5921 = vmatpush1.bf16.msra.mxu0 %v4310
  %5922 = vmatprep.subr.bf16.mxu0 0
  %5923 = vmatpush1.bf16.msra.mxu0 %v4311
  %5924 = vmatprep.subr.bf16.mxu0 0
  %5925 = vmatpush1.bf16.msra.mxu0 %v4312
  %5926 = vmatprep.subr.bf16.mxu0 0
  %5927 = vmatpush1.bf16.msra.mxu0 %v4313
  %5928 = vmatprep.subr.bf16.mxu0 0
  %5929 = vmatpush1.bf16.msra.mxu0 %v4314
  %5930 = vmatprep.subr.bf16.mxu0 0
  %5931 = vmatpush1.bf16.msra.mxu0 %v4315
  %5932 = vmatprep.mubr.bf16.mxu0 %v829
  %5933 = vmatmul.mubr.bf16.gmra.mrb[0].mxu0 %v828
  %v5934 = vpop.f32.mrb[0].mxu0
  %v5935 = vadd.f32 %v5895, %v5934
  %v5936 = vpop.f32.mrb[0].mxu0
  %v5937 = vpop.f32.mrb[0].mxu0
  %v5938 = vpop.f32.mrb[0].mxu0
  %5939 = vdwg.mxu0
  %5940 = vmatprep.subr.bf16.mxu0 0
  %5941 = vmatpush1.bf16.msra.mxu0 %v4316
  %5942 = vmatprep.subr.bf16.mxu0 0
  %5943 = vmatpush1.bf16.msra.mxu0 %v4317
  %5944 = vmatprep.subr.bf16.mxu0 0
  %5945 = vmatpush1.bf16.msra.mxu0 %v4318
  %5946 = vmatprep.subr.bf16.mxu0 0
  %5947 = vmatpush1.bf16.msra.mxu0 %v4319
  %5948 = vmatprep.subr.bf16.mxu0 0
  %5949 = vmatpush1.bf16.msra.mxu0 %v4320
  %5950 = vmatprep.subr.bf16.mxu0 0
  %5951 = vmatpush1.bf16.msra.mxu0 %v4321
  %5952 = vmatprep.subr.bf16.mxu0 0
  %5953 = vmatpush1.bf16.msra.mxu0 %v4322
  %5954 = vmatprep.subr.bf16.mxu0 0
  %5955 = vmatpush1.bf16.msra.mxu0 %v4323
  %5956 = vmatprep.subr.bf16.mxu0 0
  %5957 = vmatpush1.bf16.msra.mxu0 %v4324
  %5958 = vmatprep.subr.bf16.mxu0 0
  %5959 = vmatpush1.bf16.msra.mxu0 %v4325
  %5960 = vmatprep.subr.bf16.mxu0 0
  %5961 = vmatpush1.bf16.msra.mxu0 %v4326
  %5962 = vmatprep.subr.bf16.mxu0 0
  %5963 = vmatpush1.bf16.msra.mxu0 %v4327
  %5964 = vmatprep.subr.bf16.mxu0 0
  %5965 = vmatpush1.bf16.msra.mxu0 %v4328
  %5966 = vmatprep.subr.bf16.mxu0 0
  %5967 = vmatpush1.bf16.msra.mxu0 %v4329
  %5968 = vmatprep.subr.bf16.mxu0 0
  %5969 = vmatpush1.bf16.msra.mxu0 %v4330
  %5970 = vmatprep.subr.bf16.mxu0 0
  %5971 = vmatpush1.bf16.msra.mxu0 %v4331
  %5972 = vmatprep.mubr.bf16.mxu0 %v831
  %5973 = vmatmul.mubr.bf16.gmra.mrb[0].mxu0 %v830
  %v5974 = vpop.f32.mrb[0].mxu0
  %v5975 = vadd.f32 %v5935, %v5974
  %v5976 = vpop.f32.mrb[0].mxu0
  %v5977 = vpop.f32.mrb[0].mxu0
  %v5978 = vpop.f32.mrb[0].mxu0
  %5979 = vdwg.mxu0
  %5980 = vmatprep.subr.bf16.mxu0 0
  %5981 = vmatpush1.bf16.msra.mxu0 %v4332
  %5982 = vmatprep.subr.bf16.mxu0 0
  %5983 = vmatpush1.bf16.msra.mxu0 %v4333
  %5984 = vmatprep.subr.bf16.mxu0 0
  %5985 = vmatpush1.bf16.msra.mxu0 %v4334
  %5986 = vmatprep.subr.bf16.mxu0 0
  %5987 = vmatpush1.bf16.msra.mxu0 %v4335
  %5988 = vmatprep.subr.bf16.mxu0 0
  %5989 = vmatpush1.bf16.msra.mxu0 %v4336
  %5990 = vmatprep.subr.bf16.mxu0 0
  %5991 = vmatpush1.bf16.msra.mxu0 %v4337
  %5992 = vmatprep.subr.bf16.mxu0 0
  %5993 = vmatpush1.bf16.msra.mxu0 %v4338
  %5994 = vmatprep.subr.bf16.mxu0 0
  %5995 = vmatpush1.bf16.msra.mxu0 %v4339
  %5996 = vmatprep.subr.bf16.mxu0 0
  %5997 = vmatpush1.bf16.msra.mxu0 %v4340
  %5998 = vmatprep.subr.bf16.mxu0 0
  %5999 = vmatpush1.bf16.msra.mxu0 %v4341
  %6000 = vmatprep.subr.bf16.mxu0 0
  %6001 = vmatpush1.bf16.msra.mxu0 %v4342
  %6002 = vmatprep.subr.bf16.mxu0 0
  %6003 = vmatpush1.bf16.msra.mxu0 %v4343
  %6004 = vmatprep.subr.bf16.mxu0 0
  %6005 = vmatpush1.bf16.msra.mxu0 %v4344
  %6006 = vmatprep.subr.bf16.mxu0 0
  %6007 = vmatpush1.bf16.msra.mxu0 %v4345
  %6008 = vmatprep.subr.bf16.mxu0 0
  %6009 = vmatpush1.bf16.msra.mxu0 %v4346
  %6010 = vmatprep.subr.bf16.mxu0 0
  %6011 = vmatpush1.bf16.msra.mxu0 %v4347
  %6012 = vmatprep.mubr.bf16.mxu0 %v833
  %6013 = vmatmul.mubr.bf16.gmra.mrb[0].mxu0 %v832
  %v6014 = vpop.f32.mrb[0].mxu0
  %v6015 = vadd.f32 %v5975, %v6014
  %v6016 = vpop.f32.mrb[0].mxu0
  %v6017 = vpop.f32.mrb[0].mxu0
  %v6018 = vpop.f32.mrb[0].mxu0
  %6019 = vdwg.mxu0
  %6020 = vmatprep.subr.bf16.mxu0 0
  %6021 = vmatpush1.bf16.msra.mxu0 %v4348
  %6022 = vmatprep.subr.bf16.mxu0 0
  %6023 = vmatpush1.bf16.msra.mxu0 %v4349
  %6024 = vmatprep.subr.bf16.mxu0 0
  %6025 = vmatpush1.bf16.msra.mxu0 %v4350
  %6026 = vmatprep.subr.bf16.mxu0 0
  %6027 = vmatpush1.bf16.msra.mxu0 %v4351
  %6028 = vmatprep.subr.bf16.mxu0 0
  %6029 = vmatpush1.bf16.msra.mxu0 %v4352
  %6030 = vmatprep.subr.bf16.mxu0 0
  %6031 = vmatpush1.bf16.msra.mxu0 %v4353
  %6032 = vmatprep.subr.bf16.mxu0 0
  %6033 = vmatpush1.bf16.msra.mxu0 %v4354
  %6034 = vmatprep.subr.bf16.mxu0 0
  %6035 = vmatpush1.bf16.msra.mxu0 %v4355
  %6036 = vmatprep.subr.bf16.mxu0 0
  %6037 = vmatpush1.bf16.msra.mxu0 %v4356
  %6038 = vmatprep.subr.bf16.mxu0 0
  %6039 = vmatpush1.bf16.msra.mxu0 %v4357
  %6040 = vmatprep.subr.bf16.mxu0 0
  %6041 = vmatpush1.bf16.msra.mxu0 %v4358
  %6042 = vmatprep.subr.bf16.mxu0 0
  %6043 = vmatpush1.bf16.msra.mxu0 %v4359
  %6044 = vmatprep.subr.bf16.mxu0 0
  %6045 = vmatpush1.bf16.msra.mxu0 %v4360
  %6046 = vmatprep.subr.bf16.mxu0 0
  %6047 = vmatpush1.bf16.msra.mxu0 %v4361
  %6048 = vmatprep.subr.bf16.mxu0 0
  %6049 = vmatpush1.bf16.msra.mxu0 %v4362
  %6050 = vmatprep.subr.bf16.mxu0 0
  %6051 = vmatpush1.bf16.msra.mxu0 %v4363
  %6052 = vmatprep.mubr.bf16.mxu0 %v835
  %6053 = vmatmul.mubr.bf16.gmra.mrb[0].mxu0 %v834
  %v6054 = vpop.f32.mrb[0].mxu0
  %v6055 = vadd.f32 %v6015, %v6054
  %v6056 = vpop.f32.mrb[0].mxu0
  %v6057 = vpop.f32.mrb[0].mxu0
  %v6058 = vpop.f32.mrb[0].mxu0
  %6059 = vdwg.mxu0
  %6060 = vmatprep.subr.bf16.mxu0 0
  %6061 = vmatpush1.bf16.msra.mxu0 %v4364
  %6062 = vmatprep.subr.bf16.mxu0 0
  %6063 = vmatpush1.bf16.msra.mxu0 %v4365
  %6064 = vmatprep.subr.bf16.mxu0 0
  %6065 = vmatpush1.bf16.msra.mxu0 %v4366
  %6066 = vmatprep.subr.bf16.mxu0 0
  %6067 = vmatpush1.bf16.msra.mxu0 %v4367
  %6068 = vmatprep.subr.bf16.mxu0 0
  %6069 = vmatpush1.bf16.msra.mxu0 %v4368
  %6070 = vmatprep.subr.bf16.mxu0 0
  %6071 = vmatpush1.bf16.msra.mxu0 %v4369
  %6072 = vmatprep.subr.bf16.mxu0 0
  %6073 = vmatpush1.bf16.msra.mxu0 %v4370
  %6074 = vmatprep.subr.bf16.mxu0 0
  %6075 = vmatpush1.bf16.msra.mxu0 %v4371
  %6076 = vmatprep.subr.bf16.mxu0 0
  %6077 = vmatpush1.bf16.msra.mxu0 %v4372
  %6078 = vmatprep.subr.bf16.mxu0 0
  %6079 = vmatpush1.bf16.msra.mxu0 %v4373
  %6080 = vmatprep.subr.bf16.mxu0 0
  %6081 = vmatpush1.bf16.msra.mxu0 %v4374
  %6082 = vmatprep.subr.bf16.mxu0 0
  %6083 = vmatpush1.bf16.msra.mxu0 %v4375
  %6084 = vmatprep.subr.bf16.mxu0 0
  %6085 = vmatpush1.bf16.msra.mxu0 %v4376
  %6086 = vmatprep.subr.bf16.mxu0 0
  %6087 = vmatpush1.bf16.msra.mxu0 %v4377
  %6088 = vmatprep.subr.bf16.mxu0 0
  %6089 = vmatpush1.bf16.msra.mxu0 %v4378
  %6090 = vmatprep.subr.bf16.mxu0 0
  %6091 = vmatpush1.bf16.msra.mxu0 %v4379
  %6092 = vmatprep.mubr.bf16.mxu0 %v837
  %6093 = vmatmul.mubr.bf16.gmra.mrb[0].mxu0 %v836
  %v6094 = vpop.f32.mrb[0].mxu0
  %v6095 = vadd.f32 %v6055, %v6094
  %v6096 = vpop.f32.mrb[0].mxu0
  %v6097 = vpop.f32.mrb[0].mxu0
  %v6098 = vpop.f32.mrb[0].mxu0
  %6099 = vdwg.mxu0
  %6100 = vmatprep.subr.bf16.mxu0 0
  %6101 = vmatpush1.bf16.msra.mxu0 %v4380
  %6102 = vmatprep.subr.bf16.mxu0 0
  %6103 = vmatpush1.bf16.msra.mxu0 %v4381
  %6104 = vmatprep.subr.bf16.mxu0 0
  %6105 = vmatpush1.bf16.msra.mxu0 %v4382
  %6106 = vmatprep.subr.bf16.mxu0 0
  %6107 = vmatpush1.bf16.msra.mxu0 %v4383
  %6108 = vmatprep.subr.bf16.mxu0 0
  %6109 = vmatpush1.bf16.msra.mxu0 %v4384
  %6110 = vmatprep.subr.bf16.mxu0 0
  %6111 = vmatpush1.bf16.msra.mxu0 %v4385
  %6112 = vmatprep.subr.bf16.mxu0 0
  %6113 = vmatpush1.bf16.msra.mxu0 %v4386
  %6114 = vmatprep.subr.bf16.mxu0 0
  %6115 = vmatpush1.bf16.msra.mxu0 %v4387
  %6116 = vmatprep.subr.bf16.mxu0 0
  %6117 = vmatpush1.bf16.msra.mxu0 %v4388
  %6118 = vmatprep.subr.bf16.mxu0 0
  %6119 = vmatpush1.bf16.msra.mxu0 %v4389
  %6120 = vmatprep.subr.bf16.mxu0 0
  %6121 = vmatpush1.bf16.msra.mxu0 %v4390
  %6122 = vmatprep.subr.bf16.mxu0 0
  %6123 = vmatpush1.bf16.msra.mxu0 %v4391
  %6124 = vmatprep.subr.bf16.mxu0 0
  %6125 = vmatpush1.bf16.msra.mxu0 %v4392
  %6126 = vmatprep.subr.bf16.mxu0 0
  %6127 = vmatpush1.bf16.msra.mxu0 %v4393
  %6128 = vmatprep.subr.bf16.mxu0 0
  %6129 = vmatpush1.bf16.msra.mxu0 %v4394
  %6130 = vmatprep.subr.bf16.mxu0 0
  %6131 = vmatpush1.bf16.msra.mxu0 %v4395
  %6132 = vmatprep.mubr.bf16.mxu0 %v839
  %6133 = vmatmul.mubr.bf16.gmra.mrb[0].mxu0 %v838
  %v6134 = vpop.f32.mrb[0].mxu0
  %v6135 = vadd.f32 %v6095, %v6134
  %v6136 = vpop.f32.mrb[0].mxu0
  %v6137 = vpop.f32.mrb[0].mxu0
  %v6138 = vpop.f32.mrb[0].mxu0
  %6139 = vdwg.mxu0
  %6140 = vmatprep.subr.bf16.mxu0 0
  %6141 = vmatpush1.bf16.msra.mxu0 %v4396
  %6142 = vmatprep.subr.bf16.mxu0 0
  %6143 = vmatpush1.bf16.msra.mxu0 %v4397
  %6144 = vmatprep.subr.bf16.mxu0 0
  %6145 = vmatpush1.bf16.msra.mxu0 %v4398
  %6146 = vmatprep.subr.bf16.mxu0 0
  %6147 = vmatpush1.bf16.msra.mxu0 %v4399
  %6148 = vmatprep.subr.bf16.mxu0 0
  %6149 = vmatpush1.bf16.msra.mxu0 %v4400
  %6150 = vmatprep.subr.bf16.mxu0 0
  %6151 = vmatpush1.bf16.msra.mxu0 %v4401
  %6152 = vmatprep.subr.bf16.mxu0 0
  %6153 = vmatpush1.bf16.msra.mxu0 %v4402
  %6154 = vmatprep.subr.bf16.mxu0 0
  %6155 = vmatpush1.bf16.msra.mxu0 %v4403
  %6156 = vmatprep.subr.bf16.mxu0 0
  %6157 = vmatpush1.bf16.msra.mxu0 %v4404
  %6158 = vmatprep.subr.bf16.mxu0 0
  %6159 = vmatpush1.bf16.msra.mxu0 %v4405
  %6160 = vmatprep.subr.bf16.mxu0 0
  %6161 = vmatpush1.bf16.msra.mxu0 %v4406
  %6162 = vmatprep.subr.bf16.mxu0 0
  %6163 = vmatpush1.bf16.msra.mxu0 %v4407
  %6164 = vmatprep.subr.bf16.mxu0 0
  %6165 = vmatpush1.bf16.msra.mxu0 %v4408
  %6166 = vmatprep.subr.bf16.mxu0 0
  %6167 = vmatpush1.bf16.msra.mxu0 %v4409
  %6168 = vmatprep.subr.bf16.mxu0 0
  %6169 = vmatpush1.bf16.msra.mxu0 %v4410
  %6170 = vmatprep.subr.bf16.mxu0 0
  %6171 = vmatpush1.bf16.msra.mxu0 %v4411
  %6172 = vmatprep.mubr.bf16.mxu0 %v841
  %6173 = vmatmul.mubr.bf16.gmra.mrb[0].mxu0 %v840
  %v6174 = vpop.f32.mrb[0].mxu0
  %v6175 = vadd.f32 %v6135, %v6174
  %v6176 = vpop.f32.mrb[0].mxu0
  %v6177 = vpop.f32.mrb[0].mxu0
  %v6178 = vpop.f32.mrb[0].mxu0
  %6179 = vdwg.mxu0
  %6180 = vmatprep.subr.bf16.mxu0 0
  %6181 = vmatpush1.bf16.msra.mxu0 %v4412
  %6182 = vmatprep.subr.bf16.mxu0 0
  %6183 = vmatpush1.bf16.msra.mxu0 %v4413
  %6184 = vmatprep.subr.bf16.mxu0 0
  %6185 = vmatpush1.bf16.msra.mxu0 %v4414
  %6186 = vmatprep.subr.bf16.mxu0 0
  %6187 = vmatpush1.bf16.msra.mxu0 %v4415
  %6188 = vmatprep.subr.bf16.mxu0 0
  %6189 = vmatpush1.bf16.msra.mxu0 %v4416
  %6190 = vmatprep.subr.bf16.mxu0 0
  %6191 = vmatpush1.bf16.msra.mxu0 %v4417
  %6192 = vmatprep.subr.bf16.mxu0 0
  %6193 = vmatpush1.bf16.msra.mxu0 %v4418
  %6194 = vmatprep.subr.bf16.mxu0 0
  %6195 = vmatpush1.bf16.msra.mxu0 %v4419
  %6196 = vmatprep.subr.bf16.mxu0 0
  %6197 = vmatpush1.bf16.msra.mxu0 %v4420
  %6198 = vmatprep.subr.bf16.mxu0 0
  %6199 = vmatpush1.bf16.msra.mxu0 %v4421
  %6200 = vmatprep.subr.bf16.mxu0 0
  %6201 = vmatpush1.bf16.msra.mxu0 %v4422
  %6202 = vmatprep.subr.bf16.mxu0 0
  %6203 = vmatpush1.bf16.msra.mxu0 %v4423
  %6204 = vmatprep.subr.bf16.mxu0 0
  %6205 = vmatpush1.bf16.msra.mxu0 %v4424
  %6206 = vmatprep.subr.bf16.mxu0 0
  %6207 = vmatpush1.bf16.msra.mxu0 %v4425
  %6208 = vmatprep.subr.bf16.mxu0 0
  %6209 = vmatpush1.bf16.msra.mxu0 %v4426
  %6210 = vmatprep.subr.bf16.mxu0 0
  %6211 = vmatpush1.bf16.msra.mxu0 %v4427
  %6212 = vmatprep.mubr.bf16.mxu0 %v843
  %6213 = vmatmul.mubr.bf16.gmra.mrb[0].mxu0 %v842
  %v6214 = vpop.f32.mrb[0].mxu0
  %v6215 = vadd.f32 %v6175, %v6214
  %v6216 = vpop.f32.mrb[0].mxu0
  %v6217 = vpop.f32.mrb[0].mxu0
  %v6218 = vpop.f32.mrb[0].mxu0
  %6219 = vdwg.mxu0
  %v6220 = vlaneseq
  %v6221 = vand.u32 %v6220, 127
  %vm6222 = vcmp.lt.s32.totalorder %v6221, 10
  %v6223 = vsel %vm6222, %v6215, -1e+30
  %6224 = vmax.xlane.f32.xlu0 %v6223
  %v6225 = vpop.xlane.xlu0 %6224
  %v6226 = vsub.f32 %v6223, %v6225
  %v6227 = vmul.f32 %v6226, 1.442695
  %v6228 = vpow.pop %v6227
  %6229 = vadd.xlane.f32.xlu0 %v6228
  %v6230 = vpop.xlane.xlu0 %6229
  %v6231 = vrcp.pop %v6230
  %v6232 = vmul.f32 %v6228, %v6231
  %6233 = vst [vmem:[%s2] sm:$0xff] %v6232
  // Predicated region
  $region10: #{cam_resnet18_cifar_head.1} parent=0 // pred_check
    _
  $region11: #{cam_resnet18_cifar_head.1} parent=0 // pred_check_branch
    %6235 = sbr.rel (0) target = $region13
  $region12: #{cam_resnet18_cifar_head.1} parent=0 // pred_region
    _
  $region13: #{cam_resnet18_cifar_head.1} parent=0 // pred_fallthru
    _
  // Predicated region
  $region14: #{cam_resnet18_cifar_head.1} parent=0 // pred_check
    _
  $region15: #{cam_resnet18_cifar_head.1} parent=0 // pred_check_branch
    %6237 = sbr.rel (0) target = $region17
  $region16: #{cam_resnet18_cifar_head.1} parent=0 // pred_region
    _
  $region17: #{cam_resnet18_cifar_head.1} parent=0 // pred_fallthru
    _

</llo_original>
